<compile_context>
chip_gen: v7x
topology: tpu7x:2x2x1
jax: 0.10.0
libtpu: 0.0.40
codegen_flags: <defaults>
</compile_context>

<pallas_src>
import functools

import jax
import jax.numpy as jnp
from jax import lax
from jax.experimental import pallas as pl
from jax.experimental.pallas import tpu as pltpu

LANE = 128


def _round_up(x, m):
    return (x + m - 1) // m * m


# ----------------------------------------------------------------------------
# Fused Pallas kernel
# ----------------------------------------------------------------------------
def _fused_lstm_net_kernel(num_layers, hidden_pad, *refs):
    """Whole forward pass in one invocation.

    refs layout (inputs..., output):
      x_ref                         (T, B, E_pad)   time-major padded embeddings
      [W_l, b_l] * num_layers       (in_pad + H_pad, 4*H_pad), (1, 4*H_pad)
      wcls_ref, bcls_ref            (1, H_pad), (1, 1)
      out_ref                       (B, 1)
    """
    x_ref = refs[0]
    layer_refs = refs[1:1 + 2 * num_layers]
    wcls_ref = refs[1 + 2 * num_layers]
    bcls_ref = refs[2 + 2 * num_layers]
    out_ref = refs[3 + 2 * num_layers]

    T, B, _ = x_ref.shape
    Hp = hidden_pad

    # Hoist weight loads and bias broadcasts out of the time loop
    # (JAX does not CSE broadcast_in_dim inside loop bodies).
    Ws = [layer_refs[2 * l][...] for l in range(num_layers)]
    Bs = [jnp.broadcast_to(layer_refs[2 * l + 1][...], (B, 4 * Hp))
          for l in range(num_layers)]
    w_cls = jnp.broadcast_to(wcls_ref[...], (B, Hp))

    def cell(x_t, h_prev, c_prev, W, bias):
        # Single merged matmul per step: [x_t, h_prev] @ [W_ih^T; W_hh^T].
        # Both halves are 128-lane aligned, so the concat and gate slices are
        # vreg-aligned (no lane permutes).
        cat = jnp.concatenate([x_t, h_prev], axis=1)            # (B, in_pad+Hp)
        gates = jnp.dot(cat, W, preferred_element_type=jnp.float32) + bias
        i_g = jax.nn.sigmoid(gates[:, 0 * Hp:1 * Hp])
        f_g = jax.nn.sigmoid(gates[:, 1 * Hp:2 * Hp])
        g_g = jnp.tanh(gates[:, 2 * Hp:3 * Hp])
        o_g = jax.nn.sigmoid(gates[:, 3 * Hp:4 * Hp])
        c_new = f_g * c_prev + i_g * g_g
        h_new = o_g * jnp.tanh(c_new)
        return h_new, c_new

    def step(t, carry):
        x_t = x_ref[t]                                          # (B, E_pad)
        new_carry = []
        inp = x_t
        for l in range(num_layers):
            h, c = carry[l]
            h, c = cell(inp, h, c, Ws[l], Bs[l])
            new_carry.append((h, c))
            inp = h                       # feed layer l output to layer l+1
        return tuple(new_carry)

    zeros = jnp.zeros((B, Hp), jnp.float32)
    init = tuple((zeros, zeros) for _ in range(num_layers))
    final = lax.fori_loop(0, T, step, init, unroll=True)

    h_last = final[num_layers - 1][0]                           # (B, H_pad)
    # Classifier: VPU mul + XLU lane reduce (no 1-column MXU matmul).
    # Padded columns of h_last / w_cls are exactly zero, so the sum is exact.
    logit = jnp.sum(h_last * w_cls, axis=-1, keepdims=True) + bcls_ref[...]
    out_ref[...] = jax.nn.sigmoid(logit).astype(out_ref.dtype)


# ----------------------------------------------------------------------------
# Parameter packing (PyTorch convention -> padded, MXU-friendly layout)
# ----------------------------------------------------------------------------
def pack_lstm_net_params(params, emb_dim, hidden_dim, num_layers):
    """Zero-pad every gate block and feature dim to a multiple of 128 lanes and
    stack W_ih^T over W_hh^T so the kernel does one matmul per step.
    Gate order (i, f, g, o) is preserved; padding keeps results exact."""
    Hp = _round_up(hidden_dim, LANE)
    Ep = _round_up(emb_dim, LANE)
    H = hidden_dim
    packed = {}

    emb = jnp.asarray(params["embedding"], jnp.float32)
    packed["embedding"] = jnp.pad(emb, ((0, 0), (0, Ep - emb_dim)))

    for l in range(num_layers):
        in_dim = emb_dim if l == 0 else hidden_dim
        in_p = Ep if l == 0 else Hp
        wih_t = jnp.asarray(params[f"w_ih_l{l}"], jnp.float32).T   # (in, 4H)
        whh_t = jnp.asarray(params[f"w_hh_l{l}"], jnp.float32).T   # (H, 4H)
        bias = (jnp.asarray(params[f"b_ih_l{l}"], jnp.float32)
                + jnp.asarray(params[f"b_hh_l{l}"], jnp.float32))  # (4H,)

        W = jnp.zeros((in_p + Hp, 4 * Hp), jnp.float32)
        bvec = jnp.zeros((1, 4 * Hp), jnp.float32)
        for g in range(4):
            W = W.at[:in_dim, g * Hp:g * Hp + H].set(wih_t[:, g * H:(g + 1) * H])
            W = W.at[in_p:in_p + H, g * Hp:g * Hp + H].set(whh_t[:, g * H:(g + 1) * H])
            bvec = bvec.at[0, g * Hp:g * Hp + H].set(bias[g * H:(g + 1) * H])
        packed[f"W_l{l}"] = W
        packed[f"b_l{l}"] = bvec

    w_cls = jnp.asarray(params["w_cls"], jnp.float32)              # (1, H)
    packed["w_cls"] = jnp.pad(w_cls, ((0, 0), (0, Hp - hidden_dim)))
    packed["b_cls"] = jnp.asarray(params["b_cls"], jnp.float32).reshape(1, 1)
    return packed


# ----------------------------------------------------------------------------
# Forward
# ----------------------------------------------------------------------------
@functools.partial(jax.jit, static_argnames=("num_layers",))
def lstm_net_forward(tokens, packed, num_layers):
    """tokens: (B, T) int32 -> (B, 1) float32."""
    B, T = tokens.shape
    Hp = packed["w_cls"].shape[1]

    # Embedding gather (glue): gather directly in time-major order by
    # transposing only the tiny int32 token array — no (B,T,E) activation
    # transpose / extra HBM round-trip.
    x_tm = jnp.take(packed["embedding"], tokens.T, axis=0)        # (T, B, Ep)

    args = [x_tm]
    for l in range(num_layers):
        args += [packed[f"W_l{l}"], packed[f"b_l{l}"]]
    args += [packed["w_cls"], packed["b_cls"]]

    kernel = functools.partial(_fused_lstm_net_kernel, num_layers, Hp)
    return pl.pallas_call(
        kernel,
        out_shape=jax.ShapeDtypeStruct((B, 1), jnp.float32),
        in_specs=[pl.BlockSpec(memory_space=pltpu.MemorySpace.VMEM)] * len(args),
        out_specs=pl.BlockSpec(memory_space=pltpu.MemorySpace.VMEM),
    )(*args)


# ----------------------------------------------------------------------------
# Pure-JAX reference (for correctness check)
# ----------------------------------------------------------------------------
def lstm_net_reference(tokens, params, num_layers):
    emb = jnp.take(params["embedding"], tokens, axis=0)
    B = tokens.shape[0]
    x = emb.astype(jnp.float32)                                   # (B, T, E)
    for layer in range(num_layers):
        w_ih = params[f"w_ih_l{layer}"]
        w_hh = params[f"w_hh_l{layer}"]
        b = params[f"b_ih_l{layer}"] + params[f"b_hh_l{layer}"]
        H = w_hh.shape[1]
        h = jnp.zeros((B, H), jnp.float32)
        c = jnp.zeros((B, H), jnp.float32)

        def step(carry, x_t):
            h, c = carry
            gates = x_t @ w_ih.T + h @ w_hh.T + b
            i_g = jax.nn.sigmoid(gates[:, 0 * H:1 * H])
            f_g = jax.nn.sigmoid(gates[:, 1 * H:2 * H])
            g_g = jnp.tanh(gates[:, 2 * H:3 * H])
            o_g = jax.nn.sigmoid(gates[:, 3 * H:4 * H])
            c = f_g * c + i_g * g_g
            h = o_g * jnp.tanh(c)
            return (h, c), h

        (_, _), hs = jax.lax.scan(step, (h, c), jnp.transpose(x, (1, 0, 2)))
        x = jnp.transpose(hs, (1, 0, 2))                          # (B, T, H)
    h_last = x[:, -1, :]
    return jax.nn.sigmoid(h_last @ params["w_cls"].T + params["b_cls"])


# ----------------------------------------------------------------------------
# Parameter construction (deterministic, synthetic)
# ----------------------------------------------------------------------------
def make_params(key, vocab, emb_dim, hidden_dim, num_layers):
    params = {}
    k_emb, key = jax.random.split(key)
    params["embedding"] = jax.random.normal(k_emb, (vocab, emb_dim), jnp.float32)

    scale = 1.0 / jnp.sqrt(hidden_dim)
    for layer in range(num_layers):
        in_dim = emb_dim if layer == 0 else hidden_dim
        k1, k2, k3, k4, key = jax.random.split(key, 5)
        params[f"w_ih_l{layer}"] = jax.random.uniform(
            k1, (4 * hidden_dim, in_dim), jnp.float32, -scale, scale)
        params[f"w_hh_l{layer}"] = jax.random.uniform(
            k2, (4 * hidden_dim, hidden_dim), jnp.float32, -scale, scale)
        params[f"b_ih_l{layer}"] = jax.random.uniform(
            k3, (4 * hidden_dim,), jnp.float32, -scale, scale)
        params[f"b_hh_l{layer}"] = jax.random.uniform(
            k4, (4 * hidden_dim,), jnp.float32, -scale, scale)

    k_w, k_b = jax.random.split(key)
    params["w_cls"] = jax.random.uniform(
        k_w, (1, hidden_dim), jnp.float32, -scale, scale)
    params["b_cls"] = jax.random.uniform(
        k_b, (1,), jnp.float32, -scale, scale)
    return params


# ----------------------------------------------------------------------------
if __name__ == "__main__":
    VOCAB = 50
    EMB_DIM = 16
    HIDDEN_DIM = 32
    NUM_LAYERS = 2
    BATCH = 2
    SEQ = 8

    key = jax.random.PRNGKey(0)
    k_tok, k_par = jax.random.split(key)
    tokens = jax.random.randint(k_tok, (BATCH, SEQ), 0, VOCAB, dtype=jnp.int32)
    params = make_params(k_par, VOCAB, EMB_DIM, HIDDEN_DIM, NUM_LAYERS)

    packed = pack_lstm_net_params(params, EMB_DIM, HIDDEN_DIM, NUM_LAYERS)

    out = lstm_net_forward(tokens, packed, NUM_LAYERS)
    out = jax.block_until_ready(out)
    assert out.shape == (BATCH, 1), out.shape

    ref = jax.block_until_ready(lstm_net_reference(tokens, params, NUM_LAYERS))
    assert jnp.allclose(out, ref, atol=2e-4, rtol=2e-4), (out, ref)

    print("KERNEL_OK")
</pallas_src>

<mosaic_0001>
module attributes {stable_mosaic.version = 11 : i64} {
  func.func @_fused_lstm_net_kernel(%arg0: memref<8x2x128xf32, #tpu.memory_space<vmem>>, %arg1: memref<256x512xf32, #tpu.memory_space<vmem>>, %arg2: memref<1x512xf32, #tpu.memory_space<vmem>>, %arg3: memref<256x512xf32, #tpu.memory_space<vmem>>, %arg4: memref<1x512xf32, #tpu.memory_space<vmem>>, %arg5: memref<1x128xf32, #tpu.memory_space<vmem>>, %arg6: memref<1x1xf32, #tpu.memory_space<vmem>>, %arg7: memref<2x1xf32, #tpu.memory_space<vmem>>) attributes {dimension_semantics = [], scalar_prefetch = 0 : i64, scratch_operands = 0 : i64, tpu.core_type = #tpu.core_type<tc>} {
    %c0 = arith.constant 0 : index
    %c0_0 = arith.constant 0 : index
    %0 = vector.load %arg1[%c0, %c0_0] : memref<256x512xf32, #tpu.memory_space<vmem>>, vector<256x512xf32>
    %c0_1 = arith.constant 0 : index
    %c0_2 = arith.constant 0 : index
    %1 = vector.load %arg3[%c0_1, %c0_2] : memref<256x512xf32, #tpu.memory_space<vmem>>, vector<256x512xf32>
    %c0_3 = arith.constant 0 : index
    %c0_4 = arith.constant 0 : index
    %2 = vector.load %arg2[%c0_3, %c0_4] : memref<1x512xf32, #tpu.memory_space<vmem>>, vector<1x512xf32>
    %3 = vector.shape_cast %2 : vector<1x512xf32> to vector<1x512xf32>
    %4 = vector.broadcast %3 : vector<1x512xf32> to vector<2x512xf32>
    %c0_5 = arith.constant 0 : index
    %c0_6 = arith.constant 0 : index
    %5 = vector.load %arg4[%c0_5, %c0_6] : memref<1x512xf32, #tpu.memory_space<vmem>>, vector<1x512xf32>
    %6 = vector.shape_cast %5 : vector<1x512xf32> to vector<1x512xf32>
    %7 = vector.broadcast %6 : vector<1x512xf32> to vector<2x512xf32>
    %c0_7 = arith.constant 0 : index
    %c0_8 = arith.constant 0 : index
    %8 = vector.load %arg5[%c0_7, %c0_8] : memref<1x128xf32, #tpu.memory_space<vmem>>, vector<1x128xf32>
    %9 = vector.shape_cast %8 : vector<1x128xf32> to vector<1x128xf32>
    %10 = vector.broadcast %9 : vector<1x128xf32> to vector<2x128xf32>
    %cst = arith.constant 0.000000e+00 : f32
    %11 = vector.broadcast %cst : f32 to vector<2x128xf32>
    %c0_i32 = arith.constant 0 : i32
    %12 = arith.index_cast %c0_i32 : i32 to index
    %c0_9 = arith.constant 0 : index
    %c0_10 = arith.constant 0 : index
    %13 = vector.load %arg0[%12, %c0_9, %c0_10] : memref<8x2x128xf32, #tpu.memory_space<vmem>>, vector<1x2x128xf32>
    %14 = vector.shape_cast %13 : vector<1x2x128xf32> to vector<2x128xf32>
    %15 = tpu.concatenate %14, %11 in 1 : vector<2x128xf32>, vector<2x128xf32> -> vector<2x256xf32>
    %cst_11 = arith.constant dense<0.000000e+00> : vector<2x512xf32>
    %16 = tpu.matmul %15, %0, %cst_11 {dimension_numbers = #tpu.dot_dimension_numbers<[1], [0], [0], [1], [0, 0, 1, 1], [], []>} : vector<2x256xf32>, vector<256x512xf32>, vector<2x512xf32> -> vector<2x512xf32>
    %17 = arith.addf %16, %4 : vector<2x512xf32>
    %18 = vector.extract_strided_slice %17 {offsets = [0, 0], sizes = [2, 128], strides = [1, 1]} : vector<2x512xf32> to vector<2x128xf32>
    %19 = arith.negf %18 : vector<2x128xf32>
    %20 = math.exp %19 : vector<2x128xf32>
    %cst_12 = arith.constant 1.000000e+00 : f32
    %21 = vector.broadcast %cst_12 : f32 to vector<2x128xf32>
    %22 = arith.addf %21, %20 : vector<2x128xf32>
    %23 = arith.divf %21, %22 : vector<2x128xf32>
    %24 = vector.extract_strided_slice %17 {offsets = [0, 128], sizes = [2, 128], strides = [1, 1]} : vector<2x512xf32> to vector<2x128xf32>
    %25 = arith.negf %24 : vector<2x128xf32>
    %26 = math.exp %25 : vector<2x128xf32>
    %cst_13 = arith.constant 1.000000e+00 : f32
    %27 = vector.broadcast %cst_13 : f32 to vector<2x128xf32>
    %28 = arith.addf %27, %26 : vector<2x128xf32>
    %29 = arith.divf %27, %28 : vector<2x128xf32>
    %30 = vector.extract_strided_slice %17 {offsets = [0, 256], sizes = [2, 128], strides = [1, 1]} : vector<2x512xf32> to vector<2x128xf32>
    %31 = math.tanh %30 : vector<2x128xf32>
    %32 = vector.extract_strided_slice %17 {offsets = [0, 384], sizes = [2, 128], strides = [1, 1]} : vector<2x512xf32> to vector<2x128xf32>
    %33 = arith.negf %32 : vector<2x128xf32>
    %34 = math.exp %33 : vector<2x128xf32>
    %cst_14 = arith.constant 1.000000e+00 : f32
    %35 = vector.broadcast %cst_14 : f32 to vector<2x128xf32>
    %36 = arith.addf %35, %34 : vector<2x128xf32>
    %37 = arith.divf %35, %36 : vector<2x128xf32>
    %38 = arith.mulf %29, %11 : vector<2x128xf32>
    %39 = arith.mulf %23, %31 : vector<2x128xf32>
    %40 = arith.addf %38, %39 : vector<2x128xf32>
    %41 = math.tanh %40 : vector<2x128xf32>
    %42 = arith.mulf %37, %41 : vector<2x128xf32>
    %43 = tpu.concatenate %42, %11 in 1 : vector<2x128xf32>, vector<2x128xf32> -> vector<2x256xf32>
    %cst_15 = arith.constant dense<0.000000e+00> : vector<2x512xf32>
    %44 = tpu.matmul %43, %1, %cst_15 {dimension_numbers = #tpu.dot_dimension_numbers<[1], [0], [0], [1], [0, 0, 1, 1], [], []>} : vector<2x256xf32>, vector<256x512xf32>, vector<2x512xf32> -> vector<2x512xf32>
    %45 = arith.addf %44, %7 : vector<2x512xf32>
    %46 = vector.extract_strided_slice %45 {offsets = [0, 0], sizes = [2, 128], strides = [1, 1]} : vector<2x512xf32> to vector<2x128xf32>
    %47 = arith.negf %46 : vector<2x128xf32>
    %48 = math.exp %47 : vector<2x128xf32>
    %cst_16 = arith.constant 1.000000e+00 : f32
    %49 = vector.broadcast %cst_16 : f32 to vector<2x128xf32>
    %50 = arith.addf %49, %48 : vector<2x128xf32>
    %51 = arith.divf %49, %50 : vector<2x128xf32>
    %52 = vector.extract_strided_slice %45 {offsets = [0, 128], sizes = [2, 128], strides = [1, 1]} : vector<2x512xf32> to vector<2x128xf32>
    %53 = arith.negf %52 : vector<2x128xf32>
    %54 = math.exp %53 : vector<2x128xf32>
    %cst_17 = arith.constant 1.000000e+00 : f32
    %55 = vector.broadcast %cst_17 : f32 to vector<2x128xf32>
    %56 = arith.addf %55, %54 : vector<2x128xf32>
    %57 = arith.divf %55, %56 : vector<2x128xf32>
    %58 = vector.extract_strided_slice %45 {offsets = [0, 256], sizes = [2, 128], strides = [1, 1]} : vector<2x512xf32> to vector<2x128xf32>
    %59 = math.tanh %58 : vector<2x128xf32>
    %60 = vector.extract_strided_slice %45 {offsets = [0, 384], sizes = [2, 128], strides = [1, 1]} : vector<2x512xf32> to vector<2x128xf32>
    %61 = arith.negf %60 : vector<2x128xf32>
    %62 = math.exp %61 : vector<2x128xf32>
    %cst_18 = arith.constant 1.000000e+00 : f32
    %63 = vector.broadcast %cst_18 : f32 to vector<2x128xf32>
    %64 = arith.addf %63, %62 : vector<2x128xf32>
    %65 = arith.divf %63, %64 : vector<2x128xf32>
    %66 = arith.mulf %57, %11 : vector<2x128xf32>
    %67 = arith.mulf %51, %59 : vector<2x128xf32>
    %68 = arith.addf %66, %67 : vector<2x128xf32>
    %69 = math.tanh %68 : vector<2x128xf32>
    %70 = arith.mulf %65, %69 : vector<2x128xf32>
    %c1_i32 = arith.constant 1 : i32
    %71 = arith.index_cast %c1_i32 : i32 to index
    %c0_19 = arith.constant 0 : index
    %c0_20 = arith.constant 0 : index
    %72 = vector.load %arg0[%71, %c0_19, %c0_20] : memref<8x2x128xf32, #tpu.memory_space<vmem>>, vector<1x2x128xf32>
    %73 = vector.shape_cast %72 : vector<1x2x128xf32> to vector<2x128xf32>
    %74 = tpu.concatenate %73, %42 in 1 : vector<2x128xf32>, vector<2x128xf32> -> vector<2x256xf32>
    %cst_21 = arith.constant dense<0.000000e+00> : vector<2x512xf32>
    %75 = tpu.matmul %74, %0, %cst_21 {dimension_numbers = #tpu.dot_dimension_numbers<[1], [0], [0], [1], [0, 0, 1, 1], [], []>} : vector<2x256xf32>, vector<256x512xf32>, vector<2x512xf32> -> vector<2x512xf32>
    %76 = arith.addf %75, %4 : vector<2x512xf32>
    %77 = vector.extract_strided_slice %76 {offsets = [0, 0], sizes = [2, 128], strides = [1, 1]} : vector<2x512xf32> to vector<2x128xf32>
    %78 = arith.negf %77 : vector<2x128xf32>
    %79 = math.exp %78 : vector<2x128xf32>
    %cst_22 = arith.constant 1.000000e+00 : f32
    %80 = vector.broadcast %cst_22 : f32 to vector<2x128xf32>
    %81 = arith.addf %80, %79 : vector<2x128xf32>
    %82 = arith.divf %80, %81 : vector<2x128xf32>
    %83 = vector.extract_strided_slice %76 {offsets = [0, 128], sizes = [2, 128], strides = [1, 1]} : vector<2x512xf32> to vector<2x128xf32>
    %84 = arith.negf %83 : vector<2x128xf32>
    %85 = math.exp %84 : vector<2x128xf32>
    %cst_23 = arith.constant 1.000000e+00 : f32
    %86 = vector.broadcast %cst_23 : f32 to vector<2x128xf32>
    %87 = arith.addf %86, %85 : vector<2x128xf32>
    %88 = arith.divf %86, %87 : vector<2x128xf32>
    %89 = vector.extract_strided_slice %76 {offsets = [0, 256], sizes = [2, 128], strides = [1, 1]} : vector<2x512xf32> to vector<2x128xf32>
    %90 = math.tanh %89 : vector<2x128xf32>
    %91 = vector.extract_strided_slice %76 {offsets = [0, 384], sizes = [2, 128], strides = [1, 1]} : vector<2x512xf32> to vector<2x128xf32>
    %92 = arith.negf %91 : vector<2x128xf32>
    %93 = math.exp %92 : vector<2x128xf32>
    %cst_24 = arith.constant 1.000000e+00 : f32
    %94 = vector.broadcast %cst_24 : f32 to vector<2x128xf32>
    %95 = arith.addf %94, %93 : vector<2x128xf32>
    %96 = arith.divf %94, %95 : vector<2x128xf32>
    %97 = arith.mulf %88, %40 : vector<2x128xf32>
    %98 = arith.mulf %82, %90 : vector<2x128xf32>
    %99 = arith.addf %97, %98 : vector<2x128xf32>
    %100 = math.tanh %99 : vector<2x128xf32>
    %101 = arith.mulf %96, %100 : vector<2x128xf32>
    %102 = tpu.concatenate %101, %70 in 1 : vector<2x128xf32>, vector<2x128xf32> -> vector<2x256xf32>
    %cst_25 = arith.constant dense<0.000000e+00> : vector<2x512xf32>
    %103 = tpu.matmul %102, %1, %cst_25 {dimension_numbers = #tpu.dot_dimension_numbers<[1], [0], [0], [1], [0, 0, 1, 1], [], []>} : vector<2x256xf32>, vector<256x512xf32>, vector<2x512xf32> -> vector<2x512xf32>
    %104 = arith.addf %103, %7 : vector<2x512xf32>
    %105 = vector.extract_strided_slice %104 {offsets = [0, 0], sizes = [2, 128], strides = [1, 1]} : vector<2x512xf32> to vector<2x128xf32>
    %106 = arith.negf %105 : vector<2x128xf32>
    %107 = math.exp %106 : vector<2x128xf32>
    %cst_26 = arith.constant 1.000000e+00 : f32
    %108 = vector.broadcast %cst_26 : f32 to vector<2x128xf32>
    %109 = arith.addf %108, %107 : vector<2x128xf32>
    %110 = arith.divf %108, %109 : vector<2x128xf32>
    %111 = vector.extract_strided_slice %104 {offsets = [0, 128], sizes = [2, 128], strides = [1, 1]} : vector<2x512xf32> to vector<2x128xf32>
    %112 = arith.negf %111 : vector<2x128xf32>
    %113 = math.exp %112 : vector<2x128xf32>
    %cst_27 = arith.constant 1.000000e+00 : f32
    %114 = vector.broadcast %cst_27 : f32 to vector<2x128xf32>
    %115 = arith.addf %114, %113 : vector<2x128xf32>
    %116 = arith.divf %114, %115 : vector<2x128xf32>
    %117 = vector.extract_strided_slice %104 {offsets = [0, 256], sizes = [2, 128], strides = [1, 1]} : vector<2x512xf32> to vector<2x128xf32>
    %118 = math.tanh %117 : vector<2x128xf32>
    %119 = vector.extract_strided_slice %104 {offsets = [0, 384], sizes = [2, 128], strides = [1, 1]} : vector<2x512xf32> to vector<2x128xf32>
    %120 = arith.negf %119 : vector<2x128xf32>
    %121 = math.exp %120 : vector<2x128xf32>
    %cst_28 = arith.constant 1.000000e+00 : f32
    %122 = vector.broadcast %cst_28 : f32 to vector<2x128xf32>
    %123 = arith.addf %122, %121 : vector<2x128xf32>
    %124 = arith.divf %122, %123 : vector<2x128xf32>
    %125 = arith.mulf %116, %68 : vector<2x128xf32>
    %126 = arith.mulf %110, %118 : vector<2x128xf32>
    %127 = arith.addf %125, %126 : vector<2x128xf32>
    %128 = math.tanh %127 : vector<2x128xf32>
    %129 = arith.mulf %124, %128 : vector<2x128xf32>
    %c2_i32 = arith.constant 2 : i32
    %130 = arith.index_cast %c2_i32 : i32 to index
    %c0_29 = arith.constant 0 : index
    %c0_30 = arith.constant 0 : index
    %131 = vector.load %arg0[%130, %c0_29, %c0_30] : memref<8x2x128xf32, #tpu.memory_space<vmem>>, vector<1x2x128xf32>
    %132 = vector.shape_cast %131 : vector<1x2x128xf32> to vector<2x128xf32>
    %133 = tpu.concatenate %132, %101 in 1 : vector<2x128xf32>, vector<2x128xf32> -> vector<2x256xf32>
    %cst_31 = arith.constant dense<0.000000e+00> : vector<2x512xf32>
    %134 = tpu.matmul %133, %0, %cst_31 {dimension_numbers = #tpu.dot_dimension_numbers<[1], [0], [0], [1], [0, 0, 1, 1], [], []>} : vector<2x256xf32>, vector<256x512xf32>, vector<2x512xf32> -> vector<2x512xf32>
    %135 = arith.addf %134, %4 : vector<2x512xf32>
    %136 = vector.extract_strided_slice %135 {offsets = [0, 0], sizes = [2, 128], strides = [1, 1]} : vector<2x512xf32> to vector<2x128xf32>
    %137 = arith.negf %136 : vector<2x128xf32>
    %138 = math.exp %137 : vector<2x128xf32>
    %cst_32 = arith.constant 1.000000e+00 : f32
    %139 = vector.broadcast %cst_32 : f32 to vector<2x128xf32>
    %140 = arith.addf %139, %138 : vector<2x128xf32>
    %141 = arith.divf %139, %140 : vector<2x128xf32>
    %142 = vector.extract_strided_slice %135 {offsets = [0, 128], sizes = [2, 128], strides = [1, 1]} : vector<2x512xf32> to vector<2x128xf32>
    %143 = arith.negf %142 : vector<2x128xf32>
    %144 = math.exp %143 : vector<2x128xf32>
    %cst_33 = arith.constant 1.000000e+00 : f32
    %145 = vector.broadcast %cst_33 : f32 to vector<2x128xf32>
    %146 = arith.addf %145, %144 : vector<2x128xf32>
    %147 = arith.divf %145, %146 : vector<2x128xf32>
    %148 = vector.extract_strided_slice %135 {offsets = [0, 256], sizes = [2, 128], strides = [1, 1]} : vector<2x512xf32> to vector<2x128xf32>
    %149 = math.tanh %148 : vector<2x128xf32>
    %150 = vector.extract_strided_slice %135 {offsets = [0, 384], sizes = [2, 128], strides = [1, 1]} : vector<2x512xf32> to vector<2x128xf32>
    %151 = arith.negf %150 : vector<2x128xf32>
    %152 = math.exp %151 : vector<2x128xf32>
    %cst_34 = arith.constant 1.000000e+00 : f32
    %153 = vector.broadcast %cst_34 : f32 to vector<2x128xf32>
    %154 = arith.addf %153, %152 : vector<2x128xf32>
    %155 = arith.divf %153, %154 : vector<2x128xf32>
    %156 = arith.mulf %147, %99 : vector<2x128xf32>
    %157 = arith.mulf %141, %149 : vector<2x128xf32>
    %158 = arith.addf %156, %157 : vector<2x128xf32>
    %159 = math.tanh %158 : vector<2x128xf32>
    %160 = arith.mulf %155, %159 : vector<2x128xf32>
    %161 = tpu.concatenate %160, %129 in 1 : vector<2x128xf32>, vector<2x128xf32> -> vector<2x256xf32>
    %cst_35 = arith.constant dense<0.000000e+00> : vector<2x512xf32>
    %162 = tpu.matmul %161, %1, %cst_35 {dimension_numbers = #tpu.dot_dimension_numbers<[1], [0], [0], [1], [0, 0, 1, 1], [], []>} : vector<2x256xf32>, vector<256x512xf32>, vector<2x512xf32> -> vector<2x512xf32>
    %163 = arith.addf %162, %7 : vector<2x512xf32>
    %164 = vector.extract_strided_slice %163 {offsets = [0, 0], sizes = [2, 128], strides = [1, 1]} : vector<2x512xf32> to vector<2x128xf32>
    %165 = arith.negf %164 : vector<2x128xf32>
    %166 = math.exp %165 : vector<2x128xf32>
    %cst_36 = arith.constant 1.000000e+00 : f32
    %167 = vector.broadcast %cst_36 : f32 to vector<2x128xf32>
    %168 = arith.addf %167, %166 : vector<2x128xf32>
    %169 = arith.divf %167, %168 : vector<2x128xf32>
    %170 = vector.extract_strided_slice %163 {offsets = [0, 128], sizes = [2, 128], strides = [1, 1]} : vector<2x512xf32> to vector<2x128xf32>
    %171 = arith.negf %170 : vector<2x128xf32>
    %172 = math.exp %171 : vector<2x128xf32>
    %cst_37 = arith.constant 1.000000e+00 : f32
    %173 = vector.broadcast %cst_37 : f32 to vector<2x128xf32>
    %174 = arith.addf %173, %172 : vector<2x128xf32>
    %175 = arith.divf %173, %174 : vector<2x128xf32>
    %176 = vector.extract_strided_slice %163 {offsets = [0, 256], sizes = [2, 128], strides = [1, 1]} : vector<2x512xf32> to vector<2x128xf32>
    %177 = math.tanh %176 : vector<2x128xf32>
    %178 = vector.extract_strided_slice %163 {offsets = [0, 384], sizes = [2, 128], strides = [1, 1]} : vector<2x512xf32> to vector<2x128xf32>
    %179 = arith.negf %178 : vector<2x128xf32>
    %180 = math.exp %179 : vector<2x128xf32>
    %cst_38 = arith.constant 1.000000e+00 : f32
    %181 = vector.broadcast %cst_38 : f32 to vector<2x128xf32>
    %182 = arith.addf %181, %180 : vector<2x128xf32>
    %183 = arith.divf %181, %182 : vector<2x128xf32>
    %184 = arith.mulf %175, %127 : vector<2x128xf32>
    %185 = arith.mulf %169, %177 : vector<2x128xf32>
    %186 = arith.addf %184, %185 : vector<2x128xf32>
    %187 = math.tanh %186 : vector<2x128xf32>
    %188 = arith.mulf %183, %187 : vector<2x128xf32>
    %c3_i32 = arith.constant 3 : i32
    %189 = arith.index_cast %c3_i32 : i32 to index
    %c0_39 = arith.constant 0 : index
    %c0_40 = arith.constant 0 : index
    %190 = vector.load %arg0[%189, %c0_39, %c0_40] : memref<8x2x128xf32, #tpu.memory_space<vmem>>, vector<1x2x128xf32>
    %191 = vector.shape_cast %190 : vector<1x2x128xf32> to vector<2x128xf32>
    %192 = tpu.concatenate %191, %160 in 1 : vector<2x128xf32>, vector<2x128xf32> -> vector<2x256xf32>
    %cst_41 = arith.constant dense<0.000000e+00> : vector<2x512xf32>
    %193 = tpu.matmul %192, %0, %cst_41 {dimension_numbers = #tpu.dot_dimension_numbers<[1], [0], [0], [1], [0, 0, 1, 1], [], []>} : vector<2x256xf32>, vector<256x512xf32>, vector<2x512xf32> -> vector<2x512xf32>
    %194 = arith.addf %193, %4 : vector<2x512xf32>
    %195 = vector.extract_strided_slice %194 {offsets = [0, 0], sizes = [2, 128], strides = [1, 1]} : vector<2x512xf32> to vector<2x128xf32>
    %196 = arith.negf %195 : vector<2x128xf32>
    %197 = math.exp %196 : vector<2x128xf32>
    %cst_42 = arith.constant 1.000000e+00 : f32
    %198 = vector.broadcast %cst_42 : f32 to vector<2x128xf32>
    %199 = arith.addf %198, %197 : vector<2x128xf32>
    %200 = arith.divf %198, %199 : vector<2x128xf32>
    %201 = vector.extract_strided_slice %194 {offsets = [0, 128], sizes = [2, 128], strides = [1, 1]} : vector<2x512xf32> to vector<2x128xf32>
    %202 = arith.negf %201 : vector<2x128xf32>
    %203 = math.exp %202 : vector<2x128xf32>
    %cst_43 = arith.constant 1.000000e+00 : f32
    %204 = vector.broadcast %cst_43 : f32 to vector<2x128xf32>
    %205 = arith.addf %204, %203 : vector<2x128xf32>
    %206 = arith.divf %204, %205 : vector<2x128xf32>
    %207 = vector.extract_strided_slice %194 {offsets = [0, 256], sizes = [2, 128], strides = [1, 1]} : vector<2x512xf32> to vector<2x128xf32>
    %208 = math.tanh %207 : vector<2x128xf32>
    %209 = vector.extract_strided_slice %194 {offsets = [0, 384], sizes = [2, 128], strides = [1, 1]} : vector<2x512xf32> to vector<2x128xf32>
    %210 = arith.negf %209 : vector<2x128xf32>
    %211 = math.exp %210 : vector<2x128xf32>
    %cst_44 = arith.constant 1.000000e+00 : f32
    %212 = vector.broadcast %cst_44 : f32 to vector<2x128xf32>
    %213 = arith.addf %212, %211 : vector<2x128xf32>
    %214 = arith.divf %212, %213 : vector<2x128xf32>
    %215 = arith.mulf %206, %158 : vector<2x128xf32>
    %216 = arith.mulf %200, %208 : vector<2x128xf32>
    %217 = arith.addf %215, %216 : vector<2x128xf32>
    %218 = math.tanh %217 : vector<2x128xf32>
    %219 = arith.mulf %214, %218 : vector<2x128xf32>
    %220 = tpu.concatenate %219, %188 in 1 : vector<2x128xf32>, vector<2x128xf32> -> vector<2x256xf32>
    %cst_45 = arith.constant dense<0.000000e+00> : vector<2x512xf32>
    %221 = tpu.matmul %220, %1, %cst_45 {dimension_numbers = #tpu.dot_dimension_numbers<[1], [0], [0], [1], [0, 0, 1, 1], [], []>} : vector<2x256xf32>, vector<256x512xf32>, vector<2x512xf32> -> vector<2x512xf32>
    %222 = arith.addf %221, %7 : vector<2x512xf32>
    %223 = vector.extract_strided_slice %222 {offsets = [0, 0], sizes = [2, 128], strides = [1, 1]} : vector<2x512xf32> to vector<2x128xf32>
    %224 = arith.negf %223 : vector<2x128xf32>
    %225 = math.exp %224 : vector<2x128xf32>
    %cst_46 = arith.constant 1.000000e+00 : f32
    %226 = vector.broadcast %cst_46 : f32 to vector<2x128xf32>
    %227 = arith.addf %226, %225 : vector<2x128xf32>
    %228 = arith.divf %226, %227 : vector<2x128xf32>
    %229 = vector.extract_strided_slice %222 {offsets = [0, 128], sizes = [2, 128], strides = [1, 1]} : vector<2x512xf32> to vector<2x128xf32>
    %230 = arith.negf %229 : vector<2x128xf32>
    %231 = math.exp %230 : vector<2x128xf32>
    %cst_47 = arith.constant 1.000000e+00 : f32
    %232 = vector.broadcast %cst_47 : f32 to vector<2x128xf32>
    %233 = arith.addf %232, %231 : vector<2x128xf32>
    %234 = arith.divf %232, %233 : vector<2x128xf32>
    %235 = vector.extract_strided_slice %222 {offsets = [0, 256], sizes = [2, 128], strides = [1, 1]} : vector<2x512xf32> to vector<2x128xf32>
    %236 = math.tanh %235 : vector<2x128xf32>
    %237 = vector.extract_strided_slice %222 {offsets = [0, 384], sizes = [2, 128], strides = [1, 1]} : vector<2x512xf32> to vector<2x128xf32>
    %238 = arith.negf %237 : vector<2x128xf32>
    %239 = math.exp %238 : vector<2x128xf32>
    %cst_48 = arith.constant 1.000000e+00 : f32
    %240 = vector.broadcast %cst_48 : f32 to vector<2x128xf32>
    %241 = arith.addf %240, %239 : vector<2x128xf32>
    %242 = arith.divf %240, %241 : vector<2x128xf32>
    %243 = arith.mulf %234, %186 : vector<2x128xf32>
    %244 = arith.mulf %228, %236 : vector<2x128xf32>
    %245 = arith.addf %243, %244 : vector<2x128xf32>
    %246 = math.tanh %245 : vector<2x128xf32>
    %247 = arith.mulf %242, %246 : vector<2x128xf32>
    %c4_i32 = arith.constant 4 : i32
    %248 = arith.index_cast %c4_i32 : i32 to index
    %c0_49 = arith.constant 0 : index
    %c0_50 = arith.constant 0 : index
    %249 = vector.load %arg0[%248, %c0_49, %c0_50] : memref<8x2x128xf32, #tpu.memory_space<vmem>>, vector<1x2x128xf32>
    %250 = vector.shape_cast %249 : vector<1x2x128xf32> to vector<2x128xf32>
    %251 = tpu.concatenate %250, %219 in 1 : vector<2x128xf32>, vector<2x128xf32> -> vector<2x256xf32>
    %cst_51 = arith.constant dense<0.000000e+00> : vector<2x512xf32>
    %252 = tpu.matmul %251, %0, %cst_51 {dimension_numbers = #tpu.dot_dimension_numbers<[1], [0], [0], [1], [0, 0, 1, 1], [], []>} : vector<2x256xf32>, vector<256x512xf32>, vector<2x512xf32> -> vector<2x512xf32>
    %253 = arith.addf %252, %4 : vector<2x512xf32>
    %254 = vector.extract_strided_slice %253 {offsets = [0, 0], sizes = [2, 128], strides = [1, 1]} : vector<2x512xf32> to vector<2x128xf32>
    %255 = arith.negf %254 : vector<2x128xf32>
    %256 = math.exp %255 : vector<2x128xf32>
    %cst_52 = arith.constant 1.000000e+00 : f32
    %257 = vector.broadcast %cst_52 : f32 to vector<2x128xf32>
    %258 = arith.addf %257, %256 : vector<2x128xf32>
    %259 = arith.divf %257, %258 : vector<2x128xf32>
    %260 = vector.extract_strided_slice %253 {offsets = [0, 128], sizes = [2, 128], strides = [1, 1]} : vector<2x512xf32> to vector<2x128xf32>
    %261 = arith.negf %260 : vector<2x128xf32>
    %262 = math.exp %261 : vector<2x128xf32>
    %cst_53 = arith.constant 1.000000e+00 : f32
    %263 = vector.broadcast %cst_53 : f32 to vector<2x128xf32>
    %264 = arith.addf %263, %262 : vector<2x128xf32>
    %265 = arith.divf %263, %264 : vector<2x128xf32>
    %266 = vector.extract_strided_slice %253 {offsets = [0, 256], sizes = [2, 128], strides = [1, 1]} : vector<2x512xf32> to vector<2x128xf32>
    %267 = math.tanh %266 : vector<2x128xf32>
    %268 = vector.extract_strided_slice %253 {offsets = [0, 384], sizes = [2, 128], strides = [1, 1]} : vector<2x512xf32> to vector<2x128xf32>
    %269 = arith.negf %268 : vector<2x128xf32>
    %270 = math.exp %269 : vector<2x128xf32>
    %cst_54 = arith.constant 1.000000e+00 : f32
    %271 = vector.broadcast %cst_54 : f32 to vector<2x128xf32>
    %272 = arith.addf %271, %270 : vector<2x128xf32>
    %273 = arith.divf %271, %272 : vector<2x128xf32>
    %274 = arith.mulf %265, %217 : vector<2x128xf32>
    %275 = arith.mulf %259, %267 : vector<2x128xf32>
    %276 = arith.addf %274, %275 : vector<2x128xf32>
    %277 = math.tanh %276 : vector<2x128xf32>
    %278 = arith.mulf %273, %277 : vector<2x128xf32>
    %279 = tpu.concatenate %278, %247 in 1 : vector<2x128xf32>, vector<2x128xf32> -> vector<2x256xf32>
    %cst_55 = arith.constant dense<0.000000e+00> : vector<2x512xf32>
    %280 = tpu.matmul %279, %1, %cst_55 {dimension_numbers = #tpu.dot_dimension_numbers<[1], [0], [0], [1], [0, 0, 1, 1], [], []>} : vector<2x256xf32>, vector<256x512xf32>, vector<2x512xf32> -> vector<2x512xf32>
    %281 = arith.addf %280, %7 : vector<2x512xf32>
    %282 = vector.extract_strided_slice %281 {offsets = [0, 0], sizes = [2, 128], strides = [1, 1]} : vector<2x512xf32> to vector<2x128xf32>
    %283 = arith.negf %282 : vector<2x128xf32>
    %284 = math.exp %283 : vector<2x128xf32>
    %cst_56 = arith.constant 1.000000e+00 : f32
    %285 = vector.broadcast %cst_56 : f32 to vector<2x128xf32>
    %286 = arith.addf %285, %284 : vector<2x128xf32>
    %287 = arith.divf %285, %286 : vector<2x128xf32>
    %288 = vector.extract_strided_slice %281 {offsets = [0, 128], sizes = [2, 128], strides = [1, 1]} : vector<2x512xf32> to vector<2x128xf32>
    %289 = arith.negf %288 : vector<2x128xf32>
    %290 = math.exp %289 : vector<2x128xf32>
    %cst_57 = arith.constant 1.000000e+00 : f32
    %291 = vector.broadcast %cst_57 : f32 to vector<2x128xf32>
    %292 = arith.addf %291, %290 : vector<2x128xf32>
    %293 = arith.divf %291, %292 : vector<2x128xf32>
    %294 = vector.extract_strided_slice %281 {offsets = [0, 256], sizes = [2, 128], strides = [1, 1]} : vector<2x512xf32> to vector<2x128xf32>
    %295 = math.tanh %294 : vector<2x128xf32>
    %296 = vector.extract_strided_slice %281 {offsets = [0, 384], sizes = [2, 128], strides = [1, 1]} : vector<2x512xf32> to vector<2x128xf32>
    %297 = arith.negf %296 : vector<2x128xf32>
    %298 = math.exp %297 : vector<2x128xf32>
    %cst_58 = arith.constant 1.000000e+00 : f32
    %299 = vector.broadcast %cst_58 : f32 to vector<2x128xf32>
    %300 = arith.addf %299, %298 : vector<2x128xf32>
    %301 = arith.divf %299, %300 : vector<2x128xf32>
    %302 = arith.mulf %293, %245 : vector<2x128xf32>
    %303 = arith.mulf %287, %295 : vector<2x128xf32>
    %304 = arith.addf %302, %303 : vector<2x128xf32>
    %305 = math.tanh %304 : vector<2x128xf32>
    %306 = arith.mulf %301, %305 : vector<2x128xf32>
    %c5_i32 = arith.constant 5 : i32
    %307 = arith.index_cast %c5_i32 : i32 to index
    %c0_59 = arith.constant 0 : index
    %c0_60 = arith.constant 0 : index
    %308 = vector.load %arg0[%307, %c0_59, %c0_60] : memref<8x2x128xf32, #tpu.memory_space<vmem>>, vector<1x2x128xf32>
    %309 = vector.shape_cast %308 : vector<1x2x128xf32> to vector<2x128xf32>
    %310 = tpu.concatenate %309, %278 in 1 : vector<2x128xf32>, vector<2x128xf32> -> vector<2x256xf32>
    %cst_61 = arith.constant dense<0.000000e+00> : vector<2x512xf32>
    %311 = tpu.matmul %310, %0, %cst_61 {dimension_numbers = #tpu.dot_dimension_numbers<[1], [0], [0], [1], [0, 0, 1, 1], [], []>} : vector<2x256xf32>, vector<256x512xf32>, vector<2x512xf32> -> vector<2x512xf32>
    %312 = arith.addf %311, %4 : vector<2x512xf32>
    %313 = vector.extract_strided_slice %312 {offsets = [0, 0], sizes = [2, 128], strides = [1, 1]} : vector<2x512xf32> to vector<2x128xf32>
    %314 = arith.negf %313 : vector<2x128xf32>
    %315 = math.exp %314 : vector<2x128xf32>
    %cst_62 = arith.constant 1.000000e+00 : f32
    %316 = vector.broadcast %cst_62 : f32 to vector<2x128xf32>
    %317 = arith.addf %316, %315 : vector<2x128xf32>
    %318 = arith.divf %316, %317 : vector<2x128xf32>
    %319 = vector.extract_strided_slice %312 {offsets = [0, 128], sizes = [2, 128], strides = [1, 1]} : vector<2x512xf32> to vector<2x128xf32>
    %320 = arith.negf %319 : vector<2x128xf32>
    %321 = math.exp %320 : vector<2x128xf32>
    %cst_63 = arith.constant 1.000000e+00 : f32
    %322 = vector.broadcast %cst_63 : f32 to vector<2x128xf32>
    %323 = arith.addf %322, %321 : vector<2x128xf32>
    %324 = arith.divf %322, %323 : vector<2x128xf32>
    %325 = vector.extract_strided_slice %312 {offsets = [0, 256], sizes = [2, 128], strides = [1, 1]} : vector<2x512xf32> to vector<2x128xf32>
    %326 = math.tanh %325 : vector<2x128xf32>
    %327 = vector.extract_strided_slice %312 {offsets = [0, 384], sizes = [2, 128], strides = [1, 1]} : vector<2x512xf32> to vector<2x128xf32>
    %328 = arith.negf %327 : vector<2x128xf32>
    %329 = math.exp %328 : vector<2x128xf32>
    %cst_64 = arith.constant 1.000000e+00 : f32
    %330 = vector.broadcast %cst_64 : f32 to vector<2x128xf32>
    %331 = arith.addf %330, %329 : vector<2x128xf32>
    %332 = arith.divf %330, %331 : vector<2x128xf32>
    %333 = arith.mulf %324, %276 : vector<2x128xf32>
    %334 = arith.mulf %318, %326 : vector<2x128xf32>
    %335 = arith.addf %333, %334 : vector<2x128xf32>
    %336 = math.tanh %335 : vector<2x128xf32>
    %337 = arith.mulf %332, %336 : vector<2x128xf32>
    %338 = tpu.concatenate %337, %306 in 1 : vector<2x128xf32>, vector<2x128xf32> -> vector<2x256xf32>
    %cst_65 = arith.constant dense<0.000000e+00> : vector<2x512xf32>
    %339 = tpu.matmul %338, %1, %cst_65 {dimension_numbers = #tpu.dot_dimension_numbers<[1], [0], [0], [1], [0, 0, 1, 1], [], []>} : vector<2x256xf32>, vector<256x512xf32>, vector<2x512xf32> -> vector<2x512xf32>
    %340 = arith.addf %339, %7 : vector<2x512xf32>
    %341 = vector.extract_strided_slice %340 {offsets = [0, 0], sizes = [2, 128], strides = [1, 1]} : vector<2x512xf32> to vector<2x128xf32>
    %342 = arith.negf %341 : vector<2x128xf32>
    %343 = math.exp %342 : vector<2x128xf32>
    %cst_66 = arith.constant 1.000000e+00 : f32
    %344 = vector.broadcast %cst_66 : f32 to vector<2x128xf32>
    %345 = arith.addf %344, %343 : vector<2x128xf32>
    %346 = arith.divf %344, %345 : vector<2x128xf32>
    %347 = vector.extract_strided_slice %340 {offsets = [0, 128], sizes = [2, 128], strides = [1, 1]} : vector<2x512xf32> to vector<2x128xf32>
    %348 = arith.negf %347 : vector<2x128xf32>
    %349 = math.exp %348 : vector<2x128xf32>
    %cst_67 = arith.constant 1.000000e+00 : f32
    %350 = vector.broadcast %cst_67 : f32 to vector<2x128xf32>
    %351 = arith.addf %350, %349 : vector<2x128xf32>
    %352 = arith.divf %350, %351 : vector<2x128xf32>
    %353 = vector.extract_strided_slice %340 {offsets = [0, 256], sizes = [2, 128], strides = [1, 1]} : vector<2x512xf32> to vector<2x128xf32>
    %354 = math.tanh %353 : vector<2x128xf32>
    %355 = vector.extract_strided_slice %340 {offsets = [0, 384], sizes = [2, 128], strides = [1, 1]} : vector<2x512xf32> to vector<2x128xf32>
    %356 = arith.negf %355 : vector<2x128xf32>
    %357 = math.exp %356 : vector<2x128xf32>
    %cst_68 = arith.constant 1.000000e+00 : f32
    %358 = vector.broadcast %cst_68 : f32 to vector<2x128xf32>
    %359 = arith.addf %358, %357 : vector<2x128xf32>
    %360 = arith.divf %358, %359 : vector<2x128xf32>
    %361 = arith.mulf %352, %304 : vector<2x128xf32>
    %362 = arith.mulf %346, %354 : vector<2x128xf32>
    %363 = arith.addf %361, %362 : vector<2x128xf32>
    %364 = math.tanh %363 : vector<2x128xf32>
    %365 = arith.mulf %360, %364 : vector<2x128xf32>
    %c6_i32 = arith.constant 6 : i32
    %366 = arith.index_cast %c6_i32 : i32 to index
    %c0_69 = arith.constant 0 : index
    %c0_70 = arith.constant 0 : index
    %367 = vector.load %arg0[%366, %c0_69, %c0_70] : memref<8x2x128xf32, #tpu.memory_space<vmem>>, vector<1x2x128xf32>
    %368 = vector.shape_cast %367 : vector<1x2x128xf32> to vector<2x128xf32>
    %369 = tpu.concatenate %368, %337 in 1 : vector<2x128xf32>, vector<2x128xf32> -> vector<2x256xf32>
    %cst_71 = arith.constant dense<0.000000e+00> : vector<2x512xf32>
    %370 = tpu.matmul %369, %0, %cst_71 {dimension_numbers = #tpu.dot_dimension_numbers<[1], [0], [0], [1], [0, 0, 1, 1], [], []>} : vector<2x256xf32>, vector<256x512xf32>, vector<2x512xf32> -> vector<2x512xf32>
    %371 = arith.addf %370, %4 : vector<2x512xf32>
    %372 = vector.extract_strided_slice %371 {offsets = [0, 0], sizes = [2, 128], strides = [1, 1]} : vector<2x512xf32> to vector<2x128xf32>
    %373 = arith.negf %372 : vector<2x128xf32>
    %374 = math.exp %373 : vector<2x128xf32>
    %cst_72 = arith.constant 1.000000e+00 : f32
    %375 = vector.broadcast %cst_72 : f32 to vector<2x128xf32>
    %376 = arith.addf %375, %374 : vector<2x128xf32>
    %377 = arith.divf %375, %376 : vector<2x128xf32>
    %378 = vector.extract_strided_slice %371 {offsets = [0, 128], sizes = [2, 128], strides = [1, 1]} : vector<2x512xf32> to vector<2x128xf32>
    %379 = arith.negf %378 : vector<2x128xf32>
    %380 = math.exp %379 : vector<2x128xf32>
    %cst_73 = arith.constant 1.000000e+00 : f32
    %381 = vector.broadcast %cst_73 : f32 to vector<2x128xf32>
    %382 = arith.addf %381, %380 : vector<2x128xf32>
    %383 = arith.divf %381, %382 : vector<2x128xf32>
    %384 = vector.extract_strided_slice %371 {offsets = [0, 256], sizes = [2, 128], strides = [1, 1]} : vector<2x512xf32> to vector<2x128xf32>
    %385 = math.tanh %384 : vector<2x128xf32>
    %386 = vector.extract_strided_slice %371 {offsets = [0, 384], sizes = [2, 128], strides = [1, 1]} : vector<2x512xf32> to vector<2x128xf32>
    %387 = arith.negf %386 : vector<2x128xf32>
    %388 = math.exp %387 : vector<2x128xf32>
    %cst_74 = arith.constant 1.000000e+00 : f32
    %389 = vector.broadcast %cst_74 : f32 to vector<2x128xf32>
    %390 = arith.addf %389, %388 : vector<2x128xf32>
    %391 = arith.divf %389, %390 : vector<2x128xf32>
    %392 = arith.mulf %383, %335 : vector<2x128xf32>
    %393 = arith.mulf %377, %385 : vector<2x128xf32>
    %394 = arith.addf %392, %393 : vector<2x128xf32>
    %395 = math.tanh %394 : vector<2x128xf32>
    %396 = arith.mulf %391, %395 : vector<2x128xf32>
    %397 = tpu.concatenate %396, %365 in 1 : vector<2x128xf32>, vector<2x128xf32> -> vector<2x256xf32>
    %cst_75 = arith.constant dense<0.000000e+00> : vector<2x512xf32>
    %398 = tpu.matmul %397, %1, %cst_75 {dimension_numbers = #tpu.dot_dimension_numbers<[1], [0], [0], [1], [0, 0, 1, 1], [], []>} : vector<2x256xf32>, vector<256x512xf32>, vector<2x512xf32> -> vector<2x512xf32>
    %399 = arith.addf %398, %7 : vector<2x512xf32>
    %400 = vector.extract_strided_slice %399 {offsets = [0, 0], sizes = [2, 128], strides = [1, 1]} : vector<2x512xf32> to vector<2x128xf32>
    %401 = arith.negf %400 : vector<2x128xf32>
    %402 = math.exp %401 : vector<2x128xf32>
    %cst_76 = arith.constant 1.000000e+00 : f32
    %403 = vector.broadcast %cst_76 : f32 to vector<2x128xf32>
    %404 = arith.addf %403, %402 : vector<2x128xf32>
    %405 = arith.divf %403, %404 : vector<2x128xf32>
    %406 = vector.extract_strided_slice %399 {offsets = [0, 128], sizes = [2, 128], strides = [1, 1]} : vector<2x512xf32> to vector<2x128xf32>
    %407 = arith.negf %406 : vector<2x128xf32>
    %408 = math.exp %407 : vector<2x128xf32>
    %cst_77 = arith.constant 1.000000e+00 : f32
    %409 = vector.broadcast %cst_77 : f32 to vector<2x128xf32>
    %410 = arith.addf %409, %408 : vector<2x128xf32>
    %411 = arith.divf %409, %410 : vector<2x128xf32>
    %412 = vector.extract_strided_slice %399 {offsets = [0, 256], sizes = [2, 128], strides = [1, 1]} : vector<2x512xf32> to vector<2x128xf32>
    %413 = math.tanh %412 : vector<2x128xf32>
    %414 = vector.extract_strided_slice %399 {offsets = [0, 384], sizes = [2, 128], strides = [1, 1]} : vector<2x512xf32> to vector<2x128xf32>
    %415 = arith.negf %414 : vector<2x128xf32>
    %416 = math.exp %415 : vector<2x128xf32>
    %cst_78 = arith.constant 1.000000e+00 : f32
    %417 = vector.broadcast %cst_78 : f32 to vector<2x128xf32>
    %418 = arith.addf %417, %416 : vector<2x128xf32>
    %419 = arith.divf %417, %418 : vector<2x128xf32>
    %420 = arith.mulf %411, %363 : vector<2x128xf32>
    %421 = arith.mulf %405, %413 : vector<2x128xf32>
    %422 = arith.addf %420, %421 : vector<2x128xf32>
    %423 = math.tanh %422 : vector<2x128xf32>
    %424 = arith.mulf %419, %423 : vector<2x128xf32>
    %c7_i32 = arith.constant 7 : i32
    %425 = arith.index_cast %c7_i32 : i32 to index
    %c0_79 = arith.constant 0 : index
    %c0_80 = arith.constant 0 : index
    %426 = vector.load %arg0[%425, %c0_79, %c0_80] : memref<8x2x128xf32, #tpu.memory_space<vmem>>, vector<1x2x128xf32>
    %427 = vector.shape_cast %426 : vector<1x2x128xf32> to vector<2x128xf32>
    %428 = tpu.concatenate %427, %396 in 1 : vector<2x128xf32>, vector<2x128xf32> -> vector<2x256xf32>
    %cst_81 = arith.constant dense<0.000000e+00> : vector<2x512xf32>
    %429 = tpu.matmul %428, %0, %cst_81 {dimension_numbers = #tpu.dot_dimension_numbers<[1], [0], [0], [1], [0, 0, 1, 1], [], []>} : vector<2x256xf32>, vector<256x512xf32>, vector<2x512xf32> -> vector<2x512xf32>
    %430 = arith.addf %429, %4 : vector<2x512xf32>
    %431 = vector.extract_strided_slice %430 {offsets = [0, 0], sizes = [2, 128], strides = [1, 1]} : vector<2x512xf32> to vector<2x128xf32>
    %432 = arith.negf %431 : vector<2x128xf32>
    %433 = math.exp %432 : vector<2x128xf32>
    %cst_82 = arith.constant 1.000000e+00 : f32
    %434 = vector.broadcast %cst_82 : f32 to vector<2x128xf32>
    %435 = arith.addf %434, %433 : vector<2x128xf32>
    %436 = arith.divf %434, %435 : vector<2x128xf32>
    %437 = vector.extract_strided_slice %430 {offsets = [0, 128], sizes = [2, 128], strides = [1, 1]} : vector<2x512xf32> to vector<2x128xf32>
    %438 = arith.negf %437 : vector<2x128xf32>
    %439 = math.exp %438 : vector<2x128xf32>
    %cst_83 = arith.constant 1.000000e+00 : f32
    %440 = vector.broadcast %cst_83 : f32 to vector<2x128xf32>
    %441 = arith.addf %440, %439 : vector<2x128xf32>
    %442 = arith.divf %440, %441 : vector<2x128xf32>
    %443 = vector.extract_strided_slice %430 {offsets = [0, 256], sizes = [2, 128], strides = [1, 1]} : vector<2x512xf32> to vector<2x128xf32>
    %444 = math.tanh %443 : vector<2x128xf32>
    %445 = vector.extract_strided_slice %430 {offsets = [0, 384], sizes = [2, 128], strides = [1, 1]} : vector<2x512xf32> to vector<2x128xf32>
    %446 = arith.negf %445 : vector<2x128xf32>
    %447 = math.exp %446 : vector<2x128xf32>
    %cst_84 = arith.constant 1.000000e+00 : f32
    %448 = vector.broadcast %cst_84 : f32 to vector<2x128xf32>
    %449 = arith.addf %448, %447 : vector<2x128xf32>
    %450 = arith.divf %448, %449 : vector<2x128xf32>
    %451 = arith.mulf %442, %394 : vector<2x128xf32>
    %452 = arith.mulf %436, %444 : vector<2x128xf32>
    %453 = arith.addf %451, %452 : vector<2x128xf32>
    %454 = math.tanh %453 : vector<2x128xf32>
    %455 = arith.mulf %450, %454 : vector<2x128xf32>
    %456 = tpu.concatenate %455, %424 in 1 : vector<2x128xf32>, vector<2x128xf32> -> vector<2x256xf32>
    %cst_85 = arith.constant dense<0.000000e+00> : vector<2x512xf32>
    %457 = tpu.matmul %456, %1, %cst_85 {dimension_numbers = #tpu.dot_dimension_numbers<[1], [0], [0], [1], [0, 0, 1, 1], [], []>} : vector<2x256xf32>, vector<256x512xf32>, vector<2x512xf32> -> vector<2x512xf32>
    %458 = arith.addf %457, %7 : vector<2x512xf32>
    %459 = vector.extract_strided_slice %458 {offsets = [0, 0], sizes = [2, 128], strides = [1, 1]} : vector<2x512xf32> to vector<2x128xf32>
    %460 = arith.negf %459 : vector<2x128xf32>
    %461 = math.exp %460 : vector<2x128xf32>
    %cst_86 = arith.constant 1.000000e+00 : f32
    %462 = vector.broadcast %cst_86 : f32 to vector<2x128xf32>
    %463 = arith.addf %462, %461 : vector<2x128xf32>
    %464 = arith.divf %462, %463 : vector<2x128xf32>
    %465 = vector.extract_strided_slice %458 {offsets = [0, 128], sizes = [2, 128], strides = [1, 1]} : vector<2x512xf32> to vector<2x128xf32>
    %466 = arith.negf %465 : vector<2x128xf32>
    %467 = math.exp %466 : vector<2x128xf32>
    %cst_87 = arith.constant 1.000000e+00 : f32
    %468 = vector.broadcast %cst_87 : f32 to vector<2x128xf32>
    %469 = arith.addf %468, %467 : vector<2x128xf32>
    %470 = arith.divf %468, %469 : vector<2x128xf32>
    %471 = vector.extract_strided_slice %458 {offsets = [0, 256], sizes = [2, 128], strides = [1, 1]} : vector<2x512xf32> to vector<2x128xf32>
    %472 = math.tanh %471 : vector<2x128xf32>
    %473 = vector.extract_strided_slice %458 {offsets = [0, 384], sizes = [2, 128], strides = [1, 1]} : vector<2x512xf32> to vector<2x128xf32>
    %474 = arith.negf %473 : vector<2x128xf32>
    %475 = math.exp %474 : vector<2x128xf32>
    %cst_88 = arith.constant 1.000000e+00 : f32
    %476 = vector.broadcast %cst_88 : f32 to vector<2x128xf32>
    %477 = arith.addf %476, %475 : vector<2x128xf32>
    %478 = arith.divf %476, %477 : vector<2x128xf32>
    %479 = arith.mulf %470, %422 : vector<2x128xf32>
    %480 = arith.mulf %464, %472 : vector<2x128xf32>
    %481 = arith.addf %479, %480 : vector<2x128xf32>
    %482 = math.tanh %481 : vector<2x128xf32>
    %483 = arith.mulf %478, %482 : vector<2x128xf32>
    %c8_i32 = arith.constant 8 : i32
    %484 = arith.mulf %483, %10 : vector<2x128xf32>
    %cst_89 = arith.constant dense<0.000000e+00> : vector<2xf32>
    %485 = vector.multi_reduction <add>, %484, %cst_89 [1] : vector<2x128xf32> to vector<2xf32>
    %486 = vector.shape_cast %485 : vector<2xf32> to vector<2x1xf32>
    %c0_90 = arith.constant 0 : index
    %c0_91 = arith.constant 0 : index
    %487 = vector.load %arg6[%c0_90, %c0_91] : memref<1x1xf32, #tpu.memory_space<vmem>>, vector<1x1xf32>
    %488 = vector.broadcast %487 : vector<1x1xf32> to vector<2x1xf32>
    %489 = arith.addf %486, %488 : vector<2x1xf32>
    %490 = arith.negf %489 : vector<2x1xf32>
    %491 = math.exp %490 : vector<2x1xf32>
    %cst_92 = arith.constant 1.000000e+00 : f32
    %492 = vector.broadcast %cst_92 : f32 to vector<2x1xf32>
    %493 = arith.addf %492, %491 : vector<2x1xf32>
    %494 = arith.divf %492, %493 : vector<2x1xf32>
    %c0_93 = arith.constant 0 : index
    %c0_94 = arith.constant 0 : index
    %495 = vector.load %arg7[%c0_93, %c0_94] : memref<2x1xf32, #tpu.memory_space<vmem>>, vector<2x1xf32>
    tpu.vector_store %arg7[%c0_93, %c0_94], %494 {strides = array<i32>} : memref<2x1xf32, #tpu.memory_space<vmem>>, vector<2x1xf32>,
    return
  }
}

</mosaic_0001>

<llo_original>
// kernel: lstm_net_forward.1
$region0: #{lstm_net_forward.1}
  #allocation0 [shape = 'u32[]', space=smem, size = 0x4, offset = 0x4, fixed_abs, tag = 'smem constant byte address 0x4 - core index']
  #allocation1 [shape = 'u32[144,128]{1,0:T(1,128)}', space=vmem, size = 0x12000, scoped, tag = 'internal scratch']
  #allocation2 [shape = 'f32[1,1]{1,0:T(1,128)S(1)}', space=vmem, size = 0x200, scoped, tag = 'scoped memory for lstm_net_forward.1']
  %s0 = inlined_call_operand.vmem [shape: f32[8,2,128], index: 0, kind: input, shape index: {}]
  %s1 = inlined_call_operand.hbm [shape: f32[256,512], index: 1, kind: input, shape index: {}]
  %s2 = inlined_call_operand.vmem [shape: f32[1,512], index: 2, kind: input, shape index: {}]
  %s3 = inlined_call_operand.hbm [shape: f32[256,512], index: 3, kind: input, shape index: {}]
  %s4 = inlined_call_operand.vmem [shape: f32[1,512], index: 4, kind: input, shape index: {}]
  %s5 = inlined_call_operand.vmem [shape: f32[1,128], index: 5, kind: input, shape index: {}]
  %s6 = inlined_call_operand.<no memory space> [shape: f32[1,1], index: 6, kind: input, shape index: {}]
  %s7 = inlined_call_operand.vmem [shape: f32[2,1], index: 7, kind: output, shape index: {}]
  %s8 = sld [smem:[#allocation0]]
  $region46: #{lstm_net_forward.1} parent=0
    _
  %s10 = ssub.s32 1, %s8
  %s11 = scalar_select 0, %s10, %s8
  %v12 = vstv %s6
  %13 = vst [vmem:[#allocation2] sm:$0x1] %v12
  $region1: #{lstm_net_forward.1} parent=0
    #allocation3 [shape = 'u8[524288]{0}', space=vmem, size = 0x80000, scoped, tag = 'input window, operand 1, single buffered']
    #allocation4 [shape = 's32[1]{0}', space=sflag, size = 0x4, scoped, tag = 'scoped memory for lstm_net_forward.1']
    #allocation5 [shape = 'u8[524288]{0}', space=vmem, size = 0x80000, scoped, tag = 'input window, operand 3, single buffered']
    #allocation6 [shape = 's32[1]{0}', space=sflag, size = 0x4, scoped, tag = 'scoped memory for lstm_net_forward.1']
    %14 = vsyncpa [#allocation4], 0
    %15 = vsyncpa [#allocation6], 0
    // Predicated region
    $region2: #{lstm_net_forward.1} parent=1 // pred_check
      _
    $region3: #{lstm_net_forward.1} parent=1 // pred_check_branch
      %17 = sbr.rel (0) target = $region5
    $region4: #{lstm_net_forward.1} parent=1 // pred_region
      _
    $region5: #{lstm_net_forward.1} parent=1 // pred_fallthru
      _
    // Predicated region
    $region6: #{lstm_net_forward.1} parent=1 // pred_check
      _
    $region7: #{lstm_net_forward.1} parent=1 // pred_check_branch
      %19 = sbr.rel (0) target = $region9
    $region8: #{lstm_net_forward.1} parent=1 // pred_region
      %s21 = ssub.s32 16384, 16384
      %22 = vsyncadd [#allocation4], %s21
      %s23 = sshll.u32 [#allocation3], 4
      %s24 = int_to_ptr.vmem [resolvable:$true] %s23
      %29 = dma.hbm_to_vmem [thread:$0]  %s1, 16384, %s24, [#allocation4], 512, 512, 32
    $region9: #{lstm_net_forward.1} parent=1 // pred_fallthru
      _
    // Predicated region
    $region10: #{lstm_net_forward.1} parent=1 // pred_check
      _
    $region11: #{lstm_net_forward.1} parent=1 // pred_check_branch
      %31 = sbr.rel (0) target = $region13
    $region12: #{lstm_net_forward.1} parent=1 // pred_region
      _
    $region13: #{lstm_net_forward.1} parent=1 // pred_fallthru
      _
    // Predicated region
    $region14: #{lstm_net_forward.1} parent=1 // pred_check
      _
    $region15: #{lstm_net_forward.1} parent=1 // pred_check_branch
      %33 = sbr.rel (0) target = $region17
    $region16: #{lstm_net_forward.1} parent=1 // pred_region
      %s35 = ssub.s32 16384, 16384
      %36 = vsyncadd [#allocation6], %s35
      %s37 = sshll.u32 [#allocation5], 4
      %s38 = int_to_ptr.vmem [resolvable:$true] %s37
      %43 = dma.hbm_to_vmem [thread:$0]  %s3, 16384, %s38, [#allocation6], 512, 512, 32
    $region17: #{lstm_net_forward.1} parent=1 // pred_fallthru
      _
    // Predicated region
    $region18: #{lstm_net_forward.1} parent=1 // pred_check
      _
    $region19: #{lstm_net_forward.1} parent=1 // pred_check_branch
      %45 = sbr.rel (0) target = $region21
    $region20: #{lstm_net_forward.1} parent=1 // pred_region
      _
    $region21: #{lstm_net_forward.1} parent=1 // pred_fallthru
      _
    // Predicated region
    $region22: #{lstm_net_forward.1} parent=1 // pred_check
      _
    $region23: #{lstm_net_forward.1} parent=1 // pred_check_branch
      %47 = sbr.rel (0) target = $region25
    $region24: #{lstm_net_forward.1} parent=1 // pred_region
      _
    $region25: #{lstm_net_forward.1} parent=1 // pred_fallthru
      _
    // Predicated region
    $region26: #{lstm_net_forward.1} parent=1 // pred_check
      _
    $region27: #{lstm_net_forward.1} parent=1 // pred_check_branch
      %49 = sbr.rel (0) target = $region29
    $region28: #{lstm_net_forward.1} parent=1 // pred_region
      _
    $region29: #{lstm_net_forward.1} parent=1 // pred_fallthru
      _
    // Predicated region
    $region30: #{lstm_net_forward.1} parent=1 // pred_check
      _
    $region31: #{lstm_net_forward.1} parent=1 // pred_check_branch
      %51 = sbr.rel (0) target = $region33
    $region32: #{lstm_net_forward.1} parent=1 // pred_region
      %52 = dma.done [#allocation4], 16384
    $region33: #{lstm_net_forward.1} parent=1 // pred_fallthru
      _
    // Predicated region
    $region34: #{lstm_net_forward.1} parent=1 // pred_check
      _
    $region35: #{lstm_net_forward.1} parent=1 // pred_check_branch
      %54 = sbr.rel (0) target = $region37
    $region36: #{lstm_net_forward.1} parent=1 // pred_region
      %55 = dma.done [#allocation6], 16384
    $region37: #{lstm_net_forward.1} parent=1 // pred_fallthru
      _
    %v56 = vld [vmem:[#allocation3] sm:$0xff]
    %v57 = vld [vmem:[#allocation3 + $0x8] sm:$0xff]
    %v58 = vld [vmem:[#allocation3 + $0x10] sm:$0xff]
    %v59 = vld [vmem:[#allocation3 + $0x18] sm:$0xff]
    %v60 = vld [vmem:[#allocation3 + $0x20] sm:$0xff]
    %v61 = vld [vmem:[#allocation3 + $0x28] sm:$0xff]
    %v62 = vld [vmem:[#allocation3 + $0x30] sm:$0xff]
    %v63 = vld [vmem:[#allocation3 + $0x38] sm:$0xff]
    %v64 = vld [vmem:[#allocation3 + $0x40] sm:$0xff]
    %v65 = vld [vmem:[#allocation3 + $0x48] sm:$0xff]
    %v66 = vld [vmem:[#allocation3 + $0x50] sm:$0xff]
    %v67 = vld [vmem:[#allocation3 + $0x58] sm:$0xff]
    %v68 = vld [vmem:[#allocation3 + $0x60] sm:$0xff]
    %v69 = vld [vmem:[#allocation3 + $0x68] sm:$0xff]
    %v70 = vld [vmem:[#allocation3 + $0x70] sm:$0xff]
    %v71 = vld [vmem:[#allocation3 + $0x78] sm:$0xff]
    %v72 = vld [vmem:[#allocation3 + $0x80] sm:$0xff]
    %v73 = vld [vmem:[#allocation3 + $0x88] sm:$0xff]
    %v74 = vld [vmem:[#allocation3 + $0x90] sm:$0xff]
    %v75 = vld [vmem:[#allocation3 + $0x98] sm:$0xff]
    %v76 = vld [vmem:[#allocation3 + $0xa0] sm:$0xff]
    %v77 = vld [vmem:[#allocation3 + $0xa8] sm:$0xff]
    %v78 = vld [vmem:[#allocation3 + $0xb0] sm:$0xff]
    %v79 = vld [vmem:[#allocation3 + $0xb8] sm:$0xff]
    %v80 = vld [vmem:[#allocation3 + $0xc0] sm:$0xff]
    %v81 = vld [vmem:[#allocation3 + $0xc8] sm:$0xff]
    %v82 = vld [vmem:[#allocation3 + $0xd0] sm:$0xff]
    %v83 = vld [vmem:[#allocation3 + $0xd8] sm:$0xff]
    %v84 = vld [vmem:[#allocation3 + $0xe0] sm:$0xff]
    %v85 = vld [vmem:[#allocation3 + $0xe8] sm:$0xff]
    %v86 = vld [vmem:[#allocation3 + $0xf0] sm:$0xff]
    %v87 = vld [vmem:[#allocation3 + $0xf8] sm:$0xff]
    %v88 = vld [vmem:[#allocation3 + $0x100] sm:$0xff]
    %v89 = vld [vmem:[#allocation3 + $0x108] sm:$0xff]
    %v90 = vld [vmem:[#allocation3 + $0x110] sm:$0xff]
    %v91 = vld [vmem:[#allocation3 + $0x118] sm:$0xff]
    %v92 = vld [vmem:[#allocation3 + $0x120] sm:$0xff]
    %v93 = vld [vmem:[#allocation3 + $0x128] sm:$0xff]
    %v94 = vld [vmem:[#allocation3 + $0x130] sm:$0xff]
    %v95 = vld [vmem:[#allocation3 + $0x138] sm:$0xff]
    %v96 = vld [vmem:[#allocation3 + $0x140] sm:$0xff]
    %v97 = vld [vmem:[#allocation3 + $0x148] sm:$0xff]
    %v98 = vld [vmem:[#allocation3 + $0x150] sm:$0xff]
    %v99 = vld [vmem:[#allocation3 + $0x158] sm:$0xff]
    %v100 = vld [vmem:[#allocation3 + $0x160] sm:$0xff]
    %v101 = vld [vmem:[#allocation3 + $0x168] sm:$0xff]
    %v102 = vld [vmem:[#allocation3 + $0x170] sm:$0xff]
    %v103 = vld [vmem:[#allocation3 + $0x178] sm:$0xff]
    %v104 = vld [vmem:[#allocation3 + $0x180] sm:$0xff]
    %v105 = vld [vmem:[#allocation3 + $0x188] sm:$0xff]
    %v106 = vld [vmem:[#allocation3 + $0x190] sm:$0xff]
    %v107 = vld [vmem:[#allocation3 + $0x198] sm:$0xff]
    %v108 = vld [vmem:[#allocation3 + $0x1a0] sm:$0xff]
    %v109 = vld [vmem:[#allocation3 + $0x1a8] sm:$0xff]
    %v110 = vld [vmem:[#allocation3 + $0x1b0] sm:$0xff]
    %v111 = vld [vmem:[#allocation3 + $0x1b8] sm:$0xff]
    %v112 = vld [vmem:[#allocation3 + $0x1c0] sm:$0xff]
    %v113 = vld [vmem:[#allocation3 + $0x1c8] sm:$0xff]
    %v114 = vld [vmem:[#allocation3 + $0x1d0] sm:$0xff]
    %v115 = vld [vmem:[#allocation3 + $0x1d8] sm:$0xff]
    %v116 = vld [vmem:[#allocation3 + $0x1e0] sm:$0xff]
    %v117 = vld [vmem:[#allocation3 + $0x1e8] sm:$0xff]
    %v118 = vld [vmem:[#allocation3 + $0x1f0] sm:$0xff]
    %v119 = vld [vmem:[#allocation3 + $0x1f8] sm:$0xff]
    %v120 = vld [vmem:[#allocation3 + $0x200] sm:$0xff]
    %v121 = vld [vmem:[#allocation3 + $0x208] sm:$0xff]
    %v122 = vld [vmem:[#allocation3 + $0x210] sm:$0xff]
    %v123 = vld [vmem:[#allocation3 + $0x218] sm:$0xff]
    %v124 = vld [vmem:[#allocation3 + $0x220] sm:$0xff]
    %v125 = vld [vmem:[#allocation3 + $0x228] sm:$0xff]
    %v126 = vld [vmem:[#allocation3 + $0x230] sm:$0xff]
    %v127 = vld [vmem:[#allocation3 + $0x238] sm:$0xff]
    %v128 = vld [vmem:[#allocation3 + $0x240] sm:$0xff]
    %v129 = vld [vmem:[#allocation3 + $0x248] sm:$0xff]
    %v130 = vld [vmem:[#allocation3 + $0x250] sm:$0xff]
    %v131 = vld [vmem:[#allocation3 + $0x258] sm:$0xff]
    %v132 = vld [vmem:[#allocation3 + $0x260] sm:$0xff]
    %v133 = vld [vmem:[#allocation3 + $0x268] sm:$0xff]
    %v134 = vld [vmem:[#allocation3 + $0x270] sm:$0xff]
    %v135 = vld [vmem:[#allocation3 + $0x278] sm:$0xff]
    %v136 = vld [vmem:[#allocation3 + $0x280] sm:$0xff]
    %v137 = vld [vmem:[#allocation3 + $0x288] sm:$0xff]
    %v138 = vld [vmem:[#allocation3 + $0x290] sm:$0xff]
    %v139 = vld [vmem:[#allocation3 + $0x298] sm:$0xff]
    %v140 = vld [vmem:[#allocation3 + $0x2a0] sm:$0xff]
    %v141 = vld [vmem:[#allocation3 + $0x2a8] sm:$0xff]
    %v142 = vld [vmem:[#allocation3 + $0x2b0] sm:$0xff]
    %v143 = vld [vmem:[#allocation3 + $0x2b8] sm:$0xff]
    %v144 = vld [vmem:[#allocation3 + $0x2c0] sm:$0xff]
    %v145 = vld [vmem:[#allocation3 + $0x2c8] sm:$0xff]
    %v146 = vld [vmem:[#allocation3 + $0x2d0] sm:$0xff]
    %v147 = vld [vmem:[#allocation3 + $0x2d8] sm:$0xff]
    %v148 = vld [vmem:[#allocation3 + $0x2e0] sm:$0xff]
    %v149 = vld [vmem:[#allocation3 + $0x2e8] sm:$0xff]
    %v150 = vld [vmem:[#allocation3 + $0x2f0] sm:$0xff]
    %v151 = vld [vmem:[#allocation3 + $0x2f8] sm:$0xff]
    %v152 = vld [vmem:[#allocation3 + $0x300] sm:$0xff]
    %v153 = vld [vmem:[#allocation3 + $0x308] sm:$0xff]
    %v154 = vld [vmem:[#allocation3 + $0x310] sm:$0xff]
    %v155 = vld [vmem:[#allocation3 + $0x318] sm:$0xff]
    %v156 = vld [vmem:[#allocation3 + $0x320] sm:$0xff]
    %v157 = vld [vmem:[#allocation3 + $0x328] sm:$0xff]
    %v158 = vld [vmem:[#allocation3 + $0x330] sm:$0xff]
    %v159 = vld [vmem:[#allocation3 + $0x338] sm:$0xff]
    %v160 = vld [vmem:[#allocation3 + $0x340] sm:$0xff]
    %v161 = vld [vmem:[#allocation3 + $0x348] sm:$0xff]
    %v162 = vld [vmem:[#allocation3 + $0x350] sm:$0xff]
    %v163 = vld [vmem:[#allocation3 + $0x358] sm:$0xff]
    %v164 = vld [vmem:[#allocation3 + $0x360] sm:$0xff]
    %v165 = vld [vmem:[#allocation3 + $0x368] sm:$0xff]
    %v166 = vld [vmem:[#allocation3 + $0x370] sm:$0xff]
    %v167 = vld [vmem:[#allocation3 + $0x378] sm:$0xff]
    %v168 = vld [vmem:[#allocation3 + $0x380] sm:$0xff]
    %v169 = vld [vmem:[#allocation3 + $0x388] sm:$0xff]
    %v170 = vld [vmem:[#allocation3 + $0x390] sm:$0xff]
    %v171 = vld [vmem:[#allocation3 + $0x398] sm:$0xff]
    %v172 = vld [vmem:[#allocation3 + $0x3a0] sm:$0xff]
    %v173 = vld [vmem:[#allocation3 + $0x3a8] sm:$0xff]
    %v174 = vld [vmem:[#allocation3 + $0x3b0] sm:$0xff]
    %v175 = vld [vmem:[#allocation3 + $0x3b8] sm:$0xff]
    %v176 = vld [vmem:[#allocation3 + $0x3c0] sm:$0xff]
    %v177 = vld [vmem:[#allocation3 + $0x3c8] sm:$0xff]
    %v178 = vld [vmem:[#allocation3 + $0x3d0] sm:$0xff]
    %v179 = vld [vmem:[#allocation3 + $0x3d8] sm:$0xff]
    %v180 = vld [vmem:[#allocation3 + $0x3e0] sm:$0xff]
    %v181 = vld [vmem:[#allocation3 + $0x3e8] sm:$0xff]
    %v182 = vld [vmem:[#allocation3 + $0x3f0] sm:$0xff]
    %v183 = vld [vmem:[#allocation3 + $0x3f8] sm:$0xff]
    %v184 = vld [vmem:[#allocation5] sm:$0xff]
    %v185 = vld [vmem:[#allocation5 + $0x8] sm:$0xff]
    %v186 = vld [vmem:[#allocation5 + $0x10] sm:$0xff]
    %v187 = vld [vmem:[#allocation5 + $0x18] sm:$0xff]
    %v188 = vld [vmem:[#allocation5 + $0x20] sm:$0xff]
    %v189 = vld [vmem:[#allocation5 + $0x28] sm:$0xff]
    %v190 = vld [vmem:[#allocation5 + $0x30] sm:$0xff]
    %v191 = vld [vmem:[#allocation5 + $0x38] sm:$0xff]
    %v192 = vld [vmem:[#allocation5 + $0x40] sm:$0xff]
    %v193 = vld [vmem:[#allocation5 + $0x48] sm:$0xff]
    %v194 = vld [vmem:[#allocation5 + $0x50] sm:$0xff]
    %v195 = vld [vmem:[#allocation5 + $0x58] sm:$0xff]
    %v196 = vld [vmem:[#allocation5 + $0x60] sm:$0xff]
    %v197 = vld [vmem:[#allocation5 + $0x68] sm:$0xff]
    %v198 = vld [vmem:[#allocation5 + $0x70] sm:$0xff]
    %v199 = vld [vmem:[#allocation5 + $0x78] sm:$0xff]
    %v200 = vld [vmem:[#allocation5 + $0x80] sm:$0xff]
    %v201 = vld [vmem:[#allocation5 + $0x88] sm:$0xff]
    %v202 = vld [vmem:[#allocation5 + $0x90] sm:$0xff]
    %v203 = vld [vmem:[#allocation5 + $0x98] sm:$0xff]
    %v204 = vld [vmem:[#allocation5 + $0xa0] sm:$0xff]
    %v205 = vld [vmem:[#allocation5 + $0xa8] sm:$0xff]
    %v206 = vld [vmem:[#allocation5 + $0xb0] sm:$0xff]
    %v207 = vld [vmem:[#allocation5 + $0xb8] sm:$0xff]
    %v208 = vld [vmem:[#allocation5 + $0xc0] sm:$0xff]
    %v209 = vld [vmem:[#allocation5 + $0xc8] sm:$0xff]
    %v210 = vld [vmem:[#allocation5 + $0xd0] sm:$0xff]
    %v211 = vld [vmem:[#allocation5 + $0xd8] sm:$0xff]
    %v212 = vld [vmem:[#allocation5 + $0xe0] sm:$0xff]
    %v213 = vld [vmem:[#allocation5 + $0xe8] sm:$0xff]
    %v214 = vld [vmem:[#allocation5 + $0xf0] sm:$0xff]
    %v215 = vld [vmem:[#allocation5 + $0xf8] sm:$0xff]
    %v216 = vld [vmem:[#allocation5 + $0x100] sm:$0xff]
    %v217 = vld [vmem:[#allocation5 + $0x108] sm:$0xff]
    %v218 = vld [vmem:[#allocation5 + $0x110] sm:$0xff]
    %v219 = vld [vmem:[#allocation5 + $0x118] sm:$0xff]
    %v220 = vld [vmem:[#allocation5 + $0x120] sm:$0xff]
    %v221 = vld [vmem:[#allocation5 + $0x128] sm:$0xff]
    %v222 = vld [vmem:[#allocation5 + $0x130] sm:$0xff]
    %v223 = vld [vmem:[#allocation5 + $0x138] sm:$0xff]
    %v224 = vld [vmem:[#allocation5 + $0x140] sm:$0xff]
    %v225 = vld [vmem:[#allocation5 + $0x148] sm:$0xff]
    %v226 = vld [vmem:[#allocation5 + $0x150] sm:$0xff]
    %v227 = vld [vmem:[#allocation5 + $0x158] sm:$0xff]
    %v228 = vld [vmem:[#allocation5 + $0x160] sm:$0xff]
    %v229 = vld [vmem:[#allocation5 + $0x168] sm:$0xff]
    %v230 = vld [vmem:[#allocation5 + $0x170] sm:$0xff]
    %v231 = vld [vmem:[#allocation5 + $0x178] sm:$0xff]
    %v232 = vld [vmem:[#allocation5 + $0x180] sm:$0xff]
    %v233 = vld [vmem:[#allocation5 + $0x188] sm:$0xff]
    %v234 = vld [vmem:[#allocation5 + $0x190] sm:$0xff]
    %v235 = vld [vmem:[#allocation5 + $0x198] sm:$0xff]
    %v236 = vld [vmem:[#allocation5 + $0x1a0] sm:$0xff]
    %v237 = vld [vmem:[#allocation5 + $0x1a8] sm:$0xff]
    %v238 = vld [vmem:[#allocation5 + $0x1b0] sm:$0xff]
    %v239 = vld [vmem:[#allocation5 + $0x1b8] sm:$0xff]
    %v240 = vld [vmem:[#allocation5 + $0x1c0] sm:$0xff]
    %v241 = vld [vmem:[#allocation5 + $0x1c8] sm:$0xff]
    %v242 = vld [vmem:[#allocation5 + $0x1d0] sm:$0xff]
    %v243 = vld [vmem:[#allocation5 + $0x1d8] sm:$0xff]
    %v244 = vld [vmem:[#allocation5 + $0x1e0] sm:$0xff]
    %v245 = vld [vmem:[#allocation5 + $0x1e8] sm:$0xff]
    %v246 = vld [vmem:[#allocation5 + $0x1f0] sm:$0xff]
    %v247 = vld [vmem:[#allocation5 + $0x1f8] sm:$0xff]
    %v248 = vld [vmem:[#allocation5 + $0x200] sm:$0xff]
    %v249 = vld [vmem:[#allocation5 + $0x208] sm:$0xff]
    %v250 = vld [vmem:[#allocation5 + $0x210] sm:$0xff]
    %v251 = vld [vmem:[#allocation5 + $0x218] sm:$0xff]
    %v252 = vld [vmem:[#allocation5 + $0x220] sm:$0xff]
    %v253 = vld [vmem:[#allocation5 + $0x228] sm:$0xff]
    %v254 = vld [vmem:[#allocation5 + $0x230] sm:$0xff]
    %v255 = vld [vmem:[#allocation5 + $0x238] sm:$0xff]
    %v256 = vld [vmem:[#allocation5 + $0x240] sm:$0xff]
    %v257 = vld [vmem:[#allocation5 + $0x248] sm:$0xff]
    %v258 = vld [vmem:[#allocation5 + $0x250] sm:$0xff]
    %v259 = vld [vmem:[#allocation5 + $0x258] sm:$0xff]
    %v260 = vld [vmem:[#allocation5 + $0x260] sm:$0xff]
    %v261 = vld [vmem:[#allocation5 + $0x268] sm:$0xff]
    %v262 = vld [vmem:[#allocation5 + $0x270] sm:$0xff]
    %v263 = vld [vmem:[#allocation5 + $0x278] sm:$0xff]
    %v264 = vld [vmem:[#allocation5 + $0x280] sm:$0xff]
    %v265 = vld [vmem:[#allocation5 + $0x288] sm:$0xff]
    %v266 = vld [vmem:[#allocation5 + $0x290] sm:$0xff]
    %v267 = vld [vmem:[#allocation5 + $0x298] sm:$0xff]
    %v268 = vld [vmem:[#allocation5 + $0x2a0] sm:$0xff]
    %v269 = vld [vmem:[#allocation5 + $0x2a8] sm:$0xff]
    %v270 = vld [vmem:[#allocation5 + $0x2b0] sm:$0xff]
    %v271 = vld [vmem:[#allocation5 + $0x2b8] sm:$0xff]
    %v272 = vld [vmem:[#allocation5 + $0x2c0] sm:$0xff]
    %v273 = vld [vmem:[#allocation5 + $0x2c8] sm:$0xff]
    %v274 = vld [vmem:[#allocation5 + $0x2d0] sm:$0xff]
    %v275 = vld [vmem:[#allocation5 + $0x2d8] sm:$0xff]
    %v276 = vld [vmem:[#allocation5 + $0x2e0] sm:$0xff]
    %v277 = vld [vmem:[#allocation5 + $0x2e8] sm:$0xff]
    %v278 = vld [vmem:[#allocation5 + $0x2f0] sm:$0xff]
    %v279 = vld [vmem:[#allocation5 + $0x2f8] sm:$0xff]
    %v280 = vld [vmem:[#allocation5 + $0x300] sm:$0xff]
    %v281 = vld [vmem:[#allocation5 + $0x308] sm:$0xff]
    %v282 = vld [vmem:[#allocation5 + $0x310] sm:$0xff]
    %v283 = vld [vmem:[#allocation5 + $0x318] sm:$0xff]
    %v284 = vld [vmem:[#allocation5 + $0x320] sm:$0xff]
    %v285 = vld [vmem:[#allocation5 + $0x328] sm:$0xff]
    %v286 = vld [vmem:[#allocation5 + $0x330] sm:$0xff]
    %v287 = vld [vmem:[#allocation5 + $0x338] sm:$0xff]
    %v288 = vld [vmem:[#allocation5 + $0x340] sm:$0xff]
    %v289 = vld [vmem:[#allocation5 + $0x348] sm:$0xff]
    %v290 = vld [vmem:[#allocation5 + $0x350] sm:$0xff]
    %v291 = vld [vmem:[#allocation5 + $0x358] sm:$0xff]
    %v292 = vld [vmem:[#allocation5 + $0x360] sm:$0xff]
    %v293 = vld [vmem:[#allocation5 + $0x368] sm:$0xff]
    %v294 = vld [vmem:[#allocation5 + $0x370] sm:$0xff]
    %v295 = vld [vmem:[#allocation5 + $0x378] sm:$0xff]
    %v296 = vld [vmem:[#allocation5 + $0x380] sm:$0xff]
    %v297 = vld [vmem:[#allocation5 + $0x388] sm:$0xff]
    %v298 = vld [vmem:[#allocation5 + $0x390] sm:$0xff]
    %v299 = vld [vmem:[#allocation5 + $0x398] sm:$0xff]
    %v300 = vld [vmem:[#allocation5 + $0x3a0] sm:$0xff]
    %v301 = vld [vmem:[#allocation5 + $0x3a8] sm:$0xff]
    %v302 = vld [vmem:[#allocation5 + $0x3b0] sm:$0xff]
    %v303 = vld [vmem:[#allocation5 + $0x3b8] sm:$0xff]
    %v304 = vld [vmem:[#allocation5 + $0x3c0] sm:$0xff]
    %v305 = vld [vmem:[#allocation5 + $0x3c8] sm:$0xff]
    %v306 = vld [vmem:[#allocation5 + $0x3d0] sm:$0xff]
    %v307 = vld [vmem:[#allocation5 + $0x3d8] sm:$0xff]
    %v308 = vld [vmem:[#allocation5 + $0x3e0] sm:$0xff]
    %v309 = vld [vmem:[#allocation5 + $0x3e8] sm:$0xff]
    %v310 = vld [vmem:[#allocation5 + $0x3f0] sm:$0xff]
    %v311 = vld [vmem:[#allocation5 + $0x3f8] sm:$0xff]
    %v312 = vld [vmem:[%s2] sm:$0xf]
    %v314 = vlaneseq
    %v315 = vshrl.u32 %v314, 7
    %v316 = vsub.s32 0, %v315
    %v317 = vrot.slane %v312, %v316
    %v318 = vlaneseq
    %v319 = vshrl.u32 %v318, 7
    %v320 = vsub.s32 1, %v319
    %v321 = vrot.slane %v312, %v320
    %v322 = vlaneseq
    %v323 = vshrl.u32 %v322, 7
    %v324 = vsub.s32 2, %v323
    %v325 = vrot.slane %v312, %v324
    %v326 = vlaneseq
    %v327 = vshrl.u32 %v326, 7
    %v328 = vsub.s32 3, %v327
    %v329 = vrot.slane %v312, %v328
    %v334 = vld [vmem:[%s4] sm:$0xf]
    %v336 = vlaneseq
    %v337 = vshrl.u32 %v336, 7
    %v338 = vsub.s32 0, %v337
    %v339 = vrot.slane %v334, %v338
    %v340 = vlaneseq
    %v341 = vshrl.u32 %v340, 7
    %v342 = vsub.s32 1, %v341
    %v343 = vrot.slane %v334, %v342
    %v344 = vlaneseq
    %v345 = vshrl.u32 %v344, 7
    %v346 = vsub.s32 2, %v345
    %v347 = vrot.slane %v334, %v346
    %v348 = vlaneseq
    %v349 = vshrl.u32 %v348, 7
    %v350 = vsub.s32 3, %v349
    %v351 = vrot.slane %v334, %v350
    %v356 = vld [vmem:[%s5] sm:$0x1]
    %v358 = vlaneseq
    %v359 = vshrl.u32 %v358, 7
    %v360 = vsub.s32 0, %v359
    %v361 = vrot.slane %v356, %v360
    %v363 = vld [vmem:[%s0] sm:$0x3]
    %364 = vmatprep.subr.mxu0 %v57
    %365 = vmatpush1.msra.mxu0 %v56
    %366 = vmatprep.subr.mxu0 %v61
    %367 = vmatpush1.msra.mxu0 %v60
    %368 = vmatprep.subr.mxu0 %v65
    %369 = vmatpush1.msra.mxu0 %v64
    %370 = vmatprep.subr.mxu0 %v69
    %371 = vmatpush1.msra.mxu0 %v68
    %372 = vmatprep.subr.mxu0 %v73
    %373 = vmatpush1.msra.mxu0 %v72
    %374 = vmatprep.subr.mxu0 %v77
    %375 = vmatpush1.msra.mxu0 %v76
    %376 = vmatprep.subr.mxu0 %v81
    %377 = vmatpush1.msra.mxu0 %v80
    %378 = vmatprep.subr.mxu0 %v85
    %379 = vmatpush1.msra.mxu0 %v84
    %380 = vmatprep.subr.mxu0 %v89
    %381 = vmatpush1.msra.mxu0 %v88
    %382 = vmatprep.subr.mxu0 %v93
    %383 = vmatpush1.msra.mxu0 %v92
    %384 = vmatprep.subr.mxu0 %v97
    %385 = vmatpush1.msra.mxu0 %v96
    %386 = vmatprep.subr.mxu0 %v101
    %387 = vmatpush1.msra.mxu0 %v100
    %388 = vmatprep.subr.mxu0 %v105
    %389 = vmatpush1.msra.mxu0 %v104
    %390 = vmatprep.subr.mxu0 %v109
    %391 = vmatpush1.msra.mxu0 %v108
    %392 = vmatprep.subr.mxu0 %v113
    %393 = vmatpush1.msra.mxu0 %v112
    %394 = vmatprep.subr.mxu0 %v117
    %395 = vmatpush1.msra.mxu0 %v116
    %396 = vmatprep.subr.mxu0 %v121
    %397 = vmatpush1.msra.mxu0 %v120
    %398 = vmatprep.subr.mxu0 %v125
    %399 = vmatpush1.msra.mxu0 %v124
    %400 = vmatprep.subr.mxu0 %v129
    %401 = vmatpush1.msra.mxu0 %v128
    %402 = vmatprep.subr.mxu0 %v133
    %403 = vmatpush1.msra.mxu0 %v132
    %404 = vmatprep.subr.mxu0 %v137
    %405 = vmatpush1.msra.mxu0 %v136
    %406 = vmatprep.subr.mxu0 %v141
    %407 = vmatpush1.msra.mxu0 %v140
    %408 = vmatprep.subr.mxu0 %v145
    %409 = vmatpush1.msra.mxu0 %v144
    %410 = vmatprep.subr.mxu0 %v149
    %411 = vmatpush1.msra.mxu0 %v148
    %412 = vmatprep.subr.mxu0 %v153
    %413 = vmatpush1.msra.mxu0 %v152
    %414 = vmatprep.subr.mxu0 %v157
    %415 = vmatpush1.msra.mxu0 %v156
    %416 = vmatprep.subr.mxu0 %v161
    %417 = vmatpush1.msra.mxu0 %v160
    %418 = vmatprep.subr.mxu0 %v165
    %419 = vmatpush1.msra.mxu0 %v164
    %420 = vmatprep.subr.mxu0 %v169
    %421 = vmatpush1.msra.mxu0 %v168
    %422 = vmatprep.subr.mxu0 %v173
    %423 = vmatpush1.msra.mxu0 %v172
    %424 = vmatprep.subr.mxu0 %v177
    %425 = vmatpush1.msra.mxu0 %v176
    %426 = vmatprep.subr.mxu0 %v181
    %427 = vmatpush1.msra.mxu0 %v180
    %428 = vmatprep.mubr.f32.mxu0 0.0
    %429 = vmatmul.mubr.f32.gmra.mrb[0].mxu0 %v363
    %v430 = vpop.f32.mrb[0].mxu0
    %v431 = vadd.f32 %v317, %v430
    %v432 = vpop.f32.mrb[0].mxu0
    %v433 = vadd.f32 %v321, %v432
    %434 = vdwg.mxu0
    %435 = vmatprep.subr.mxu0 %v59
    %436 = vmatpush1.msra.mxu0 %v58
    %437 = vmatprep.subr.mxu0 %v63
    %438 = vmatpush1.msra.mxu0 %v62
    %439 = vmatprep.subr.mxu0 %v67
    %440 = vmatpush1.msra.mxu0 %v66
    %441 = vmatprep.subr.mxu0 %v71
    %442 = vmatpush1.msra.mxu0 %v70
    %443 = vmatprep.subr.mxu0 %v75
    %444 = vmatpush1.msra.mxu0 %v74
    %445 = vmatprep.subr.mxu0 %v79
    %446 = vmatpush1.msra.mxu0 %v78
    %447 = vmatprep.subr.mxu0 %v83
    %448 = vmatpush1.msra.mxu0 %v82
    %449 = vmatprep.subr.mxu0 %v87
    %450 = vmatpush1.msra.mxu0 %v86
    %451 = vmatprep.subr.mxu0 %v91
    %452 = vmatpush1.msra.mxu0 %v90
    %453 = vmatprep.subr.mxu0 %v95
    %454 = vmatpush1.msra.mxu0 %v94
    %455 = vmatprep.subr.mxu0 %v99
    %456 = vmatpush1.msra.mxu0 %v98
    %457 = vmatprep.subr.mxu0 %v103
    %458 = vmatpush1.msra.mxu0 %v102
    %459 = vmatprep.subr.mxu0 %v107
    %460 = vmatpush1.msra.mxu0 %v106
    %461 = vmatprep.subr.mxu0 %v111
    %462 = vmatpush1.msra.mxu0 %v110
    %463 = vmatprep.subr.mxu0 %v115
    %464 = vmatpush1.msra.mxu0 %v114
    %465 = vmatprep.subr.mxu0 %v119
    %466 = vmatpush1.msra.mxu0 %v118
    %467 = vmatprep.subr.mxu0 %v123
    %468 = vmatpush1.msra.mxu0 %v122
    %469 = vmatprep.subr.mxu0 %v127
    %470 = vmatpush1.msra.mxu0 %v126
    %471 = vmatprep.subr.mxu0 %v131
    %472 = vmatpush1.msra.mxu0 %v130
    %473 = vmatprep.subr.mxu0 %v135
    %474 = vmatpush1.msra.mxu0 %v134
    %475 = vmatprep.subr.mxu0 %v139
    %476 = vmatpush1.msra.mxu0 %v138
    %477 = vmatprep.subr.mxu0 %v143
    %478 = vmatpush1.msra.mxu0 %v142
    %479 = vmatprep.subr.mxu0 %v147
    %480 = vmatpush1.msra.mxu0 %v146
    %481 = vmatprep.subr.mxu0 %v151
    %482 = vmatpush1.msra.mxu0 %v150
    %483 = vmatprep.subr.mxu0 %v155
    %484 = vmatpush1.msra.mxu0 %v154
    %485 = vmatprep.subr.mxu0 %v159
    %486 = vmatpush1.msra.mxu0 %v158
    %487 = vmatprep.subr.mxu0 %v163
    %488 = vmatpush1.msra.mxu0 %v162
    %489 = vmatprep.subr.mxu0 %v167
    %490 = vmatpush1.msra.mxu0 %v166
    %491 = vmatprep.subr.mxu0 %v171
    %492 = vmatpush1.msra.mxu0 %v170
    %493 = vmatprep.subr.mxu0 %v175
    %494 = vmatpush1.msra.mxu0 %v174
    %495 = vmatprep.subr.mxu0 %v179
    %496 = vmatpush1.msra.mxu0 %v178
    %497 = vmatprep.subr.mxu0 %v183
    %498 = vmatpush1.msra.mxu0 %v182
    %499 = vmatprep.mubr.f32.mxu0 0.0
    %500 = vmatmul.mubr.f32.gmra.mrb[0].mxu0 %v363
    %v501 = vpop.f32.mrb[0].mxu0
    %v502 = vadd.f32 %v325, %v501
    %v503 = vpop.f32.mrb[0].mxu0
    %v504 = vadd.f32 %v329, %v503
    %505 = vdwg.mxu0
    %v506 = vxor.u32 %v431, 2147483648
    %v507 = vmul.f32 %v506, 1.442695
    %v508 = vpow.pop %v507
    %v509 = vadd.f32 %v508, 1.0
    %v510 = vrcp.pop %v509
    %v511 = vmul.f32 1.0, %v510
    %v512 = vxor.u32 %v433, 2147483648
    %v513 = vmul.f32 %v512, 1.442695
    %v514 = vpow.pop %v513
    %v515 = vadd.f32 %v514, 1.0
    %v516 = vrcp.pop %v515
    %v517 = vmul.f32 1.0, %v516
    %v518 = vtanh.pop %v502
    %v519 = vxor.u32 %v504, 2147483648
    %v520 = vmul.f32 %v519, 1.442695
    %v521 = vpow.pop %v520
    %v522 = vadd.f32 %v521, 1.0
    %v523 = vrcp.pop %v522
    %v524 = vmul.f32 1.0, %v523
    %v525 = vmul.f32 %v517, 0.0
    %v526 = vmul.f32 %v511, %v518
    %v527 = vadd.f32 %v525, %v526
    %v528 = vtanh.pop %v527
    %v529 = vmul.f32 %v524, %v528
    %530 = vmatprep.subr.mxu0 %v185
    %531 = vmatpush1.msra.mxu0 %v184
    %532 = vmatprep.subr.mxu0 %v189
    %533 = vmatpush1.msra.mxu0 %v188
    %534 = vmatprep.subr.mxu0 %v193
    %535 = vmatpush1.msra.mxu0 %v192
    %536 = vmatprep.subr.mxu0 %v197
    %537 = vmatpush1.msra.mxu0 %v196
    %538 = vmatprep.subr.mxu0 %v201
    %539 = vmatpush1.msra.mxu0 %v200
    %540 = vmatprep.subr.mxu0 %v205
    %541 = vmatpush1.msra.mxu0 %v204
    %542 = vmatprep.subr.mxu0 %v209
    %543 = vmatpush1.msra.mxu0 %v208
    %544 = vmatprep.subr.mxu0 %v213
    %545 = vmatpush1.msra.mxu0 %v212
    %546 = vmatprep.subr.mxu0 %v217
    %547 = vmatpush1.msra.mxu0 %v216
    %548 = vmatprep.subr.mxu0 %v221
    %549 = vmatpush1.msra.mxu0 %v220
    %550 = vmatprep.subr.mxu0 %v225
    %551 = vmatpush1.msra.mxu0 %v224
    %552 = vmatprep.subr.mxu0 %v229
    %553 = vmatpush1.msra.mxu0 %v228
    %554 = vmatprep.subr.mxu0 %v233
    %555 = vmatpush1.msra.mxu0 %v232
    %556 = vmatprep.subr.mxu0 %v237
    %557 = vmatpush1.msra.mxu0 %v236
    %558 = vmatprep.subr.mxu0 %v241
    %559 = vmatpush1.msra.mxu0 %v240
    %560 = vmatprep.subr.mxu0 %v245
    %561 = vmatpush1.msra.mxu0 %v244
    %562 = vmatprep.subr.mxu0 %v249
    %563 = vmatpush1.msra.mxu0 %v248
    %564 = vmatprep.subr.mxu0 %v253
    %565 = vmatpush1.msra.mxu0 %v252
    %566 = vmatprep.subr.mxu0 %v257
    %567 = vmatpush1.msra.mxu0 %v256
    %568 = vmatprep.subr.mxu0 %v261
    %569 = vmatpush1.msra.mxu0 %v260
    %570 = vmatprep.subr.mxu0 %v265
    %571 = vmatpush1.msra.mxu0 %v264
    %572 = vmatprep.subr.mxu0 %v269
    %573 = vmatpush1.msra.mxu0 %v268
    %574 = vmatprep.subr.mxu0 %v273
    %575 = vmatpush1.msra.mxu0 %v272
    %576 = vmatprep.subr.mxu0 %v277
    %577 = vmatpush1.msra.mxu0 %v276
    %578 = vmatprep.subr.mxu0 %v281
    %579 = vmatpush1.msra.mxu0 %v280
    %580 = vmatprep.subr.mxu0 %v285
    %581 = vmatpush1.msra.mxu0 %v284
    %582 = vmatprep.subr.mxu0 %v289
    %583 = vmatpush1.msra.mxu0 %v288
    %584 = vmatprep.subr.mxu0 %v293
    %585 = vmatpush1.msra.mxu0 %v292
    %586 = vmatprep.subr.mxu0 %v297
    %587 = vmatpush1.msra.mxu0 %v296
    %588 = vmatprep.subr.mxu0 %v301
    %589 = vmatpush1.msra.mxu0 %v300
    %590 = vmatprep.subr.mxu0 %v305
    %591 = vmatpush1.msra.mxu0 %v304
    %592 = vmatprep.subr.mxu0 %v309
    %593 = vmatpush1.msra.mxu0 %v308
    %594 = vmatprep.mubr.f32.mxu0 0.0
    %595 = vmatmul.mubr.f32.gmra.mrb[0].mxu0 %v529
    %v596 = vpop.f32.mrb[0].mxu0
    %v597 = vadd.f32 %v339, %v596
    %v598 = vpop.f32.mrb[0].mxu0
    %v599 = vadd.f32 %v343, %v598
    %600 = vdwg.mxu0
    %601 = vmatprep.subr.mxu0 %v187
    %602 = vmatpush1.msra.mxu0 %v186
    %603 = vmatprep.subr.mxu0 %v191
    %604 = vmatpush1.msra.mxu0 %v190
    %605 = vmatprep.subr.mxu0 %v195
    %606 = vmatpush1.msra.mxu0 %v194
    %607 = vmatprep.subr.mxu0 %v199
    %608 = vmatpush1.msra.mxu0 %v198
    %609 = vmatprep.subr.mxu0 %v203
    %610 = vmatpush1.msra.mxu0 %v202
    %611 = vmatprep.subr.mxu0 %v207
    %612 = vmatpush1.msra.mxu0 %v206
    %613 = vmatprep.subr.mxu0 %v211
    %614 = vmatpush1.msra.mxu0 %v210
    %615 = vmatprep.subr.mxu0 %v215
    %616 = vmatpush1.msra.mxu0 %v214
    %617 = vmatprep.subr.mxu0 %v219
    %618 = vmatpush1.msra.mxu0 %v218
    %619 = vmatprep.subr.mxu0 %v223
    %620 = vmatpush1.msra.mxu0 %v222
    %621 = vmatprep.subr.mxu0 %v227
    %622 = vmatpush1.msra.mxu0 %v226
    %623 = vmatprep.subr.mxu0 %v231
    %624 = vmatpush1.msra.mxu0 %v230
    %625 = vmatprep.subr.mxu0 %v235
    %626 = vmatpush1.msra.mxu0 %v234
    %627 = vmatprep.subr.mxu0 %v239
    %628 = vmatpush1.msra.mxu0 %v238
    %629 = vmatprep.subr.mxu0 %v243
    %630 = vmatpush1.msra.mxu0 %v242
    %631 = vmatprep.subr.mxu0 %v247
    %632 = vmatpush1.msra.mxu0 %v246
    %633 = vmatprep.subr.mxu0 %v251
    %634 = vmatpush1.msra.mxu0 %v250
    %635 = vmatprep.subr.mxu0 %v255
    %636 = vmatpush1.msra.mxu0 %v254
    %637 = vmatprep.subr.mxu0 %v259
    %638 = vmatpush1.msra.mxu0 %v258
    %639 = vmatprep.subr.mxu0 %v263
    %640 = vmatpush1.msra.mxu0 %v262
    %641 = vmatprep.subr.mxu0 %v267
    %642 = vmatpush1.msra.mxu0 %v266
    %643 = vmatprep.subr.mxu0 %v271
    %644 = vmatpush1.msra.mxu0 %v270
    %645 = vmatprep.subr.mxu0 %v275
    %646 = vmatpush1.msra.mxu0 %v274
    %647 = vmatprep.subr.mxu0 %v279
    %648 = vmatpush1.msra.mxu0 %v278
    %649 = vmatprep.subr.mxu0 %v283
    %650 = vmatpush1.msra.mxu0 %v282
    %651 = vmatprep.subr.mxu0 %v287
    %652 = vmatpush1.msra.mxu0 %v286
    %653 = vmatprep.subr.mxu0 %v291
    %654 = vmatpush1.msra.mxu0 %v290
    %655 = vmatprep.subr.mxu0 %v295
    %656 = vmatpush1.msra.mxu0 %v294
    %657 = vmatprep.subr.mxu0 %v299
    %658 = vmatpush1.msra.mxu0 %v298
    %659 = vmatprep.subr.mxu0 %v303
    %660 = vmatpush1.msra.mxu0 %v302
    %661 = vmatprep.subr.mxu0 %v307
    %662 = vmatpush1.msra.mxu0 %v306
    %663 = vmatprep.subr.mxu0 %v311
    %664 = vmatpush1.msra.mxu0 %v310
    %665 = vmatprep.mubr.f32.mxu0 0.0
    %666 = vmatmul.mubr.f32.gmra.mrb[0].mxu0 %v529
    %v667 = vpop.f32.mrb[0].mxu0
    %v668 = vadd.f32 %v347, %v667
    %v669 = vpop.f32.mrb[0].mxu0
    %v670 = vadd.f32 %v351, %v669
    %671 = vdwg.mxu0
    %v672 = vxor.u32 %v597, 2147483648
    %v673 = vmul.f32 %v672, 1.442695
    %v674 = vpow.pop %v673
    %v675 = vadd.f32 %v674, 1.0
    %v676 = vrcp.pop %v675
    %v677 = vmul.f32 1.0, %v676
    %v678 = vxor.u32 %v599, 2147483648
    %v679 = vmul.f32 %v678, 1.442695
    %v680 = vpow.pop %v679
    %v681 = vadd.f32 %v680, 1.0
    %v682 = vrcp.pop %v681
    %v683 = vmul.f32 1.0, %v682
    %v684 = vtanh.pop %v668
    %v685 = vxor.u32 %v670, 2147483648
    %v686 = vmul.f32 %v685, 1.442695
    %v687 = vpow.pop %v686
    %v688 = vadd.f32 %v687, 1.0
    %v689 = vrcp.pop %v688
    %v690 = vmul.f32 1.0, %v689
    %v691 = vmul.f32 %v683, 0.0
    %v692 = vmul.f32 %v677, %v684
    %v693 = vadd.f32 %v691, %v692
    %v694 = vtanh.pop %v693
    %v695 = vmul.f32 %v690, %v694
    %s696 = scalar_lea.vmem %s0, 2
    %v697 = vld [vmem:[%s696] sm:$0x3]
    %698 = vmatprep.subr.mxu0 %v57
    %699 = vmatpush1.msra.mxu0 %v56
    %700 = vmatprep.subr.mxu0 %v61
    %701 = vmatpush1.msra.mxu0 %v60
    %702 = vmatprep.subr.mxu0 %v65
    %703 = vmatpush1.msra.mxu0 %v64
    %704 = vmatprep.subr.mxu0 %v69
    %705 = vmatpush1.msra.mxu0 %v68
    %706 = vmatprep.subr.mxu0 %v73
    %707 = vmatpush1.msra.mxu0 %v72
    %708 = vmatprep.subr.mxu0 %v77
    %709 = vmatpush1.msra.mxu0 %v76
    %710 = vmatprep.subr.mxu0 %v81
    %711 = vmatpush1.msra.mxu0 %v80
    %712 = vmatprep.subr.mxu0 %v85
    %713 = vmatpush1.msra.mxu0 %v84
    %714 = vmatprep.subr.mxu0 %v89
    %715 = vmatpush1.msra.mxu0 %v88
    %716 = vmatprep.subr.mxu0 %v93
    %717 = vmatpush1.msra.mxu0 %v92
    %718 = vmatprep.subr.mxu0 %v97
    %719 = vmatpush1.msra.mxu0 %v96
    %720 = vmatprep.subr.mxu0 %v101
    %721 = vmatpush1.msra.mxu0 %v100
    %722 = vmatprep.subr.mxu0 %v105
    %723 = vmatpush1.msra.mxu0 %v104
    %724 = vmatprep.subr.mxu0 %v109
    %725 = vmatpush1.msra.mxu0 %v108
    %726 = vmatprep.subr.mxu0 %v113
    %727 = vmatpush1.msra.mxu0 %v112
    %728 = vmatprep.subr.mxu0 %v117
    %729 = vmatpush1.msra.mxu0 %v116
    %730 = vmatprep.subr.mxu0 %v121
    %731 = vmatpush1.msra.mxu0 %v120
    %732 = vmatprep.subr.mxu0 %v125
    %733 = vmatpush1.msra.mxu0 %v124
    %734 = vmatprep.subr.mxu0 %v129
    %735 = vmatpush1.msra.mxu0 %v128
    %736 = vmatprep.subr.mxu0 %v133
    %737 = vmatpush1.msra.mxu0 %v132
    %738 = vmatprep.subr.mxu0 %v137
    %739 = vmatpush1.msra.mxu0 %v136
    %740 = vmatprep.subr.mxu0 %v141
    %741 = vmatpush1.msra.mxu0 %v140
    %742 = vmatprep.subr.mxu0 %v145
    %743 = vmatpush1.msra.mxu0 %v144
    %744 = vmatprep.subr.mxu0 %v149
    %745 = vmatpush1.msra.mxu0 %v148
    %746 = vmatprep.subr.mxu0 %v153
    %747 = vmatpush1.msra.mxu0 %v152
    %748 = vmatprep.subr.mxu0 %v157
    %749 = vmatpush1.msra.mxu0 %v156
    %750 = vmatprep.subr.mxu0 %v161
    %751 = vmatpush1.msra.mxu0 %v160
    %752 = vmatprep.subr.mxu0 %v165
    %753 = vmatpush1.msra.mxu0 %v164
    %754 = vmatprep.subr.mxu0 %v169
    %755 = vmatpush1.msra.mxu0 %v168
    %756 = vmatprep.subr.mxu0 %v173
    %757 = vmatpush1.msra.mxu0 %v172
    %758 = vmatprep.subr.mxu0 %v177
    %759 = vmatpush1.msra.mxu0 %v176
    %760 = vmatprep.subr.mxu0 %v181
    %761 = vmatpush1.msra.mxu0 %v180
    %762 = vmatprep.mubr.f32.mxu0 %v529
    %763 = vmatmul.mubr.f32.gmra.mrb[0].mxu0 %v697
    %v764 = vpop.f32.mrb[0].mxu0
    %v765 = vadd.f32 %v317, %v764
    %v766 = vpop.f32.mrb[0].mxu0
    %v767 = vadd.f32 %v321, %v766
    %768 = vdwg.mxu0
    %769 = vmatprep.subr.mxu0 %v59
    %770 = vmatpush1.msra.mxu0 %v58
    %771 = vmatprep.subr.mxu0 %v63
    %772 = vmatpush1.msra.mxu0 %v62
    %773 = vmatprep.subr.mxu0 %v67
    %774 = vmatpush1.msra.mxu0 %v66
    %775 = vmatprep.subr.mxu0 %v71
    %776 = vmatpush1.msra.mxu0 %v70
    %777 = vmatprep.subr.mxu0 %v75
    %778 = vmatpush1.msra.mxu0 %v74
    %779 = vmatprep.subr.mxu0 %v79
    %780 = vmatpush1.msra.mxu0 %v78
    %781 = vmatprep.subr.mxu0 %v83
    %782 = vmatpush1.msra.mxu0 %v82
    %783 = vmatprep.subr.mxu0 %v87
    %784 = vmatpush1.msra.mxu0 %v86
    %785 = vmatprep.subr.mxu0 %v91
    %786 = vmatpush1.msra.mxu0 %v90
    %787 = vmatprep.subr.mxu0 %v95
    %788 = vmatpush1.msra.mxu0 %v94
    %789 = vmatprep.subr.mxu0 %v99
    %790 = vmatpush1.msra.mxu0 %v98
    %791 = vmatprep.subr.mxu0 %v103
    %792 = vmatpush1.msra.mxu0 %v102
    %793 = vmatprep.subr.mxu0 %v107
    %794 = vmatpush1.msra.mxu0 %v106
    %795 = vmatprep.subr.mxu0 %v111
    %796 = vmatpush1.msra.mxu0 %v110
    %797 = vmatprep.subr.mxu0 %v115
    %798 = vmatpush1.msra.mxu0 %v114
    %799 = vmatprep.subr.mxu0 %v119
    %800 = vmatpush1.msra.mxu0 %v118
    %801 = vmatprep.subr.mxu0 %v123
    %802 = vmatpush1.msra.mxu0 %v122
    %803 = vmatprep.subr.mxu0 %v127
    %804 = vmatpush1.msra.mxu0 %v126
    %805 = vmatprep.subr.mxu0 %v131
    %806 = vmatpush1.msra.mxu0 %v130
    %807 = vmatprep.subr.mxu0 %v135
    %808 = vmatpush1.msra.mxu0 %v134
    %809 = vmatprep.subr.mxu0 %v139
    %810 = vmatpush1.msra.mxu0 %v138
    %811 = vmatprep.subr.mxu0 %v143
    %812 = vmatpush1.msra.mxu0 %v142
    %813 = vmatprep.subr.mxu0 %v147
    %814 = vmatpush1.msra.mxu0 %v146
    %815 = vmatprep.subr.mxu0 %v151
    %816 = vmatpush1.msra.mxu0 %v150
    %817 = vmatprep.subr.mxu0 %v155
    %818 = vmatpush1.msra.mxu0 %v154
    %819 = vmatprep.subr.mxu0 %v159
    %820 = vmatpush1.msra.mxu0 %v158
    %821 = vmatprep.subr.mxu0 %v163
    %822 = vmatpush1.msra.mxu0 %v162
    %823 = vmatprep.subr.mxu0 %v167
    %824 = vmatpush1.msra.mxu0 %v166
    %825 = vmatprep.subr.mxu0 %v171
    %826 = vmatpush1.msra.mxu0 %v170
    %827 = vmatprep.subr.mxu0 %v175
    %828 = vmatpush1.msra.mxu0 %v174
    %829 = vmatprep.subr.mxu0 %v179
    %830 = vmatpush1.msra.mxu0 %v178
    %831 = vmatprep.subr.mxu0 %v183
    %832 = vmatpush1.msra.mxu0 %v182
    %833 = vmatprep.mubr.f32.mxu0 %v529
    %834 = vmatmul.mubr.f32.gmra.mrb[0].mxu0 %v697
    %v835 = vpop.f32.mrb[0].mxu0
    %v836 = vadd.f32 %v325, %v835
    %v837 = vpop.f32.mrb[0].mxu0
    %v838 = vadd.f32 %v329, %v837
    %839 = vdwg.mxu0
    %v840 = vxor.u32 %v765, 2147483648
    %v841 = vmul.f32 %v840, 1.442695
    %v842 = vpow.pop %v841
    %v843 = vadd.f32 %v842, 1.0
    %v844 = vrcp.pop %v843
    %v845 = vmul.f32 1.0, %v844
    %v846 = vxor.u32 %v767, 2147483648
    %v847 = vmul.f32 %v846, 1.442695
    %v848 = vpow.pop %v847
    %v849 = vadd.f32 %v848, 1.0
    %v850 = vrcp.pop %v849
    %v851 = vmul.f32 1.0, %v850
    %v852 = vtanh.pop %v836
    %v853 = vxor.u32 %v838, 2147483648
    %v854 = vmul.f32 %v853, 1.442695
    %v855 = vpow.pop %v854
    %v856 = vadd.f32 %v855, 1.0
    %v857 = vrcp.pop %v856
    %v858 = vmul.f32 1.0, %v857
    %v859 = vmul.f32 %v851, %v527
    %v860 = vmul.f32 %v845, %v852
    %v861 = vadd.f32 %v859, %v860
    %v862 = vtanh.pop %v861
    %v863 = vmul.f32 %v858, %v862
    %864 = vmatprep.subr.mxu0 %v185
    %865 = vmatpush1.msra.mxu0 %v184
    %866 = vmatprep.subr.mxu0 %v189
    %867 = vmatpush1.msra.mxu0 %v188
    %868 = vmatprep.subr.mxu0 %v193
    %869 = vmatpush1.msra.mxu0 %v192
    %870 = vmatprep.subr.mxu0 %v197
    %871 = vmatpush1.msra.mxu0 %v196
    %872 = vmatprep.subr.mxu0 %v201
    %873 = vmatpush1.msra.mxu0 %v200
    %874 = vmatprep.subr.mxu0 %v205
    %875 = vmatpush1.msra.mxu0 %v204
    %876 = vmatprep.subr.mxu0 %v209
    %877 = vmatpush1.msra.mxu0 %v208
    %878 = vmatprep.subr.mxu0 %v213
    %879 = vmatpush1.msra.mxu0 %v212
    %880 = vmatprep.subr.mxu0 %v217
    %881 = vmatpush1.msra.mxu0 %v216
    %882 = vmatprep.subr.mxu0 %v221
    %883 = vmatpush1.msra.mxu0 %v220
    %884 = vmatprep.subr.mxu0 %v225
    %885 = vmatpush1.msra.mxu0 %v224
    %886 = vmatprep.subr.mxu0 %v229
    %887 = vmatpush1.msra.mxu0 %v228
    %888 = vmatprep.subr.mxu0 %v233
    %889 = vmatpush1.msra.mxu0 %v232
    %890 = vmatprep.subr.mxu0 %v237
    %891 = vmatpush1.msra.mxu0 %v236
    %892 = vmatprep.subr.mxu0 %v241
    %893 = vmatpush1.msra.mxu0 %v240
    %894 = vmatprep.subr.mxu0 %v245
    %895 = vmatpush1.msra.mxu0 %v244
    %896 = vmatprep.subr.mxu0 %v249
    %897 = vmatpush1.msra.mxu0 %v248
    %898 = vmatprep.subr.mxu0 %v253
    %899 = vmatpush1.msra.mxu0 %v252
    %900 = vmatprep.subr.mxu0 %v257
    %901 = vmatpush1.msra.mxu0 %v256
    %902 = vmatprep.subr.mxu0 %v261
    %903 = vmatpush1.msra.mxu0 %v260
    %904 = vmatprep.subr.mxu0 %v265
    %905 = vmatpush1.msra.mxu0 %v264
    %906 = vmatprep.subr.mxu0 %v269
    %907 = vmatpush1.msra.mxu0 %v268
    %908 = vmatprep.subr.mxu0 %v273
    %909 = vmatpush1.msra.mxu0 %v272
    %910 = vmatprep.subr.mxu0 %v277
    %911 = vmatpush1.msra.mxu0 %v276
    %912 = vmatprep.subr.mxu0 %v281
    %913 = vmatpush1.msra.mxu0 %v280
    %914 = vmatprep.subr.mxu0 %v285
    %915 = vmatpush1.msra.mxu0 %v284
    %916 = vmatprep.subr.mxu0 %v289
    %917 = vmatpush1.msra.mxu0 %v288
    %918 = vmatprep.subr.mxu0 %v293
    %919 = vmatpush1.msra.mxu0 %v292
    %920 = vmatprep.subr.mxu0 %v297
    %921 = vmatpush1.msra.mxu0 %v296
    %922 = vmatprep.subr.mxu0 %v301
    %923 = vmatpush1.msra.mxu0 %v300
    %924 = vmatprep.subr.mxu0 %v305
    %925 = vmatpush1.msra.mxu0 %v304
    %926 = vmatprep.subr.mxu0 %v309
    %927 = vmatpush1.msra.mxu0 %v308
    %928 = vmatprep.mubr.f32.mxu0 %v695
    %929 = vmatmul.mubr.f32.gmra.mrb[0].mxu0 %v863
    %v930 = vpop.f32.mrb[0].mxu0
    %v931 = vadd.f32 %v339, %v930
    %v932 = vpop.f32.mrb[0].mxu0
    %v933 = vadd.f32 %v343, %v932
    %934 = vdwg.mxu0
    %935 = vmatprep.subr.mxu0 %v187
    %936 = vmatpush1.msra.mxu0 %v186
    %937 = vmatprep.subr.mxu0 %v191
    %938 = vmatpush1.msra.mxu0 %v190
    %939 = vmatprep.subr.mxu0 %v195
    %940 = vmatpush1.msra.mxu0 %v194
    %941 = vmatprep.subr.mxu0 %v199
    %942 = vmatpush1.msra.mxu0 %v198
    %943 = vmatprep.subr.mxu0 %v203
    %944 = vmatpush1.msra.mxu0 %v202
    %945 = vmatprep.subr.mxu0 %v207
    %946 = vmatpush1.msra.mxu0 %v206
    %947 = vmatprep.subr.mxu0 %v211
    %948 = vmatpush1.msra.mxu0 %v210
    %949 = vmatprep.subr.mxu0 %v215
    %950 = vmatpush1.msra.mxu0 %v214
    %951 = vmatprep.subr.mxu0 %v219
    %952 = vmatpush1.msra.mxu0 %v218
    %953 = vmatprep.subr.mxu0 %v223
    %954 = vmatpush1.msra.mxu0 %v222
    %955 = vmatprep.subr.mxu0 %v227
    %956 = vmatpush1.msra.mxu0 %v226
    %957 = vmatprep.subr.mxu0 %v231
    %958 = vmatpush1.msra.mxu0 %v230
    %959 = vmatprep.subr.mxu0 %v235
    %960 = vmatpush1.msra.mxu0 %v234
    %961 = vmatprep.subr.mxu0 %v239
    %962 = vmatpush1.msra.mxu0 %v238
    %963 = vmatprep.subr.mxu0 %v243
    %964 = vmatpush1.msra.mxu0 %v242
    %965 = vmatprep.subr.mxu0 %v247
    %966 = vmatpush1.msra.mxu0 %v246
    %967 = vmatprep.subr.mxu0 %v251
    %968 = vmatpush1.msra.mxu0 %v250
    %969 = vmatprep.subr.mxu0 %v255
    %970 = vmatpush1.msra.mxu0 %v254
    %971 = vmatprep.subr.mxu0 %v259
    %972 = vmatpush1.msra.mxu0 %v258
    %973 = vmatprep.subr.mxu0 %v263
    %974 = vmatpush1.msra.mxu0 %v262
    %975 = vmatprep.subr.mxu0 %v267
    %976 = vmatpush1.msra.mxu0 %v266
    %977 = vmatprep.subr.mxu0 %v271
    %978 = vmatpush1.msra.mxu0 %v270
    %979 = vmatprep.subr.mxu0 %v275
    %980 = vmatpush1.msra.mxu0 %v274
    %981 = vmatprep.subr.mxu0 %v279
    %982 = vmatpush1.msra.mxu0 %v278
    %983 = vmatprep.subr.mxu0 %v283
    %984 = vmatpush1.msra.mxu0 %v282
    %985 = vmatprep.subr.mxu0 %v287
    %986 = vmatpush1.msra.mxu0 %v286
    %987 = vmatprep.subr.mxu0 %v291
    %988 = vmatpush1.msra.mxu0 %v290
    %989 = vmatprep.subr.mxu0 %v295
    %990 = vmatpush1.msra.mxu0 %v294
    %991 = vmatprep.subr.mxu0 %v299
    %992 = vmatpush1.msra.mxu0 %v298
    %993 = vmatprep.subr.mxu0 %v303
    %994 = vmatpush1.msra.mxu0 %v302
    %995 = vmatprep.subr.mxu0 %v307
    %996 = vmatpush1.msra.mxu0 %v306
    %997 = vmatprep.subr.mxu0 %v311
    %998 = vmatpush1.msra.mxu0 %v310
    %999 = vmatprep.mubr.f32.mxu0 %v695
    %1000 = vmatmul.mubr.f32.gmra.mrb[0].mxu0 %v863
    %v1001 = vpop.f32.mrb[0].mxu0
    %v1002 = vadd.f32 %v347, %v1001
    %v1003 = vpop.f32.mrb[0].mxu0
    %v1004 = vadd.f32 %v351, %v1003
    %1005 = vdwg.mxu0
    %v1006 = vxor.u32 %v931, 2147483648
    %v1007 = vmul.f32 %v1006, 1.442695
    %v1008 = vpow.pop %v1007
    %v1009 = vadd.f32 %v1008, 1.0
    %v1010 = vrcp.pop %v1009
    %v1011 = vmul.f32 1.0, %v1010
    %v1012 = vxor.u32 %v933, 2147483648
    %v1013 = vmul.f32 %v1012, 1.442695
    %v1014 = vpow.pop %v1013
    %v1015 = vadd.f32 %v1014, 1.0
    %v1016 = vrcp.pop %v1015
    %v1017 = vmul.f32 1.0, %v1016
    %v1018 = vtanh.pop %v1002
    %v1019 = vxor.u32 %v1004, 2147483648
    %v1020 = vmul.f32 %v1019, 1.442695
    %v1021 = vpow.pop %v1020
    %v1022 = vadd.f32 %v1021, 1.0
    %v1023 = vrcp.pop %v1022
    %v1024 = vmul.f32 1.0, %v1023
    %v1025 = vmul.f32 %v1017, %v693
    %v1026 = vmul.f32 %v1011, %v1018
    %v1027 = vadd.f32 %v1025, %v1026
    %v1028 = vtanh.pop %v1027
    %v1029 = vmul.f32 %v1024, %v1028
    %s1030 = scalar_lea.vmem %s0, 4
    %v1031 = vld [vmem:[%s1030] sm:$0x3]
    %1032 = vmatprep.subr.mxu0 %v57
    %1033 = vmatpush1.msra.mxu0 %v56
    %1034 = vmatprep.subr.mxu0 %v61
    %1035 = vmatpush1.msra.mxu0 %v60
    %1036 = vmatprep.subr.mxu0 %v65
    %1037 = vmatpush1.msra.mxu0 %v64
    %1038 = vmatprep.subr.mxu0 %v69
    %1039 = vmatpush1.msra.mxu0 %v68
    %1040 = vmatprep.subr.mxu0 %v73
    %1041 = vmatpush1.msra.mxu0 %v72
    %1042 = vmatprep.subr.mxu0 %v77
    %1043 = vmatpush1.msra.mxu0 %v76
    %1044 = vmatprep.subr.mxu0 %v81
    %1045 = vmatpush1.msra.mxu0 %v80
    %1046 = vmatprep.subr.mxu0 %v85
    %1047 = vmatpush1.msra.mxu0 %v84
    %1048 = vmatprep.subr.mxu0 %v89
    %1049 = vmatpush1.msra.mxu0 %v88
    %1050 = vmatprep.subr.mxu0 %v93
    %1051 = vmatpush1.msra.mxu0 %v92
    %1052 = vmatprep.subr.mxu0 %v97
    %1053 = vmatpush1.msra.mxu0 %v96
    %1054 = vmatprep.subr.mxu0 %v101
    %1055 = vmatpush1.msra.mxu0 %v100
    %1056 = vmatprep.subr.mxu0 %v105
    %1057 = vmatpush1.msra.mxu0 %v104
    %1058 = vmatprep.subr.mxu0 %v109
    %1059 = vmatpush1.msra.mxu0 %v108
    %1060 = vmatprep.subr.mxu0 %v113
    %1061 = vmatpush1.msra.mxu0 %v112
    %1062 = vmatprep.subr.mxu0 %v117
    %1063 = vmatpush1.msra.mxu0 %v116
    %1064 = vmatprep.subr.mxu0 %v121
    %1065 = vmatpush1.msra.mxu0 %v120
    %1066 = vmatprep.subr.mxu0 %v125
    %1067 = vmatpush1.msra.mxu0 %v124
    %1068 = vmatprep.subr.mxu0 %v129
    %1069 = vmatpush1.msra.mxu0 %v128
    %1070 = vmatprep.subr.mxu0 %v133
    %1071 = vmatpush1.msra.mxu0 %v132
    %1072 = vmatprep.subr.mxu0 %v137
    %1073 = vmatpush1.msra.mxu0 %v136
    %1074 = vmatprep.subr.mxu0 %v141
    %1075 = vmatpush1.msra.mxu0 %v140
    %1076 = vmatprep.subr.mxu0 %v145
    %1077 = vmatpush1.msra.mxu0 %v144
    %1078 = vmatprep.subr.mxu0 %v149
    %1079 = vmatpush1.msra.mxu0 %v148
    %1080 = vmatprep.subr.mxu0 %v153
    %1081 = vmatpush1.msra.mxu0 %v152
    %1082 = vmatprep.subr.mxu0 %v157
    %1083 = vmatpush1.msra.mxu0 %v156
    %1084 = vmatprep.subr.mxu0 %v161
    %1085 = vmatpush1.msra.mxu0 %v160
    %1086 = vmatprep.subr.mxu0 %v165
    %1087 = vmatpush1.msra.mxu0 %v164
    %1088 = vmatprep.subr.mxu0 %v169
    %1089 = vmatpush1.msra.mxu0 %v168
    %1090 = vmatprep.subr.mxu0 %v173
    %1091 = vmatpush1.msra.mxu0 %v172
    %1092 = vmatprep.subr.mxu0 %v177
    %1093 = vmatpush1.msra.mxu0 %v176
    %1094 = vmatprep.subr.mxu0 %v181
    %1095 = vmatpush1.msra.mxu0 %v180
    %1096 = vmatprep.mubr.f32.mxu0 %v863
    %1097 = vmatmul.mubr.f32.gmra.mrb[0].mxu0 %v1031
    %v1098 = vpop.f32.mrb[0].mxu0
    %v1099 = vadd.f32 %v317, %v1098
    %v1100 = vpop.f32.mrb[0].mxu0
    %v1101 = vadd.f32 %v321, %v1100
    %1102 = vdwg.mxu0
    %1103 = vmatprep.subr.mxu0 %v59
    %1104 = vmatpush1.msra.mxu0 %v58
    %1105 = vmatprep.subr.mxu0 %v63
    %1106 = vmatpush1.msra.mxu0 %v62
    %1107 = vmatprep.subr.mxu0 %v67
    %1108 = vmatpush1.msra.mxu0 %v66
    %1109 = vmatprep.subr.mxu0 %v71
    %1110 = vmatpush1.msra.mxu0 %v70
    %1111 = vmatprep.subr.mxu0 %v75
    %1112 = vmatpush1.msra.mxu0 %v74
    %1113 = vmatprep.subr.mxu0 %v79
    %1114 = vmatpush1.msra.mxu0 %v78
    %1115 = vmatprep.subr.mxu0 %v83
    %1116 = vmatpush1.msra.mxu0 %v82
    %1117 = vmatprep.subr.mxu0 %v87
    %1118 = vmatpush1.msra.mxu0 %v86
    %1119 = vmatprep.subr.mxu0 %v91
    %1120 = vmatpush1.msra.mxu0 %v90
    %1121 = vmatprep.subr.mxu0 %v95
    %1122 = vmatpush1.msra.mxu0 %v94
    %1123 = vmatprep.subr.mxu0 %v99
    %1124 = vmatpush1.msra.mxu0 %v98
    %1125 = vmatprep.subr.mxu0 %v103
    %1126 = vmatpush1.msra.mxu0 %v102
    %1127 = vmatprep.subr.mxu0 %v107
    %1128 = vmatpush1.msra.mxu0 %v106
    %1129 = vmatprep.subr.mxu0 %v111
    %1130 = vmatpush1.msra.mxu0 %v110
    %1131 = vmatprep.subr.mxu0 %v115
    %1132 = vmatpush1.msra.mxu0 %v114
    %1133 = vmatprep.subr.mxu0 %v119
    %1134 = vmatpush1.msra.mxu0 %v118
    %1135 = vmatprep.subr.mxu0 %v123
    %1136 = vmatpush1.msra.mxu0 %v122
    %1137 = vmatprep.subr.mxu0 %v127
    %1138 = vmatpush1.msra.mxu0 %v126
    %1139 = vmatprep.subr.mxu0 %v131
    %1140 = vmatpush1.msra.mxu0 %v130
    %1141 = vmatprep.subr.mxu0 %v135
    %1142 = vmatpush1.msra.mxu0 %v134
    %1143 = vmatprep.subr.mxu0 %v139
    %1144 = vmatpush1.msra.mxu0 %v138
    %1145 = vmatprep.subr.mxu0 %v143
    %1146 = vmatpush1.msra.mxu0 %v142
    %1147 = vmatprep.subr.mxu0 %v147
    %1148 = vmatpush1.msra.mxu0 %v146
    %1149 = vmatprep.subr.mxu0 %v151
    %1150 = vmatpush1.msra.mxu0 %v150
    %1151 = vmatprep.subr.mxu0 %v155
    %1152 = vmatpush1.msra.mxu0 %v154
    %1153 = vmatprep.subr.mxu0 %v159
    %1154 = vmatpush1.msra.mxu0 %v158
    %1155 = vmatprep.subr.mxu0 %v163
    %1156 = vmatpush1.msra.mxu0 %v162
    %1157 = vmatprep.subr.mxu0 %v167
    %1158 = vmatpush1.msra.mxu0 %v166
    %1159 = vmatprep.subr.mxu0 %v171
    %1160 = vmatpush1.msra.mxu0 %v170
    %1161 = vmatprep.subr.mxu0 %v175
    %1162 = vmatpush1.msra.mxu0 %v174
    %1163 = vmatprep.subr.mxu0 %v179
    %1164 = vmatpush1.msra.mxu0 %v178
    %1165 = vmatprep.subr.mxu0 %v183
    %1166 = vmatpush1.msra.mxu0 %v182
    %1167 = vmatprep.mubr.f32.mxu0 %v863
    %1168 = vmatmul.mubr.f32.gmra.mrb[0].mxu0 %v1031
    %v1169 = vpop.f32.mrb[0].mxu0
    %v1170 = vadd.f32 %v325, %v1169
    %v1171 = vpop.f32.mrb[0].mxu0
    %v1172 = vadd.f32 %v329, %v1171
    %1173 = vdwg.mxu0
    %v1174 = vxor.u32 %v1099, 2147483648
    %v1175 = vmul.f32 %v1174, 1.442695
    %v1176 = vpow.pop %v1175
    %v1177 = vadd.f32 %v1176, 1.0
    %v1178 = vrcp.pop %v1177
    %v1179 = vmul.f32 1.0, %v1178
    %v1180 = vxor.u32 %v1101, 2147483648
    %v1181 = vmul.f32 %v1180, 1.442695
    %v1182 = vpow.pop %v1181
    %v1183 = vadd.f32 %v1182, 1.0
    %v1184 = vrcp.pop %v1183
    %v1185 = vmul.f32 1.0, %v1184
    %v1186 = vtanh.pop %v1170
    %v1187 = vxor.u32 %v1172, 2147483648
    %v1188 = vmul.f32 %v1187, 1.442695
    %v1189 = vpow.pop %v1188
    %v1190 = vadd.f32 %v1189, 1.0
    %v1191 = vrcp.pop %v1190
    %v1192 = vmul.f32 1.0, %v1191
    %v1193 = vmul.f32 %v1185, %v861
    %v1194 = vmul.f32 %v1179, %v1186
    %v1195 = vadd.f32 %v1193, %v1194
    %v1196 = vtanh.pop %v1195
    %v1197 = vmul.f32 %v1192, %v1196
    %1198 = vmatprep.subr.mxu0 %v185
    %1199 = vmatpush1.msra.mxu0 %v184
    %1200 = vmatprep.subr.mxu0 %v189
    %1201 = vmatpush1.msra.mxu0 %v188
    %1202 = vmatprep.subr.mxu0 %v193
    %1203 = vmatpush1.msra.mxu0 %v192
    %1204 = vmatprep.subr.mxu0 %v197
    %1205 = vmatpush1.msra.mxu0 %v196
    %1206 = vmatprep.subr.mxu0 %v201
    %1207 = vmatpush1.msra.mxu0 %v200
    %1208 = vmatprep.subr.mxu0 %v205
    %1209 = vmatpush1.msra.mxu0 %v204
    %1210 = vmatprep.subr.mxu0 %v209
    %1211 = vmatpush1.msra.mxu0 %v208
    %1212 = vmatprep.subr.mxu0 %v213
    %1213 = vmatpush1.msra.mxu0 %v212
    %1214 = vmatprep.subr.mxu0 %v217
    %1215 = vmatpush1.msra.mxu0 %v216
    %1216 = vmatprep.subr.mxu0 %v221
    %1217 = vmatpush1.msra.mxu0 %v220
    %1218 = vmatprep.subr.mxu0 %v225
    %1219 = vmatpush1.msra.mxu0 %v224
    %1220 = vmatprep.subr.mxu0 %v229
    %1221 = vmatpush1.msra.mxu0 %v228
    %1222 = vmatprep.subr.mxu0 %v233
    %1223 = vmatpush1.msra.mxu0 %v232
    %1224 = vmatprep.subr.mxu0 %v237
    %1225 = vmatpush1.msra.mxu0 %v236
    %1226 = vmatprep.subr.mxu0 %v241
    %1227 = vmatpush1.msra.mxu0 %v240
    %1228 = vmatprep.subr.mxu0 %v245
    %1229 = vmatpush1.msra.mxu0 %v244
    %1230 = vmatprep.subr.mxu0 %v249
    %1231 = vmatpush1.msra.mxu0 %v248
    %1232 = vmatprep.subr.mxu0 %v253
    %1233 = vmatpush1.msra.mxu0 %v252
    %1234 = vmatprep.subr.mxu0 %v257
    %1235 = vmatpush1.msra.mxu0 %v256
    %1236 = vmatprep.subr.mxu0 %v261
    %1237 = vmatpush1.msra.mxu0 %v260
    %1238 = vmatprep.subr.mxu0 %v265
    %1239 = vmatpush1.msra.mxu0 %v264
    %1240 = vmatprep.subr.mxu0 %v269
    %1241 = vmatpush1.msra.mxu0 %v268
    %1242 = vmatprep.subr.mxu0 %v273
    %1243 = vmatpush1.msra.mxu0 %v272
    %1244 = vmatprep.subr.mxu0 %v277
    %1245 = vmatpush1.msra.mxu0 %v276
    %1246 = vmatprep.subr.mxu0 %v281
    %1247 = vmatpush1.msra.mxu0 %v280
    %1248 = vmatprep.subr.mxu0 %v285
    %1249 = vmatpush1.msra.mxu0 %v284
    %1250 = vmatprep.subr.mxu0 %v289
    %1251 = vmatpush1.msra.mxu0 %v288
    %1252 = vmatprep.subr.mxu0 %v293
    %1253 = vmatpush1.msra.mxu0 %v292
    %1254 = vmatprep.subr.mxu0 %v297
    %1255 = vmatpush1.msra.mxu0 %v296
    %1256 = vmatprep.subr.mxu0 %v301
    %1257 = vmatpush1.msra.mxu0 %v300
    %1258 = vmatprep.subr.mxu0 %v305
    %1259 = vmatpush1.msra.mxu0 %v304
    %1260 = vmatprep.subr.mxu0 %v309
    %1261 = vmatpush1.msra.mxu0 %v308
    %1262 = vmatprep.mubr.f32.mxu0 %v1029
    %1263 = vmatmul.mubr.f32.gmra.mrb[0].mxu0 %v1197
    %v1264 = vpop.f32.mrb[0].mxu0
    %v1265 = vadd.f32 %v339, %v1264
    %v1266 = vpop.f32.mrb[0].mxu0
    %v1267 = vadd.f32 %v343, %v1266
    %1268 = vdwg.mxu0
    %1269 = vmatprep.subr.mxu0 %v187
    %1270 = vmatpush1.msra.mxu0 %v186
    %1271 = vmatprep.subr.mxu0 %v191
    %1272 = vmatpush1.msra.mxu0 %v190
    %1273 = vmatprep.subr.mxu0 %v195
    %1274 = vmatpush1.msra.mxu0 %v194
    %1275 = vmatprep.subr.mxu0 %v199
    %1276 = vmatpush1.msra.mxu0 %v198
    %1277 = vmatprep.subr.mxu0 %v203
    %1278 = vmatpush1.msra.mxu0 %v202
    %1279 = vmatprep.subr.mxu0 %v207
    %1280 = vmatpush1.msra.mxu0 %v206
    %1281 = vmatprep.subr.mxu0 %v211
    %1282 = vmatpush1.msra.mxu0 %v210
    %1283 = vmatprep.subr.mxu0 %v215
    %1284 = vmatpush1.msra.mxu0 %v214
    %1285 = vmatprep.subr.mxu0 %v219
    %1286 = vmatpush1.msra.mxu0 %v218
    %1287 = vmatprep.subr.mxu0 %v223
    %1288 = vmatpush1.msra.mxu0 %v222
    %1289 = vmatprep.subr.mxu0 %v227
    %1290 = vmatpush1.msra.mxu0 %v226
    %1291 = vmatprep.subr.mxu0 %v231
    %1292 = vmatpush1.msra.mxu0 %v230
    %1293 = vmatprep.subr.mxu0 %v235
    %1294 = vmatpush1.msra.mxu0 %v234
    %1295 = vmatprep.subr.mxu0 %v239
    %1296 = vmatpush1.msra.mxu0 %v238
    %1297 = vmatprep.subr.mxu0 %v243
    %1298 = vmatpush1.msra.mxu0 %v242
    %1299 = vmatprep.subr.mxu0 %v247
    %1300 = vmatpush1.msra.mxu0 %v246
    %1301 = vmatprep.subr.mxu0 %v251
    %1302 = vmatpush1.msra.mxu0 %v250
    %1303 = vmatprep.subr.mxu0 %v255
    %1304 = vmatpush1.msra.mxu0 %v254
    %1305 = vmatprep.subr.mxu0 %v259
    %1306 = vmatpush1.msra.mxu0 %v258
    %1307 = vmatprep.subr.mxu0 %v263
    %1308 = vmatpush1.msra.mxu0 %v262
    %1309 = vmatprep.subr.mxu0 %v267
    %1310 = vmatpush1.msra.mxu0 %v266
    %1311 = vmatprep.subr.mxu0 %v271
    %1312 = vmatpush1.msra.mxu0 %v270
    %1313 = vmatprep.subr.mxu0 %v275
    %1314 = vmatpush1.msra.mxu0 %v274
    %1315 = vmatprep.subr.mxu0 %v279
    %1316 = vmatpush1.msra.mxu0 %v278
    %1317 = vmatprep.subr.mxu0 %v283
    %1318 = vmatpush1.msra.mxu0 %v282
    %1319 = vmatprep.subr.mxu0 %v287
    %1320 = vmatpush1.msra.mxu0 %v286
    %1321 = vmatprep.subr.mxu0 %v291
    %1322 = vmatpush1.msra.mxu0 %v290
    %1323 = vmatprep.subr.mxu0 %v295
    %1324 = vmatpush1.msra.mxu0 %v294
    %1325 = vmatprep.subr.mxu0 %v299
    %1326 = vmatpush1.msra.mxu0 %v298
    %1327 = vmatprep.subr.mxu0 %v303
    %1328 = vmatpush1.msra.mxu0 %v302
    %1329 = vmatprep.subr.mxu0 %v307
    %1330 = vmatpush1.msra.mxu0 %v306
    %1331 = vmatprep.subr.mxu0 %v311
    %1332 = vmatpush1.msra.mxu0 %v310
    %1333 = vmatprep.mubr.f32.mxu0 %v1029
    %1334 = vmatmul.mubr.f32.gmra.mrb[0].mxu0 %v1197
    %v1335 = vpop.f32.mrb[0].mxu0
    %v1336 = vadd.f32 %v347, %v1335
    %v1337 = vpop.f32.mrb[0].mxu0
    %v1338 = vadd.f32 %v351, %v1337
    %1339 = vdwg.mxu0
    %v1340 = vxor.u32 %v1265, 2147483648
    %v1341 = vmul.f32 %v1340, 1.442695
    %v1342 = vpow.pop %v1341
    %v1343 = vadd.f32 %v1342, 1.0
    %v1344 = vrcp.pop %v1343
    %v1345 = vmul.f32 1.0, %v1344
    %v1346 = vxor.u32 %v1267, 2147483648
    %v1347 = vmul.f32 %v1346, 1.442695
    %v1348 = vpow.pop %v1347
    %v1349 = vadd.f32 %v1348, 1.0
    %v1350 = vrcp.pop %v1349
    %v1351 = vmul.f32 1.0, %v1350
    %v1352 = vtanh.pop %v1336
    %v1353 = vxor.u32 %v1338, 2147483648
    %v1354 = vmul.f32 %v1353, 1.442695
    %v1355 = vpow.pop %v1354
    %v1356 = vadd.f32 %v1355, 1.0
    %v1357 = vrcp.pop %v1356
    %v1358 = vmul.f32 1.0, %v1357
    %v1359 = vmul.f32 %v1351, %v1027
    %v1360 = vmul.f32 %v1345, %v1352
    %v1361 = vadd.f32 %v1359, %v1360
    %v1362 = vtanh.pop %v1361
    %v1363 = vmul.f32 %v1358, %v1362
    %s1364 = scalar_lea.vmem %s0, 6
    %v1365 = vld [vmem:[%s1364] sm:$0x3]
    %1366 = vmatprep.subr.mxu0 %v57
    %1367 = vmatpush1.msra.mxu0 %v56
    %1368 = vmatprep.subr.mxu0 %v61
    %1369 = vmatpush1.msra.mxu0 %v60
    %1370 = vmatprep.subr.mxu0 %v65
    %1371 = vmatpush1.msra.mxu0 %v64
    %1372 = vmatprep.subr.mxu0 %v69
    %1373 = vmatpush1.msra.mxu0 %v68
    %1374 = vmatprep.subr.mxu0 %v73
    %1375 = vmatpush1.msra.mxu0 %v72
    %1376 = vmatprep.subr.mxu0 %v77
    %1377 = vmatpush1.msra.mxu0 %v76
    %1378 = vmatprep.subr.mxu0 %v81
    %1379 = vmatpush1.msra.mxu0 %v80
    %1380 = vmatprep.subr.mxu0 %v85
    %1381 = vmatpush1.msra.mxu0 %v84
    %1382 = vmatprep.subr.mxu0 %v89
    %1383 = vmatpush1.msra.mxu0 %v88
    %1384 = vmatprep.subr.mxu0 %v93
    %1385 = vmatpush1.msra.mxu0 %v92
    %1386 = vmatprep.subr.mxu0 %v97
    %1387 = vmatpush1.msra.mxu0 %v96
    %1388 = vmatprep.subr.mxu0 %v101
    %1389 = vmatpush1.msra.mxu0 %v100
    %1390 = vmatprep.subr.mxu0 %v105
    %1391 = vmatpush1.msra.mxu0 %v104
    %1392 = vmatprep.subr.mxu0 %v109
    %1393 = vmatpush1.msra.mxu0 %v108
    %1394 = vmatprep.subr.mxu0 %v113
    %1395 = vmatpush1.msra.mxu0 %v112
    %1396 = vmatprep.subr.mxu0 %v117
    %1397 = vmatpush1.msra.mxu0 %v116
    %1398 = vmatprep.subr.mxu0 %v121
    %1399 = vmatpush1.msra.mxu0 %v120
    %1400 = vmatprep.subr.mxu0 %v125
    %1401 = vmatpush1.msra.mxu0 %v124
    %1402 = vmatprep.subr.mxu0 %v129
    %1403 = vmatpush1.msra.mxu0 %v128
    %1404 = vmatprep.subr.mxu0 %v133
    %1405 = vmatpush1.msra.mxu0 %v132
    %1406 = vmatprep.subr.mxu0 %v137
    %1407 = vmatpush1.msra.mxu0 %v136
    %1408 = vmatprep.subr.mxu0 %v141
    %1409 = vmatpush1.msra.mxu0 %v140
    %1410 = vmatprep.subr.mxu0 %v145
    %1411 = vmatpush1.msra.mxu0 %v144
    %1412 = vmatprep.subr.mxu0 %v149
    %1413 = vmatpush1.msra.mxu0 %v148
    %1414 = vmatprep.subr.mxu0 %v153
    %1415 = vmatpush1.msra.mxu0 %v152
    %1416 = vmatprep.subr.mxu0 %v157
    %1417 = vmatpush1.msra.mxu0 %v156
    %1418 = vmatprep.subr.mxu0 %v161
    %1419 = vmatpush1.msra.mxu0 %v160
    %1420 = vmatprep.subr.mxu0 %v165
    %1421 = vmatpush1.msra.mxu0 %v164
    %1422 = vmatprep.subr.mxu0 %v169
    %1423 = vmatpush1.msra.mxu0 %v168
    %1424 = vmatprep.subr.mxu0 %v173
    %1425 = vmatpush1.msra.mxu0 %v172
    %1426 = vmatprep.subr.mxu0 %v177
    %1427 = vmatpush1.msra.mxu0 %v176
    %1428 = vmatprep.subr.mxu0 %v181
    %1429 = vmatpush1.msra.mxu0 %v180
    %1430 = vmatprep.mubr.f32.mxu0 %v1197
    %1431 = vmatmul.mubr.f32.gmra.mrb[0].mxu0 %v1365
    %v1432 = vpop.f32.mrb[0].mxu0
    %v1433 = vadd.f32 %v317, %v1432
    %v1434 = vpop.f32.mrb[0].mxu0
    %v1435 = vadd.f32 %v321, %v1434
    %1436 = vdwg.mxu0
    %1437 = vmatprep.subr.mxu0 %v59
    %1438 = vmatpush1.msra.mxu0 %v58
    %1439 = vmatprep.subr.mxu0 %v63
    %1440 = vmatpush1.msra.mxu0 %v62
    %1441 = vmatprep.subr.mxu0 %v67
    %1442 = vmatpush1.msra.mxu0 %v66
    %1443 = vmatprep.subr.mxu0 %v71
    %1444 = vmatpush1.msra.mxu0 %v70
    %1445 = vmatprep.subr.mxu0 %v75
    %1446 = vmatpush1.msra.mxu0 %v74
    %1447 = vmatprep.subr.mxu0 %v79
    %1448 = vmatpush1.msra.mxu0 %v78
    %1449 = vmatprep.subr.mxu0 %v83
    %1450 = vmatpush1.msra.mxu0 %v82
    %1451 = vmatprep.subr.mxu0 %v87
    %1452 = vmatpush1.msra.mxu0 %v86
    %1453 = vmatprep.subr.mxu0 %v91
    %1454 = vmatpush1.msra.mxu0 %v90
    %1455 = vmatprep.subr.mxu0 %v95
    %1456 = vmatpush1.msra.mxu0 %v94
    %1457 = vmatprep.subr.mxu0 %v99
    %1458 = vmatpush1.msra.mxu0 %v98
    %1459 = vmatprep.subr.mxu0 %v103
    %1460 = vmatpush1.msra.mxu0 %v102
    %1461 = vmatprep.subr.mxu0 %v107
    %1462 = vmatpush1.msra.mxu0 %v106
    %1463 = vmatprep.subr.mxu0 %v111
    %1464 = vmatpush1.msra.mxu0 %v110
    %1465 = vmatprep.subr.mxu0 %v115
    %1466 = vmatpush1.msra.mxu0 %v114
    %1467 = vmatprep.subr.mxu0 %v119
    %1468 = vmatpush1.msra.mxu0 %v118
    %1469 = vmatprep.subr.mxu0 %v123
    %1470 = vmatpush1.msra.mxu0 %v122
    %1471 = vmatprep.subr.mxu0 %v127
    %1472 = vmatpush1.msra.mxu0 %v126
    %1473 = vmatprep.subr.mxu0 %v131
    %1474 = vmatpush1.msra.mxu0 %v130
    %1475 = vmatprep.subr.mxu0 %v135
    %1476 = vmatpush1.msra.mxu0 %v134
    %1477 = vmatprep.subr.mxu0 %v139
    %1478 = vmatpush1.msra.mxu0 %v138
    %1479 = vmatprep.subr.mxu0 %v143
    %1480 = vmatpush1.msra.mxu0 %v142
    %1481 = vmatprep.subr.mxu0 %v147
    %1482 = vmatpush1.msra.mxu0 %v146
    %1483 = vmatprep.subr.mxu0 %v151
    %1484 = vmatpush1.msra.mxu0 %v150
    %1485 = vmatprep.subr.mxu0 %v155
    %1486 = vmatpush1.msra.mxu0 %v154
    %1487 = vmatprep.subr.mxu0 %v159
    %1488 = vmatpush1.msra.mxu0 %v158
    %1489 = vmatprep.subr.mxu0 %v163
    %1490 = vmatpush1.msra.mxu0 %v162
    %1491 = vmatprep.subr.mxu0 %v167
    %1492 = vmatpush1.msra.mxu0 %v166
    %1493 = vmatprep.subr.mxu0 %v171
    %1494 = vmatpush1.msra.mxu0 %v170
    %1495 = vmatprep.subr.mxu0 %v175
    %1496 = vmatpush1.msra.mxu0 %v174
    %1497 = vmatprep.subr.mxu0 %v179
    %1498 = vmatpush1.msra.mxu0 %v178
    %1499 = vmatprep.subr.mxu0 %v183
    %1500 = vmatpush1.msra.mxu0 %v182
    %1501 = vmatprep.mubr.f32.mxu0 %v1197
    %1502 = vmatmul.mubr.f32.gmra.mrb[0].mxu0 %v1365
    %v1503 = vpop.f32.mrb[0].mxu0
    %v1504 = vadd.f32 %v325, %v1503
    %v1505 = vpop.f32.mrb[0].mxu0
    %v1506 = vadd.f32 %v329, %v1505
    %1507 = vdwg.mxu0
    %v1508 = vxor.u32 %v1433, 2147483648
    %v1509 = vmul.f32 %v1508, 1.442695
    %v1510 = vpow.pop %v1509
    %v1511 = vadd.f32 %v1510, 1.0
    %v1512 = vrcp.pop %v1511
    %v1513 = vmul.f32 1.0, %v1512
    %v1514 = vxor.u32 %v1435, 2147483648
    %v1515 = vmul.f32 %v1514, 1.442695
    %v1516 = vpow.pop %v1515
    %v1517 = vadd.f32 %v1516, 1.0
    %v1518 = vrcp.pop %v1517
    %v1519 = vmul.f32 1.0, %v1518
    %v1520 = vtanh.pop %v1504
    %v1521 = vxor.u32 %v1506, 2147483648
    %v1522 = vmul.f32 %v1521, 1.442695
    %v1523 = vpow.pop %v1522
    %v1524 = vadd.f32 %v1523, 1.0
    %v1525 = vrcp.pop %v1524
    %v1526 = vmul.f32 1.0, %v1525
    %v1527 = vmul.f32 %v1519, %v1195
    %v1528 = vmul.f32 %v1513, %v1520
    %v1529 = vadd.f32 %v1527, %v1528
    %v1530 = vtanh.pop %v1529
    %v1531 = vmul.f32 %v1526, %v1530
    %1532 = vmatprep.subr.mxu0 %v185
    %1533 = vmatpush1.msra.mxu0 %v184
    %1534 = vmatprep.subr.mxu0 %v189
    %1535 = vmatpush1.msra.mxu0 %v188
    %1536 = vmatprep.subr.mxu0 %v193
    %1537 = vmatpush1.msra.mxu0 %v192
    %1538 = vmatprep.subr.mxu0 %v197
    %1539 = vmatpush1.msra.mxu0 %v196
    %1540 = vmatprep.subr.mxu0 %v201
    %1541 = vmatpush1.msra.mxu0 %v200
    %1542 = vmatprep.subr.mxu0 %v205
    %1543 = vmatpush1.msra.mxu0 %v204
    %1544 = vmatprep.subr.mxu0 %v209
    %1545 = vmatpush1.msra.mxu0 %v208
    %1546 = vmatprep.subr.mxu0 %v213
    %1547 = vmatpush1.msra.mxu0 %v212
    %1548 = vmatprep.subr.mxu0 %v217
    %1549 = vmatpush1.msra.mxu0 %v216
    %1550 = vmatprep.subr.mxu0 %v221
    %1551 = vmatpush1.msra.mxu0 %v220
    %1552 = vmatprep.subr.mxu0 %v225
    %1553 = vmatpush1.msra.mxu0 %v224
    %1554 = vmatprep.subr.mxu0 %v229
    %1555 = vmatpush1.msra.mxu0 %v228
    %1556 = vmatprep.subr.mxu0 %v233
    %1557 = vmatpush1.msra.mxu0 %v232
    %1558 = vmatprep.subr.mxu0 %v237
    %1559 = vmatpush1.msra.mxu0 %v236
    %1560 = vmatprep.subr.mxu0 %v241
    %1561 = vmatpush1.msra.mxu0 %v240
    %1562 = vmatprep.subr.mxu0 %v245
    %1563 = vmatpush1.msra.mxu0 %v244
    %1564 = vmatprep.subr.mxu0 %v249
    %1565 = vmatpush1.msra.mxu0 %v248
    %1566 = vmatprep.subr.mxu0 %v253
    %1567 = vmatpush1.msra.mxu0 %v252
    %1568 = vmatprep.subr.mxu0 %v257
    %1569 = vmatpush1.msra.mxu0 %v256
    %1570 = vmatprep.subr.mxu0 %v261
    %1571 = vmatpush1.msra.mxu0 %v260
    %1572 = vmatprep.subr.mxu0 %v265
    %1573 = vmatpush1.msra.mxu0 %v264
    %1574 = vmatprep.subr.mxu0 %v269
    %1575 = vmatpush1.msra.mxu0 %v268
    %1576 = vmatprep.subr.mxu0 %v273
    %1577 = vmatpush1.msra.mxu0 %v272
    %1578 = vmatprep.subr.mxu0 %v277
    %1579 = vmatpush1.msra.mxu0 %v276
    %1580 = vmatprep.subr.mxu0 %v281
    %1581 = vmatpush1.msra.mxu0 %v280
    %1582 = vmatprep.subr.mxu0 %v285
    %1583 = vmatpush1.msra.mxu0 %v284
    %1584 = vmatprep.subr.mxu0 %v289
    %1585 = vmatpush1.msra.mxu0 %v288
    %1586 = vmatprep.subr.mxu0 %v293
    %1587 = vmatpush1.msra.mxu0 %v292
    %1588 = vmatprep.subr.mxu0 %v297
    %1589 = vmatpush1.msra.mxu0 %v296
    %1590 = vmatprep.subr.mxu0 %v301
    %1591 = vmatpush1.msra.mxu0 %v300
    %1592 = vmatprep.subr.mxu0 %v305
    %1593 = vmatpush1.msra.mxu0 %v304
    %1594 = vmatprep.subr.mxu0 %v309
    %1595 = vmatpush1.msra.mxu0 %v308
    %1596 = vmatprep.mubr.f32.mxu0 %v1363
    %1597 = vmatmul.mubr.f32.gmra.mrb[0].mxu0 %v1531
    %v1598 = vpop.f32.mrb[0].mxu0
    %v1599 = vadd.f32 %v339, %v1598
    %v1600 = vpop.f32.mrb[0].mxu0
    %v1601 = vadd.f32 %v343, %v1600
    %1602 = vdwg.mxu0
    %1603 = vmatprep.subr.mxu0 %v187
    %1604 = vmatpush1.msra.mxu0 %v186
    %1605 = vmatprep.subr.mxu0 %v191
    %1606 = vmatpush1.msra.mxu0 %v190
    %1607 = vmatprep.subr.mxu0 %v195
    %1608 = vmatpush1.msra.mxu0 %v194
    %1609 = vmatprep.subr.mxu0 %v199
    %1610 = vmatpush1.msra.mxu0 %v198
    %1611 = vmatprep.subr.mxu0 %v203
    %1612 = vmatpush1.msra.mxu0 %v202
    %1613 = vmatprep.subr.mxu0 %v207
    %1614 = vmatpush1.msra.mxu0 %v206
    %1615 = vmatprep.subr.mxu0 %v211
    %1616 = vmatpush1.msra.mxu0 %v210
    %1617 = vmatprep.subr.mxu0 %v215
    %1618 = vmatpush1.msra.mxu0 %v214
    %1619 = vmatprep.subr.mxu0 %v219
    %1620 = vmatpush1.msra.mxu0 %v218
    %1621 = vmatprep.subr.mxu0 %v223
    %1622 = vmatpush1.msra.mxu0 %v222
    %1623 = vmatprep.subr.mxu0 %v227
    %1624 = vmatpush1.msra.mxu0 %v226
    %1625 = vmatprep.subr.mxu0 %v231
    %1626 = vmatpush1.msra.mxu0 %v230
    %1627 = vmatprep.subr.mxu0 %v235
    %1628 = vmatpush1.msra.mxu0 %v234
    %1629 = vmatprep.subr.mxu0 %v239
    %1630 = vmatpush1.msra.mxu0 %v238
    %1631 = vmatprep.subr.mxu0 %v243
    %1632 = vmatpush1.msra.mxu0 %v242
    %1633 = vmatprep.subr.mxu0 %v247
    %1634 = vmatpush1.msra.mxu0 %v246
    %1635 = vmatprep.subr.mxu0 %v251
    %1636 = vmatpush1.msra.mxu0 %v250
    %1637 = vmatprep.subr.mxu0 %v255
    %1638 = vmatpush1.msra.mxu0 %v254
    %1639 = vmatprep.subr.mxu0 %v259
    %1640 = vmatpush1.msra.mxu0 %v258
    %1641 = vmatprep.subr.mxu0 %v263
    %1642 = vmatpush1.msra.mxu0 %v262
    %1643 = vmatprep.subr.mxu0 %v267
    %1644 = vmatpush1.msra.mxu0 %v266
    %1645 = vmatprep.subr.mxu0 %v271
    %1646 = vmatpush1.msra.mxu0 %v270
    %1647 = vmatprep.subr.mxu0 %v275
    %1648 = vmatpush1.msra.mxu0 %v274
    %1649 = vmatprep.subr.mxu0 %v279
    %1650 = vmatpush1.msra.mxu0 %v278
    %1651 = vmatprep.subr.mxu0 %v283
    %1652 = vmatpush1.msra.mxu0 %v282
    %1653 = vmatprep.subr.mxu0 %v287
    %1654 = vmatpush1.msra.mxu0 %v286
    %1655 = vmatprep.subr.mxu0 %v291
    %1656 = vmatpush1.msra.mxu0 %v290
    %1657 = vmatprep.subr.mxu0 %v295
    %1658 = vmatpush1.msra.mxu0 %v294
    %1659 = vmatprep.subr.mxu0 %v299
    %1660 = vmatpush1.msra.mxu0 %v298
    %1661 = vmatprep.subr.mxu0 %v303
    %1662 = vmatpush1.msra.mxu0 %v302
    %1663 = vmatprep.subr.mxu0 %v307
    %1664 = vmatpush1.msra.mxu0 %v306
    %1665 = vmatprep.subr.mxu0 %v311
    %1666 = vmatpush1.msra.mxu0 %v310
    %1667 = vmatprep.mubr.f32.mxu0 %v1363
    %1668 = vmatmul.mubr.f32.gmra.mrb[0].mxu0 %v1531
    %v1669 = vpop.f32.mrb[0].mxu0
    %v1670 = vadd.f32 %v347, %v1669
    %v1671 = vpop.f32.mrb[0].mxu0
    %v1672 = vadd.f32 %v351, %v1671
    %1673 = vdwg.mxu0
    %v1674 = vxor.u32 %v1599, 2147483648
    %v1675 = vmul.f32 %v1674, 1.442695
    %v1676 = vpow.pop %v1675
    %v1677 = vadd.f32 %v1676, 1.0
    %v1678 = vrcp.pop %v1677
    %v1679 = vmul.f32 1.0, %v1678
    %v1680 = vxor.u32 %v1601, 2147483648
    %v1681 = vmul.f32 %v1680, 1.442695
    %v1682 = vpow.pop %v1681
    %v1683 = vadd.f32 %v1682, 1.0
    %v1684 = vrcp.pop %v1683
    %v1685 = vmul.f32 1.0, %v1684
    %v1686 = vtanh.pop %v1670
    %v1687 = vxor.u32 %v1672, 2147483648
    %v1688 = vmul.f32 %v1687, 1.442695
    %v1689 = vpow.pop %v1688
    %v1690 = vadd.f32 %v1689, 1.0
    %v1691 = vrcp.pop %v1690
    %v1692 = vmul.f32 1.0, %v1691
    %v1693 = vmul.f32 %v1685, %v1361
    %v1694 = vmul.f32 %v1679, %v1686
    %v1695 = vadd.f32 %v1693, %v1694
    %v1696 = vtanh.pop %v1695
    %v1697 = vmul.f32 %v1692, %v1696
    %s1698 = scalar_lea.vmem %s0, 8
    %v1699 = vld [vmem:[%s1698] sm:$0x3]
    %1700 = vmatprep.subr.mxu0 %v57
    %1701 = vmatpush1.msra.mxu0 %v56
    %1702 = vmatprep.subr.mxu0 %v61
    %1703 = vmatpush1.msra.mxu0 %v60
    %1704 = vmatprep.subr.mxu0 %v65
    %1705 = vmatpush1.msra.mxu0 %v64
    %1706 = vmatprep.subr.mxu0 %v69
    %1707 = vmatpush1.msra.mxu0 %v68
    %1708 = vmatprep.subr.mxu0 %v73
    %1709 = vmatpush1.msra.mxu0 %v72
    %1710 = vmatprep.subr.mxu0 %v77
    %1711 = vmatpush1.msra.mxu0 %v76
    %1712 = vmatprep.subr.mxu0 %v81
    %1713 = vmatpush1.msra.mxu0 %v80
    %1714 = vmatprep.subr.mxu0 %v85
    %1715 = vmatpush1.msra.mxu0 %v84
    %1716 = vmatprep.subr.mxu0 %v89
    %1717 = vmatpush1.msra.mxu0 %v88
    %1718 = vmatprep.subr.mxu0 %v93
    %1719 = vmatpush1.msra.mxu0 %v92
    %1720 = vmatprep.subr.mxu0 %v97
    %1721 = vmatpush1.msra.mxu0 %v96
    %1722 = vmatprep.subr.mxu0 %v101
    %1723 = vmatpush1.msra.mxu0 %v100
    %1724 = vmatprep.subr.mxu0 %v105
    %1725 = vmatpush1.msra.mxu0 %v104
    %1726 = vmatprep.subr.mxu0 %v109
    %1727 = vmatpush1.msra.mxu0 %v108
    %1728 = vmatprep.subr.mxu0 %v113
    %1729 = vmatpush1.msra.mxu0 %v112
    %1730 = vmatprep.subr.mxu0 %v117
    %1731 = vmatpush1.msra.mxu0 %v116
    %1732 = vmatprep.subr.mxu0 %v121
    %1733 = vmatpush1.msra.mxu0 %v120
    %1734 = vmatprep.subr.mxu0 %v125
    %1735 = vmatpush1.msra.mxu0 %v124
    %1736 = vmatprep.subr.mxu0 %v129
    %1737 = vmatpush1.msra.mxu0 %v128
    %1738 = vmatprep.subr.mxu0 %v133
    %1739 = vmatpush1.msra.mxu0 %v132
    %1740 = vmatprep.subr.mxu0 %v137
    %1741 = vmatpush1.msra.mxu0 %v136
    %1742 = vmatprep.subr.mxu0 %v141
    %1743 = vmatpush1.msra.mxu0 %v140
    %1744 = vmatprep.subr.mxu0 %v145
    %1745 = vmatpush1.msra.mxu0 %v144
    %1746 = vmatprep.subr.mxu0 %v149
    %1747 = vmatpush1.msra.mxu0 %v148
    %1748 = vmatprep.subr.mxu0 %v153
    %1749 = vmatpush1.msra.mxu0 %v152
    %1750 = vmatprep.subr.mxu0 %v157
    %1751 = vmatpush1.msra.mxu0 %v156
    %1752 = vmatprep.subr.mxu0 %v161
    %1753 = vmatpush1.msra.mxu0 %v160
    %1754 = vmatprep.subr.mxu0 %v165
    %1755 = vmatpush1.msra.mxu0 %v164
    %1756 = vmatprep.subr.mxu0 %v169
    %1757 = vmatpush1.msra.mxu0 %v168
    %1758 = vmatprep.subr.mxu0 %v173
    %1759 = vmatpush1.msra.mxu0 %v172
    %1760 = vmatprep.subr.mxu0 %v177
    %1761 = vmatpush1.msra.mxu0 %v176
    %1762 = vmatprep.subr.mxu0 %v181
    %1763 = vmatpush1.msra.mxu0 %v180
    %1764 = vmatprep.mubr.f32.mxu0 %v1531
    %1765 = vmatmul.mubr.f32.gmra.mrb[0].mxu0 %v1699
    %v1766 = vpop.f32.mrb[0].mxu0
    %v1767 = vadd.f32 %v317, %v1766
    %v1768 = vpop.f32.mrb[0].mxu0
    %v1769 = vadd.f32 %v321, %v1768
    %1770 = vdwg.mxu0
    %1771 = vmatprep.subr.mxu0 %v59
    %1772 = vmatpush1.msra.mxu0 %v58
    %1773 = vmatprep.subr.mxu0 %v63
    %1774 = vmatpush1.msra.mxu0 %v62
    %1775 = vmatprep.subr.mxu0 %v67
    %1776 = vmatpush1.msra.mxu0 %v66
    %1777 = vmatprep.subr.mxu0 %v71
    %1778 = vmatpush1.msra.mxu0 %v70
    %1779 = vmatprep.subr.mxu0 %v75
    %1780 = vmatpush1.msra.mxu0 %v74
    %1781 = vmatprep.subr.mxu0 %v79
    %1782 = vmatpush1.msra.mxu0 %v78
    %1783 = vmatprep.subr.mxu0 %v83
    %1784 = vmatpush1.msra.mxu0 %v82
    %1785 = vmatprep.subr.mxu0 %v87
    %1786 = vmatpush1.msra.mxu0 %v86
    %1787 = vmatprep.subr.mxu0 %v91
    %1788 = vmatpush1.msra.mxu0 %v90
    %1789 = vmatprep.subr.mxu0 %v95
    %1790 = vmatpush1.msra.mxu0 %v94
    %1791 = vmatprep.subr.mxu0 %v99
    %1792 = vmatpush1.msra.mxu0 %v98
    %1793 = vmatprep.subr.mxu0 %v103
    %1794 = vmatpush1.msra.mxu0 %v102
    %1795 = vmatprep.subr.mxu0 %v107
    %1796 = vmatpush1.msra.mxu0 %v106
    %1797 = vmatprep.subr.mxu0 %v111
    %1798 = vmatpush1.msra.mxu0 %v110
    %1799 = vmatprep.subr.mxu0 %v115
    %1800 = vmatpush1.msra.mxu0 %v114
    %1801 = vmatprep.subr.mxu0 %v119
    %1802 = vmatpush1.msra.mxu0 %v118
    %1803 = vmatprep.subr.mxu0 %v123
    %1804 = vmatpush1.msra.mxu0 %v122
    %1805 = vmatprep.subr.mxu0 %v127
    %1806 = vmatpush1.msra.mxu0 %v126
    %1807 = vmatprep.subr.mxu0 %v131
    %1808 = vmatpush1.msra.mxu0 %v130
    %1809 = vmatprep.subr.mxu0 %v135
    %1810 = vmatpush1.msra.mxu0 %v134
    %1811 = vmatprep.subr.mxu0 %v139
    %1812 = vmatpush1.msra.mxu0 %v138
    %1813 = vmatprep.subr.mxu0 %v143
    %1814 = vmatpush1.msra.mxu0 %v142
    %1815 = vmatprep.subr.mxu0 %v147
    %1816 = vmatpush1.msra.mxu0 %v146
    %1817 = vmatprep.subr.mxu0 %v151
    %1818 = vmatpush1.msra.mxu0 %v150
    %1819 = vmatprep.subr.mxu0 %v155
    %1820 = vmatpush1.msra.mxu0 %v154
    %1821 = vmatprep.subr.mxu0 %v159
    %1822 = vmatpush1.msra.mxu0 %v158
    %1823 = vmatprep.subr.mxu0 %v163
    %1824 = vmatpush1.msra.mxu0 %v162
    %1825 = vmatprep.subr.mxu0 %v167
    %1826 = vmatpush1.msra.mxu0 %v166
    %1827 = vmatprep.subr.mxu0 %v171
    %1828 = vmatpush1.msra.mxu0 %v170
    %1829 = vmatprep.subr.mxu0 %v175
    %1830 = vmatpush1.msra.mxu0 %v174
    %1831 = vmatprep.subr.mxu0 %v179
    %1832 = vmatpush1.msra.mxu0 %v178
    %1833 = vmatprep.subr.mxu0 %v183
    %1834 = vmatpush1.msra.mxu0 %v182
    %1835 = vmatprep.mubr.f32.mxu0 %v1531
    %1836 = vmatmul.mubr.f32.gmra.mrb[0].mxu0 %v1699
    %v1837 = vpop.f32.mrb[0].mxu0
    %v1838 = vadd.f32 %v325, %v1837
    %v1839 = vpop.f32.mrb[0].mxu0
    %v1840 = vadd.f32 %v329, %v1839
    %1841 = vdwg.mxu0
    %v1842 = vxor.u32 %v1767, 2147483648
    %v1843 = vmul.f32 %v1842, 1.442695
    %v1844 = vpow.pop %v1843
    %v1845 = vadd.f32 %v1844, 1.0
    %v1846 = vrcp.pop %v1845
    %v1847 = vmul.f32 1.0, %v1846
    %v1848 = vxor.u32 %v1769, 2147483648
    %v1849 = vmul.f32 %v1848, 1.442695
    %v1850 = vpow.pop %v1849
    %v1851 = vadd.f32 %v1850, 1.0
    %v1852 = vrcp.pop %v1851
    %v1853 = vmul.f32 1.0, %v1852
    %v1854 = vtanh.pop %v1838
    %v1855 = vxor.u32 %v1840, 2147483648
    %v1856 = vmul.f32 %v1855, 1.442695
    %v1857 = vpow.pop %v1856
    %v1858 = vadd.f32 %v1857, 1.0
    %v1859 = vrcp.pop %v1858
    %v1860 = vmul.f32 1.0, %v1859
    %v1861 = vmul.f32 %v1853, %v1529
    %v1862 = vmul.f32 %v1847, %v1854
    %v1863 = vadd.f32 %v1861, %v1862
    %v1864 = vtanh.pop %v1863
    %v1865 = vmul.f32 %v1860, %v1864
    %1866 = vmatprep.subr.mxu0 %v185
    %1867 = vmatpush1.msra.mxu0 %v184
    %1868 = vmatprep.subr.mxu0 %v189
    %1869 = vmatpush1.msra.mxu0 %v188
    %1870 = vmatprep.subr.mxu0 %v193
    %1871 = vmatpush1.msra.mxu0 %v192
    %1872 = vmatprep.subr.mxu0 %v197
    %1873 = vmatpush1.msra.mxu0 %v196
    %1874 = vmatprep.subr.mxu0 %v201
    %1875 = vmatpush1.msra.mxu0 %v200
    %1876 = vmatprep.subr.mxu0 %v205
    %1877 = vmatpush1.msra.mxu0 %v204
    %1878 = vmatprep.subr.mxu0 %v209
    %1879 = vmatpush1.msra.mxu0 %v208
    %1880 = vmatprep.subr.mxu0 %v213
    %1881 = vmatpush1.msra.mxu0 %v212
    %1882 = vmatprep.subr.mxu0 %v217
    %1883 = vmatpush1.msra.mxu0 %v216
    %1884 = vmatprep.subr.mxu0 %v221
    %1885 = vmatpush1.msra.mxu0 %v220
    %1886 = vmatprep.subr.mxu0 %v225
    %1887 = vmatpush1.msra.mxu0 %v224
    %1888 = vmatprep.subr.mxu0 %v229
    %1889 = vmatpush1.msra.mxu0 %v228
    %1890 = vmatprep.subr.mxu0 %v233
    %1891 = vmatpush1.msra.mxu0 %v232
    %1892 = vmatprep.subr.mxu0 %v237
    %1893 = vmatpush1.msra.mxu0 %v236
    %1894 = vmatprep.subr.mxu0 %v241
    %1895 = vmatpush1.msra.mxu0 %v240
    %1896 = vmatprep.subr.mxu0 %v245
    %1897 = vmatpush1.msra.mxu0 %v244
    %1898 = vmatprep.subr.mxu0 %v249
    %1899 = vmatpush1.msra.mxu0 %v248
    %1900 = vmatprep.subr.mxu0 %v253
    %1901 = vmatpush1.msra.mxu0 %v252
    %1902 = vmatprep.subr.mxu0 %v257
    %1903 = vmatpush1.msra.mxu0 %v256
    %1904 = vmatprep.subr.mxu0 %v261
    %1905 = vmatpush1.msra.mxu0 %v260
    %1906 = vmatprep.subr.mxu0 %v265
    %1907 = vmatpush1.msra.mxu0 %v264
    %1908 = vmatprep.subr.mxu0 %v269
    %1909 = vmatpush1.msra.mxu0 %v268
    %1910 = vmatprep.subr.mxu0 %v273
    %1911 = vmatpush1.msra.mxu0 %v272
    %1912 = vmatprep.subr.mxu0 %v277
    %1913 = vmatpush1.msra.mxu0 %v276
    %1914 = vmatprep.subr.mxu0 %v281
    %1915 = vmatpush1.msra.mxu0 %v280
    %1916 = vmatprep.subr.mxu0 %v285
    %1917 = vmatpush1.msra.mxu0 %v284
    %1918 = vmatprep.subr.mxu0 %v289
    %1919 = vmatpush1.msra.mxu0 %v288
    %1920 = vmatprep.subr.mxu0 %v293
    %1921 = vmatpush1.msra.mxu0 %v292
    %1922 = vmatprep.subr.mxu0 %v297
    %1923 = vmatpush1.msra.mxu0 %v296
    %1924 = vmatprep.subr.mxu0 %v301
    %1925 = vmatpush1.msra.mxu0 %v300
    %1926 = vmatprep.subr.mxu0 %v305
    %1927 = vmatpush1.msra.mxu0 %v304
    %1928 = vmatprep.subr.mxu0 %v309
    %1929 = vmatpush1.msra.mxu0 %v308
    %1930 = vmatprep.mubr.f32.mxu0 %v1697
    %1931 = vmatmul.mubr.f32.gmra.mrb[0].mxu0 %v1865
    %v1932 = vpop.f32.mrb[0].mxu0
    %v1933 = vadd.f32 %v339, %v1932
    %v1934 = vpop.f32.mrb[0].mxu0
    %v1935 = vadd.f32 %v343, %v1934
    %1936 = vdwg.mxu0
    %1937 = vmatprep.subr.mxu0 %v187
    %1938 = vmatpush1.msra.mxu0 %v186
    %1939 = vmatprep.subr.mxu0 %v191
    %1940 = vmatpush1.msra.mxu0 %v190
    %1941 = vmatprep.subr.mxu0 %v195
    %1942 = vmatpush1.msra.mxu0 %v194
    %1943 = vmatprep.subr.mxu0 %v199
    %1944 = vmatpush1.msra.mxu0 %v198
    %1945 = vmatprep.subr.mxu0 %v203
    %1946 = vmatpush1.msra.mxu0 %v202
    %1947 = vmatprep.subr.mxu0 %v207
    %1948 = vmatpush1.msra.mxu0 %v206
    %1949 = vmatprep.subr.mxu0 %v211
    %1950 = vmatpush1.msra.mxu0 %v210
    %1951 = vmatprep.subr.mxu0 %v215
    %1952 = vmatpush1.msra.mxu0 %v214
    %1953 = vmatprep.subr.mxu0 %v219
    %1954 = vmatpush1.msra.mxu0 %v218
    %1955 = vmatprep.subr.mxu0 %v223
    %1956 = vmatpush1.msra.mxu0 %v222
    %1957 = vmatprep.subr.mxu0 %v227
    %1958 = vmatpush1.msra.mxu0 %v226
    %1959 = vmatprep.subr.mxu0 %v231
    %1960 = vmatpush1.msra.mxu0 %v230
    %1961 = vmatprep.subr.mxu0 %v235
    %1962 = vmatpush1.msra.mxu0 %v234
    %1963 = vmatprep.subr.mxu0 %v239
    %1964 = vmatpush1.msra.mxu0 %v238
    %1965 = vmatprep.subr.mxu0 %v243
    %1966 = vmatpush1.msra.mxu0 %v242
    %1967 = vmatprep.subr.mxu0 %v247
    %1968 = vmatpush1.msra.mxu0 %v246
    %1969 = vmatprep.subr.mxu0 %v251
    %1970 = vmatpush1.msra.mxu0 %v250
    %1971 = vmatprep.subr.mxu0 %v255
    %1972 = vmatpush1.msra.mxu0 %v254
    %1973 = vmatprep.subr.mxu0 %v259
    %1974 = vmatpush1.msra.mxu0 %v258
    %1975 = vmatprep.subr.mxu0 %v263
    %1976 = vmatpush1.msra.mxu0 %v262
    %1977 = vmatprep.subr.mxu0 %v267
    %1978 = vmatpush1.msra.mxu0 %v266
    %1979 = vmatprep.subr.mxu0 %v271
    %1980 = vmatpush1.msra.mxu0 %v270
    %1981 = vmatprep.subr.mxu0 %v275
    %1982 = vmatpush1.msra.mxu0 %v274
    %1983 = vmatprep.subr.mxu0 %v279
    %1984 = vmatpush1.msra.mxu0 %v278
    %1985 = vmatprep.subr.mxu0 %v283
    %1986 = vmatpush1.msra.mxu0 %v282
    %1987 = vmatprep.subr.mxu0 %v287
    %1988 = vmatpush1.msra.mxu0 %v286
    %1989 = vmatprep.subr.mxu0 %v291
    %1990 = vmatpush1.msra.mxu0 %v290
    %1991 = vmatprep.subr.mxu0 %v295
    %1992 = vmatpush1.msra.mxu0 %v294
    %1993 = vmatprep.subr.mxu0 %v299
    %1994 = vmatpush1.msra.mxu0 %v298
    %1995 = vmatprep.subr.mxu0 %v303
    %1996 = vmatpush1.msra.mxu0 %v302
    %1997 = vmatprep.subr.mxu0 %v307
    %1998 = vmatpush1.msra.mxu0 %v306
    %1999 = vmatprep.subr.mxu0 %v311
    %2000 = vmatpush1.msra.mxu0 %v310
    %2001 = vmatprep.mubr.f32.mxu0 %v1697
    %2002 = vmatmul.mubr.f32.gmra.mrb[0].mxu0 %v1865
    %v2003 = vpop.f32.mrb[0].mxu0
    %v2004 = vadd.f32 %v347, %v2003
    %v2005 = vpop.f32.mrb[0].mxu0
    %v2006 = vadd.f32 %v351, %v2005
    %2007 = vdwg.mxu0
    %v2008 = vxor.u32 %v1933, 2147483648
    %v2009 = vmul.f32 %v2008, 1.442695
    %v2010 = vpow.pop %v2009
    %v2011 = vadd.f32 %v2010, 1.0
    %v2012 = vrcp.pop %v2011
    %v2013 = vmul.f32 1.0, %v2012
    %v2014 = vxor.u32 %v1935, 2147483648
    %v2015 = vmul.f32 %v2014, 1.442695
    %v2016 = vpow.pop %v2015
    %v2017 = vadd.f32 %v2016, 1.0
    %v2018 = vrcp.pop %v2017
    %v2019 = vmul.f32 1.0, %v2018
    %v2020 = vtanh.pop %v2004
    %v2021 = vxor.u32 %v2006, 2147483648
    %v2022 = vmul.f32 %v2021, 1.442695
    %v2023 = vpow.pop %v2022
    %v2024 = vadd.f32 %v2023, 1.0
    %v2025 = vrcp.pop %v2024
    %v2026 = vmul.f32 1.0, %v2025
    %v2027 = vmul.f32 %v2019, %v1695
    %v2028 = vmul.f32 %v2013, %v2020
    %v2029 = vadd.f32 %v2027, %v2028
    %v2030 = vtanh.pop %v2029
    %v2031 = vmul.f32 %v2026, %v2030
    %s2032 = scalar_lea.vmem %s0, 10
    %v2033 = vld [vmem:[%s2032] sm:$0x3]
    %2034 = vmatprep.subr.mxu0 %v57
    %2035 = vmatpush1.msra.mxu0 %v56
    %2036 = vmatprep.subr.mxu0 %v61
    %2037 = vmatpush1.msra.mxu0 %v60
    %2038 = vmatprep.subr.mxu0 %v65
    %2039 = vmatpush1.msra.mxu0 %v64
    %2040 = vmatprep.subr.mxu0 %v69
    %2041 = vmatpush1.msra.mxu0 %v68
    %2042 = vmatprep.subr.mxu0 %v73
    %2043 = vmatpush1.msra.mxu0 %v72
    %2044 = vmatprep.subr.mxu0 %v77
    %2045 = vmatpush1.msra.mxu0 %v76
    %2046 = vmatprep.subr.mxu0 %v81
    %2047 = vmatpush1.msra.mxu0 %v80
    %2048 = vmatprep.subr.mxu0 %v85
    %2049 = vmatpush1.msra.mxu0 %v84
    %2050 = vmatprep.subr.mxu0 %v89
    %2051 = vmatpush1.msra.mxu0 %v88
    %2052 = vmatprep.subr.mxu0 %v93
    %2053 = vmatpush1.msra.mxu0 %v92
    %2054 = vmatprep.subr.mxu0 %v97
    %2055 = vmatpush1.msra.mxu0 %v96
    %2056 = vmatprep.subr.mxu0 %v101
    %2057 = vmatpush1.msra.mxu0 %v100
    %2058 = vmatprep.subr.mxu0 %v105
    %2059 = vmatpush1.msra.mxu0 %v104
    %2060 = vmatprep.subr.mxu0 %v109
    %2061 = vmatpush1.msra.mxu0 %v108
    %2062 = vmatprep.subr.mxu0 %v113
    %2063 = vmatpush1.msra.mxu0 %v112
    %2064 = vmatprep.subr.mxu0 %v117
    %2065 = vmatpush1.msra.mxu0 %v116
    %2066 = vmatprep.subr.mxu0 %v121
    %2067 = vmatpush1.msra.mxu0 %v120
    %2068 = vmatprep.subr.mxu0 %v125
    %2069 = vmatpush1.msra.mxu0 %v124
    %2070 = vmatprep.subr.mxu0 %v129
    %2071 = vmatpush1.msra.mxu0 %v128
    %2072 = vmatprep.subr.mxu0 %v133
    %2073 = vmatpush1.msra.mxu0 %v132
    %2074 = vmatprep.subr.mxu0 %v137
    %2075 = vmatpush1.msra.mxu0 %v136
    %2076 = vmatprep.subr.mxu0 %v141
    %2077 = vmatpush1.msra.mxu0 %v140
    %2078 = vmatprep.subr.mxu0 %v145
    %2079 = vmatpush1.msra.mxu0 %v144
    %2080 = vmatprep.subr.mxu0 %v149
    %2081 = vmatpush1.msra.mxu0 %v148
    %2082 = vmatprep.subr.mxu0 %v153
    %2083 = vmatpush1.msra.mxu0 %v152
    %2084 = vmatprep.subr.mxu0 %v157
    %2085 = vmatpush1.msra.mxu0 %v156
    %2086 = vmatprep.subr.mxu0 %v161
    %2087 = vmatpush1.msra.mxu0 %v160
    %2088 = vmatprep.subr.mxu0 %v165
    %2089 = vmatpush1.msra.mxu0 %v164
    %2090 = vmatprep.subr.mxu0 %v169
    %2091 = vmatpush1.msra.mxu0 %v168
    %2092 = vmatprep.subr.mxu0 %v173
    %2093 = vmatpush1.msra.mxu0 %v172
    %2094 = vmatprep.subr.mxu0 %v177
    %2095 = vmatpush1.msra.mxu0 %v176
    %2096 = vmatprep.subr.mxu0 %v181
    %2097 = vmatpush1.msra.mxu0 %v180
    %2098 = vmatprep.mubr.f32.mxu0 %v1865
    %2099 = vmatmul.mubr.f32.gmra.mrb[0].mxu0 %v2033
    %v2100 = vpop.f32.mrb[0].mxu0
    %v2101 = vadd.f32 %v317, %v2100
    %v2102 = vpop.f32.mrb[0].mxu0
    %v2103 = vadd.f32 %v321, %v2102
    %2104 = vdwg.mxu0
    %2105 = vmatprep.subr.mxu0 %v59
    %2106 = vmatpush1.msra.mxu0 %v58
    %2107 = vmatprep.subr.mxu0 %v63
    %2108 = vmatpush1.msra.mxu0 %v62
    %2109 = vmatprep.subr.mxu0 %v67
    %2110 = vmatpush1.msra.mxu0 %v66
    %2111 = vmatprep.subr.mxu0 %v71
    %2112 = vmatpush1.msra.mxu0 %v70
    %2113 = vmatprep.subr.mxu0 %v75
    %2114 = vmatpush1.msra.mxu0 %v74
    %2115 = vmatprep.subr.mxu0 %v79
    %2116 = vmatpush1.msra.mxu0 %v78
    %2117 = vmatprep.subr.mxu0 %v83
    %2118 = vmatpush1.msra.mxu0 %v82
    %2119 = vmatprep.subr.mxu0 %v87
    %2120 = vmatpush1.msra.mxu0 %v86
    %2121 = vmatprep.subr.mxu0 %v91
    %2122 = vmatpush1.msra.mxu0 %v90
    %2123 = vmatprep.subr.mxu0 %v95
    %2124 = vmatpush1.msra.mxu0 %v94
    %2125 = vmatprep.subr.mxu0 %v99
    %2126 = vmatpush1.msra.mxu0 %v98
    %2127 = vmatprep.subr.mxu0 %v103
    %2128 = vmatpush1.msra.mxu0 %v102
    %2129 = vmatprep.subr.mxu0 %v107
    %2130 = vmatpush1.msra.mxu0 %v106
    %2131 = vmatprep.subr.mxu0 %v111
    %2132 = vmatpush1.msra.mxu0 %v110
    %2133 = vmatprep.subr.mxu0 %v115
    %2134 = vmatpush1.msra.mxu0 %v114
    %2135 = vmatprep.subr.mxu0 %v119
    %2136 = vmatpush1.msra.mxu0 %v118
    %2137 = vmatprep.subr.mxu0 %v123
    %2138 = vmatpush1.msra.mxu0 %v122
    %2139 = vmatprep.subr.mxu0 %v127
    %2140 = vmatpush1.msra.mxu0 %v126
    %2141 = vmatprep.subr.mxu0 %v131
    %2142 = vmatpush1.msra.mxu0 %v130
    %2143 = vmatprep.subr.mxu0 %v135
    %2144 = vmatpush1.msra.mxu0 %v134
    %2145 = vmatprep.subr.mxu0 %v139
    %2146 = vmatpush1.msra.mxu0 %v138
    %2147 = vmatprep.subr.mxu0 %v143
    %2148 = vmatpush1.msra.mxu0 %v142
    %2149 = vmatprep.subr.mxu0 %v147
    %2150 = vmatpush1.msra.mxu0 %v146
    %2151 = vmatprep.subr.mxu0 %v151
    %2152 = vmatpush1.msra.mxu0 %v150
    %2153 = vmatprep.subr.mxu0 %v155
    %2154 = vmatpush1.msra.mxu0 %v154
    %2155 = vmatprep.subr.mxu0 %v159
    %2156 = vmatpush1.msra.mxu0 %v158
    %2157 = vmatprep.subr.mxu0 %v163
    %2158 = vmatpush1.msra.mxu0 %v162
    %2159 = vmatprep.subr.mxu0 %v167
    %2160 = vmatpush1.msra.mxu0 %v166
    %2161 = vmatprep.subr.mxu0 %v171
    %2162 = vmatpush1.msra.mxu0 %v170
    %2163 = vmatprep.subr.mxu0 %v175
    %2164 = vmatpush1.msra.mxu0 %v174
    %2165 = vmatprep.subr.mxu0 %v179
    %2166 = vmatpush1.msra.mxu0 %v178
    %2167 = vmatprep.subr.mxu0 %v183
    %2168 = vmatpush1.msra.mxu0 %v182
    %2169 = vmatprep.mubr.f32.mxu0 %v1865
    %2170 = vmatmul.mubr.f32.gmra.mrb[0].mxu0 %v2033
    %v2171 = vpop.f32.mrb[0].mxu0
    %v2172 = vadd.f32 %v325, %v2171
    %v2173 = vpop.f32.mrb[0].mxu0
    %v2174 = vadd.f32 %v329, %v2173
    %2175 = vdwg.mxu0
    %v2176 = vxor.u32 %v2101, 2147483648
    %v2177 = vmul.f32 %v2176, 1.442695
    %v2178 = vpow.pop %v2177
    %v2179 = vadd.f32 %v2178, 1.0
    %v2180 = vrcp.pop %v2179
    %v2181 = vmul.f32 1.0, %v2180
    %v2182 = vxor.u32 %v2103, 2147483648
    %v2183 = vmul.f32 %v2182, 1.442695
    %v2184 = vpow.pop %v2183
    %v2185 = vadd.f32 %v2184, 1.0
    %v2186 = vrcp.pop %v2185
    %v2187 = vmul.f32 1.0, %v2186
    %v2188 = vtanh.pop %v2172
    %v2189 = vxor.u32 %v2174, 2147483648
    %v2190 = vmul.f32 %v2189, 1.442695
    %v2191 = vpow.pop %v2190
    %v2192 = vadd.f32 %v2191, 1.0
    %v2193 = vrcp.pop %v2192
    %v2194 = vmul.f32 1.0, %v2193
    %v2195 = vmul.f32 %v2187, %v1863
    %v2196 = vmul.f32 %v2181, %v2188
    %v2197 = vadd.f32 %v2195, %v2196
    %v2198 = vtanh.pop %v2197
    %v2199 = vmul.f32 %v2194, %v2198
    %2200 = vmatprep.subr.mxu0 %v185
    %2201 = vmatpush1.msra.mxu0 %v184
    %2202 = vmatprep.subr.mxu0 %v189
    %2203 = vmatpush1.msra.mxu0 %v188
    %2204 = vmatprep.subr.mxu0 %v193
    %2205 = vmatpush1.msra.mxu0 %v192
    %2206 = vmatprep.subr.mxu0 %v197
    %2207 = vmatpush1.msra.mxu0 %v196
    %2208 = vmatprep.subr.mxu0 %v201
    %2209 = vmatpush1.msra.mxu0 %v200
    %2210 = vmatprep.subr.mxu0 %v205
    %2211 = vmatpush1.msra.mxu0 %v204
    %2212 = vmatprep.subr.mxu0 %v209
    %2213 = vmatpush1.msra.mxu0 %v208
    %2214 = vmatprep.subr.mxu0 %v213
    %2215 = vmatpush1.msra.mxu0 %v212
    %2216 = vmatprep.subr.mxu0 %v217
    %2217 = vmatpush1.msra.mxu0 %v216
    %2218 = vmatprep.subr.mxu0 %v221
    %2219 = vmatpush1.msra.mxu0 %v220
    %2220 = vmatprep.subr.mxu0 %v225
    %2221 = vmatpush1.msra.mxu0 %v224
    %2222 = vmatprep.subr.mxu0 %v229
    %2223 = vmatpush1.msra.mxu0 %v228
    %2224 = vmatprep.subr.mxu0 %v233
    %2225 = vmatpush1.msra.mxu0 %v232
    %2226 = vmatprep.subr.mxu0 %v237
    %2227 = vmatpush1.msra.mxu0 %v236
    %2228 = vmatprep.subr.mxu0 %v241
    %2229 = vmatpush1.msra.mxu0 %v240
    %2230 = vmatprep.subr.mxu0 %v245
    %2231 = vmatpush1.msra.mxu0 %v244
    %2232 = vmatprep.subr.mxu0 %v249
    %2233 = vmatpush1.msra.mxu0 %v248
    %2234 = vmatprep.subr.mxu0 %v253
    %2235 = vmatpush1.msra.mxu0 %v252
    %2236 = vmatprep.subr.mxu0 %v257
    %2237 = vmatpush1.msra.mxu0 %v256
    %2238 = vmatprep.subr.mxu0 %v261
    %2239 = vmatpush1.msra.mxu0 %v260
    %2240 = vmatprep.subr.mxu0 %v265
    %2241 = vmatpush1.msra.mxu0 %v264
    %2242 = vmatprep.subr.mxu0 %v269
    %2243 = vmatpush1.msra.mxu0 %v268
    %2244 = vmatprep.subr.mxu0 %v273
    %2245 = vmatpush1.msra.mxu0 %v272
    %2246 = vmatprep.subr.mxu0 %v277
    %2247 = vmatpush1.msra.mxu0 %v276
    %2248 = vmatprep.subr.mxu0 %v281
    %2249 = vmatpush1.msra.mxu0 %v280
    %2250 = vmatprep.subr.mxu0 %v285
    %2251 = vmatpush1.msra.mxu0 %v284
    %2252 = vmatprep.subr.mxu0 %v289
    %2253 = vmatpush1.msra.mxu0 %v288
    %2254 = vmatprep.subr.mxu0 %v293
    %2255 = vmatpush1.msra.mxu0 %v292
    %2256 = vmatprep.subr.mxu0 %v297
    %2257 = vmatpush1.msra.mxu0 %v296
    %2258 = vmatprep.subr.mxu0 %v301
    %2259 = vmatpush1.msra.mxu0 %v300
    %2260 = vmatprep.subr.mxu0 %v305
    %2261 = vmatpush1.msra.mxu0 %v304
    %2262 = vmatprep.subr.mxu0 %v309
    %2263 = vmatpush1.msra.mxu0 %v308
    %2264 = vmatprep.mubr.f32.mxu0 %v2031
    %2265 = vmatmul.mubr.f32.gmra.mrb[0].mxu0 %v2199
    %v2266 = vpop.f32.mrb[0].mxu0
    %v2267 = vadd.f32 %v339, %v2266
    %v2268 = vpop.f32.mrb[0].mxu0
    %v2269 = vadd.f32 %v343, %v2268
    %2270 = vdwg.mxu0
    %2271 = vmatprep.subr.mxu0 %v187
    %2272 = vmatpush1.msra.mxu0 %v186
    %2273 = vmatprep.subr.mxu0 %v191
    %2274 = vmatpush1.msra.mxu0 %v190
    %2275 = vmatprep.subr.mxu0 %v195
    %2276 = vmatpush1.msra.mxu0 %v194
    %2277 = vmatprep.subr.mxu0 %v199
    %2278 = vmatpush1.msra.mxu0 %v198
    %2279 = vmatprep.subr.mxu0 %v203
    %2280 = vmatpush1.msra.mxu0 %v202
    %2281 = vmatprep.subr.mxu0 %v207
    %2282 = vmatpush1.msra.mxu0 %v206
    %2283 = vmatprep.subr.mxu0 %v211
    %2284 = vmatpush1.msra.mxu0 %v210
    %2285 = vmatprep.subr.mxu0 %v215
    %2286 = vmatpush1.msra.mxu0 %v214
    %2287 = vmatprep.subr.mxu0 %v219
    %2288 = vmatpush1.msra.mxu0 %v218
    %2289 = vmatprep.subr.mxu0 %v223
    %2290 = vmatpush1.msra.mxu0 %v222
    %2291 = vmatprep.subr.mxu0 %v227
    %2292 = vmatpush1.msra.mxu0 %v226
    %2293 = vmatprep.subr.mxu0 %v231
    %2294 = vmatpush1.msra.mxu0 %v230
    %2295 = vmatprep.subr.mxu0 %v235
    %2296 = vmatpush1.msra.mxu0 %v234
    %2297 = vmatprep.subr.mxu0 %v239
    %2298 = vmatpush1.msra.mxu0 %v238
    %2299 = vmatprep.subr.mxu0 %v243
    %2300 = vmatpush1.msra.mxu0 %v242
    %2301 = vmatprep.subr.mxu0 %v247
    %2302 = vmatpush1.msra.mxu0 %v246
    %2303 = vmatprep.subr.mxu0 %v251
    %2304 = vmatpush1.msra.mxu0 %v250
    %2305 = vmatprep.subr.mxu0 %v255
    %2306 = vmatpush1.msra.mxu0 %v254
    %2307 = vmatprep.subr.mxu0 %v259
    %2308 = vmatpush1.msra.mxu0 %v258
    %2309 = vmatprep.subr.mxu0 %v263
    %2310 = vmatpush1.msra.mxu0 %v262
    %2311 = vmatprep.subr.mxu0 %v267
    %2312 = vmatpush1.msra.mxu0 %v266
    %2313 = vmatprep.subr.mxu0 %v271
    %2314 = vmatpush1.msra.mxu0 %v270
    %2315 = vmatprep.subr.mxu0 %v275
    %2316 = vmatpush1.msra.mxu0 %v274
    %2317 = vmatprep.subr.mxu0 %v279
    %2318 = vmatpush1.msra.mxu0 %v278
    %2319 = vmatprep.subr.mxu0 %v283
    %2320 = vmatpush1.msra.mxu0 %v282
    %2321 = vmatprep.subr.mxu0 %v287
    %2322 = vmatpush1.msra.mxu0 %v286
    %2323 = vmatprep.subr.mxu0 %v291
    %2324 = vmatpush1.msra.mxu0 %v290
    %2325 = vmatprep.subr.mxu0 %v295
    %2326 = vmatpush1.msra.mxu0 %v294
    %2327 = vmatprep.subr.mxu0 %v299
    %2328 = vmatpush1.msra.mxu0 %v298
    %2329 = vmatprep.subr.mxu0 %v303
    %2330 = vmatpush1.msra.mxu0 %v302
    %2331 = vmatprep.subr.mxu0 %v307
    %2332 = vmatpush1.msra.mxu0 %v306
    %2333 = vmatprep.subr.mxu0 %v311
    %2334 = vmatpush1.msra.mxu0 %v310
    %2335 = vmatprep.mubr.f32.mxu0 %v2031
    %2336 = vmatmul.mubr.f32.gmra.mrb[0].mxu0 %v2199
    %v2337 = vpop.f32.mrb[0].mxu0
    %v2338 = vadd.f32 %v347, %v2337
    %v2339 = vpop.f32.mrb[0].mxu0
    %v2340 = vadd.f32 %v351, %v2339
    %2341 = vdwg.mxu0
    %v2342 = vxor.u32 %v2267, 2147483648
    %v2343 = vmul.f32 %v2342, 1.442695
    %v2344 = vpow.pop %v2343
    %v2345 = vadd.f32 %v2344, 1.0
    %v2346 = vrcp.pop %v2345
    %v2347 = vmul.f32 1.0, %v2346
    %v2348 = vxor.u32 %v2269, 2147483648
    %v2349 = vmul.f32 %v2348, 1.442695
    %v2350 = vpow.pop %v2349
    %v2351 = vadd.f32 %v2350, 1.0
    %v2352 = vrcp.pop %v2351
    %v2353 = vmul.f32 1.0, %v2352
    %v2354 = vtanh.pop %v2338
    %v2355 = vxor.u32 %v2340, 2147483648
    %v2356 = vmul.f32 %v2355, 1.442695
    %v2357 = vpow.pop %v2356
    %v2358 = vadd.f32 %v2357, 1.0
    %v2359 = vrcp.pop %v2358
    %v2360 = vmul.f32 1.0, %v2359
    %v2361 = vmul.f32 %v2353, %v2029
    %v2362 = vmul.f32 %v2347, %v2354
    %v2363 = vadd.f32 %v2361, %v2362
    %v2364 = vtanh.pop %v2363
    %v2365 = vmul.f32 %v2360, %v2364
    %s2366 = scalar_lea.vmem %s0, 12
    %v2367 = vld [vmem:[%s2366] sm:$0x3]
    %2368 = vmatprep.subr.mxu0 %v57
    %2369 = vmatpush1.msra.mxu0 %v56
    %2370 = vmatprep.subr.mxu0 %v61
    %2371 = vmatpush1.msra.mxu0 %v60
    %2372 = vmatprep.subr.mxu0 %v65
    %2373 = vmatpush1.msra.mxu0 %v64
    %2374 = vmatprep.subr.mxu0 %v69
    %2375 = vmatpush1.msra.mxu0 %v68
    %2376 = vmatprep.subr.mxu0 %v73
    %2377 = vmatpush1.msra.mxu0 %v72
    %2378 = vmatprep.subr.mxu0 %v77
    %2379 = vmatpush1.msra.mxu0 %v76
    %2380 = vmatprep.subr.mxu0 %v81
    %2381 = vmatpush1.msra.mxu0 %v80
    %2382 = vmatprep.subr.mxu0 %v85
    %2383 = vmatpush1.msra.mxu0 %v84
    %2384 = vmatprep.subr.mxu0 %v89
    %2385 = vmatpush1.msra.mxu0 %v88
    %2386 = vmatprep.subr.mxu0 %v93
    %2387 = vmatpush1.msra.mxu0 %v92
    %2388 = vmatprep.subr.mxu0 %v97
    %2389 = vmatpush1.msra.mxu0 %v96
    %2390 = vmatprep.subr.mxu0 %v101
    %2391 = vmatpush1.msra.mxu0 %v100
    %2392 = vmatprep.subr.mxu0 %v105
    %2393 = vmatpush1.msra.mxu0 %v104
    %2394 = vmatprep.subr.mxu0 %v109
    %2395 = vmatpush1.msra.mxu0 %v108
    %2396 = vmatprep.subr.mxu0 %v113
    %2397 = vmatpush1.msra.mxu0 %v112
    %2398 = vmatprep.subr.mxu0 %v117
    %2399 = vmatpush1.msra.mxu0 %v116
    %2400 = vmatprep.subr.mxu0 %v121
    %2401 = vmatpush1.msra.mxu0 %v120
    %2402 = vmatprep.subr.mxu0 %v125
    %2403 = vmatpush1.msra.mxu0 %v124
    %2404 = vmatprep.subr.mxu0 %v129
    %2405 = vmatpush1.msra.mxu0 %v128
    %2406 = vmatprep.subr.mxu0 %v133
    %2407 = vmatpush1.msra.mxu0 %v132
    %2408 = vmatprep.subr.mxu0 %v137
    %2409 = vmatpush1.msra.mxu0 %v136
    %2410 = vmatprep.subr.mxu0 %v141
    %2411 = vmatpush1.msra.mxu0 %v140
    %2412 = vmatprep.subr.mxu0 %v145
    %2413 = vmatpush1.msra.mxu0 %v144
    %2414 = vmatprep.subr.mxu0 %v149
    %2415 = vmatpush1.msra.mxu0 %v148
    %2416 = vmatprep.subr.mxu0 %v153
    %2417 = vmatpush1.msra.mxu0 %v152
    %2418 = vmatprep.subr.mxu0 %v157
    %2419 = vmatpush1.msra.mxu0 %v156
    %2420 = vmatprep.subr.mxu0 %v161
    %2421 = vmatpush1.msra.mxu0 %v160
    %2422 = vmatprep.subr.mxu0 %v165
    %2423 = vmatpush1.msra.mxu0 %v164
    %2424 = vmatprep.subr.mxu0 %v169
    %2425 = vmatpush1.msra.mxu0 %v168
    %2426 = vmatprep.subr.mxu0 %v173
    %2427 = vmatpush1.msra.mxu0 %v172
    %2428 = vmatprep.subr.mxu0 %v177
    %2429 = vmatpush1.msra.mxu0 %v176
    %2430 = vmatprep.subr.mxu0 %v181
    %2431 = vmatpush1.msra.mxu0 %v180
    %2432 = vmatprep.mubr.f32.mxu0 %v2199
    %2433 = vmatmul.mubr.f32.gmra.mrb[0].mxu0 %v2367
    %v2434 = vpop.f32.mrb[0].mxu0
    %v2435 = vadd.f32 %v317, %v2434
    %v2436 = vpop.f32.mrb[0].mxu0
    %v2437 = vadd.f32 %v321, %v2436
    %2438 = vdwg.mxu0
    %2439 = vmatprep.subr.mxu0 %v59
    %2440 = vmatpush1.msra.mxu0 %v58
    %2441 = vmatprep.subr.mxu0 %v63
    %2442 = vmatpush1.msra.mxu0 %v62
    %2443 = vmatprep.subr.mxu0 %v67
    %2444 = vmatpush1.msra.mxu0 %v66
    %2445 = vmatprep.subr.mxu0 %v71
    %2446 = vmatpush1.msra.mxu0 %v70
    %2447 = vmatprep.subr.mxu0 %v75
    %2448 = vmatpush1.msra.mxu0 %v74
    %2449 = vmatprep.subr.mxu0 %v79
    %2450 = vmatpush1.msra.mxu0 %v78
    %2451 = vmatprep.subr.mxu0 %v83
    %2452 = vmatpush1.msra.mxu0 %v82
    %2453 = vmatprep.subr.mxu0 %v87
    %2454 = vmatpush1.msra.mxu0 %v86
    %2455 = vmatprep.subr.mxu0 %v91
    %2456 = vmatpush1.msra.mxu0 %v90
    %2457 = vmatprep.subr.mxu0 %v95
    %2458 = vmatpush1.msra.mxu0 %v94
    %2459 = vmatprep.subr.mxu0 %v99
    %2460 = vmatpush1.msra.mxu0 %v98
    %2461 = vmatprep.subr.mxu0 %v103
    %2462 = vmatpush1.msra.mxu0 %v102
    %2463 = vmatprep.subr.mxu0 %v107
    %2464 = vmatpush1.msra.mxu0 %v106
    %2465 = vmatprep.subr.mxu0 %v111
    %2466 = vmatpush1.msra.mxu0 %v110
    %2467 = vmatprep.subr.mxu0 %v115
    %2468 = vmatpush1.msra.mxu0 %v114
    %2469 = vmatprep.subr.mxu0 %v119
    %2470 = vmatpush1.msra.mxu0 %v118
    %2471 = vmatprep.subr.mxu0 %v123
    %2472 = vmatpush1.msra.mxu0 %v122
    %2473 = vmatprep.subr.mxu0 %v127
    %2474 = vmatpush1.msra.mxu0 %v126
    %2475 = vmatprep.subr.mxu0 %v131
    %2476 = vmatpush1.msra.mxu0 %v130
    %2477 = vmatprep.subr.mxu0 %v135
    %2478 = vmatpush1.msra.mxu0 %v134
    %2479 = vmatprep.subr.mxu0 %v139
    %2480 = vmatpush1.msra.mxu0 %v138
    %2481 = vmatprep.subr.mxu0 %v143
    %2482 = vmatpush1.msra.mxu0 %v142
    %2483 = vmatprep.subr.mxu0 %v147
    %2484 = vmatpush1.msra.mxu0 %v146
    %2485 = vmatprep.subr.mxu0 %v151
    %2486 = vmatpush1.msra.mxu0 %v150
    %2487 = vmatprep.subr.mxu0 %v155
    %2488 = vmatpush1.msra.mxu0 %v154
    %2489 = vmatprep.subr.mxu0 %v159
    %2490 = vmatpush1.msra.mxu0 %v158
    %2491 = vmatprep.subr.mxu0 %v163
    %2492 = vmatpush1.msra.mxu0 %v162
    %2493 = vmatprep.subr.mxu0 %v167
    %2494 = vmatpush1.msra.mxu0 %v166
    %2495 = vmatprep.subr.mxu0 %v171
    %2496 = vmatpush1.msra.mxu0 %v170
    %2497 = vmatprep.subr.mxu0 %v175
    %2498 = vmatpush1.msra.mxu0 %v174
    %2499 = vmatprep.subr.mxu0 %v179
    %2500 = vmatpush1.msra.mxu0 %v178
    %2501 = vmatprep.subr.mxu0 %v183
    %2502 = vmatpush1.msra.mxu0 %v182
    %2503 = vmatprep.mubr.f32.mxu0 %v2199
    %2504 = vmatmul.mubr.f32.gmra.mrb[0].mxu0 %v2367
    %v2505 = vpop.f32.mrb[0].mxu0
    %v2506 = vadd.f32 %v325, %v2505
    %v2507 = vpop.f32.mrb[0].mxu0
    %v2508 = vadd.f32 %v329, %v2507
    %2509 = vdwg.mxu0
    %v2510 = vxor.u32 %v2435, 2147483648
    %v2511 = vmul.f32 %v2510, 1.442695
    %v2512 = vpow.pop %v2511
    %v2513 = vadd.f32 %v2512, 1.0
    %v2514 = vrcp.pop %v2513
    %v2515 = vmul.f32 1.0, %v2514
    %v2516 = vxor.u32 %v2437, 2147483648
    %v2517 = vmul.f32 %v2516, 1.442695
    %v2518 = vpow.pop %v2517
    %v2519 = vadd.f32 %v2518, 1.0
    %v2520 = vrcp.pop %v2519
    %v2521 = vmul.f32 1.0, %v2520
    %v2522 = vtanh.pop %v2506
    %v2523 = vxor.u32 %v2508, 2147483648
    %v2524 = vmul.f32 %v2523, 1.442695
    %v2525 = vpow.pop %v2524
    %v2526 = vadd.f32 %v2525, 1.0
    %v2527 = vrcp.pop %v2526
    %v2528 = vmul.f32 1.0, %v2527
    %v2529 = vmul.f32 %v2521, %v2197
    %v2530 = vmul.f32 %v2515, %v2522
    %v2531 = vadd.f32 %v2529, %v2530
    %v2532 = vtanh.pop %v2531
    %v2533 = vmul.f32 %v2528, %v2532
    %2534 = vmatprep.subr.mxu0 %v185
    %2535 = vmatpush1.msra.mxu0 %v184
    %2536 = vmatprep.subr.mxu0 %v189
    %2537 = vmatpush1.msra.mxu0 %v188
    %2538 = vmatprep.subr.mxu0 %v193
    %2539 = vmatpush1.msra.mxu0 %v192
    %2540 = vmatprep.subr.mxu0 %v197
    %2541 = vmatpush1.msra.mxu0 %v196
    %2542 = vmatprep.subr.mxu0 %v201
    %2543 = vmatpush1.msra.mxu0 %v200
    %2544 = vmatprep.subr.mxu0 %v205
    %2545 = vmatpush1.msra.mxu0 %v204
    %2546 = vmatprep.subr.mxu0 %v209
    %2547 = vmatpush1.msra.mxu0 %v208
    %2548 = vmatprep.subr.mxu0 %v213
    %2549 = vmatpush1.msra.mxu0 %v212
    %2550 = vmatprep.subr.mxu0 %v217
    %2551 = vmatpush1.msra.mxu0 %v216
    %2552 = vmatprep.subr.mxu0 %v221
    %2553 = vmatpush1.msra.mxu0 %v220
    %2554 = vmatprep.subr.mxu0 %v225
    %2555 = vmatpush1.msra.mxu0 %v224
    %2556 = vmatprep.subr.mxu0 %v229
    %2557 = vmatpush1.msra.mxu0 %v228
    %2558 = vmatprep.subr.mxu0 %v233
    %2559 = vmatpush1.msra.mxu0 %v232
    %2560 = vmatprep.subr.mxu0 %v237
    %2561 = vmatpush1.msra.mxu0 %v236
    %2562 = vmatprep.subr.mxu0 %v241
    %2563 = vmatpush1.msra.mxu0 %v240
    %2564 = vmatprep.subr.mxu0 %v245
    %2565 = vmatpush1.msra.mxu0 %v244
    %2566 = vmatprep.subr.mxu0 %v249
    %2567 = vmatpush1.msra.mxu0 %v248
    %2568 = vmatprep.subr.mxu0 %v253
    %2569 = vmatpush1.msra.mxu0 %v252
    %2570 = vmatprep.subr.mxu0 %v257
    %2571 = vmatpush1.msra.mxu0 %v256
    %2572 = vmatprep.subr.mxu0 %v261
    %2573 = vmatpush1.msra.mxu0 %v260
    %2574 = vmatprep.subr.mxu0 %v265
    %2575 = vmatpush1.msra.mxu0 %v264
    %2576 = vmatprep.subr.mxu0 %v269
    %2577 = vmatpush1.msra.mxu0 %v268
    %2578 = vmatprep.subr.mxu0 %v273
    %2579 = vmatpush1.msra.mxu0 %v272
    %2580 = vmatprep.subr.mxu0 %v277
    %2581 = vmatpush1.msra.mxu0 %v276
    %2582 = vmatprep.subr.mxu0 %v281
    %2583 = vmatpush1.msra.mxu0 %v280
    %2584 = vmatprep.subr.mxu0 %v285
    %2585 = vmatpush1.msra.mxu0 %v284
    %2586 = vmatprep.subr.mxu0 %v289
    %2587 = vmatpush1.msra.mxu0 %v288
    %2588 = vmatprep.subr.mxu0 %v293
    %2589 = vmatpush1.msra.mxu0 %v292
    %2590 = vmatprep.subr.mxu0 %v297
    %2591 = vmatpush1.msra.mxu0 %v296
    %2592 = vmatprep.subr.mxu0 %v301
    %2593 = vmatpush1.msra.mxu0 %v300
    %2594 = vmatprep.subr.mxu0 %v305
    %2595 = vmatpush1.msra.mxu0 %v304
    %2596 = vmatprep.subr.mxu0 %v309
    %2597 = vmatpush1.msra.mxu0 %v308
    %2598 = vmatprep.mubr.f32.mxu0 %v2365
    %2599 = vmatmul.mubr.f32.gmra.mrb[0].mxu0 %v2533
    %v2600 = vpop.f32.mrb[0].mxu0
    %v2601 = vadd.f32 %v339, %v2600
    %v2602 = vpop.f32.mrb[0].mxu0
    %v2603 = vadd.f32 %v343, %v2602
    %2604 = vdwg.mxu0
    %2605 = vmatprep.subr.mxu0 %v187
    %2606 = vmatpush1.msra.mxu0 %v186
    %2607 = vmatprep.subr.mxu0 %v191
    %2608 = vmatpush1.msra.mxu0 %v190
    %2609 = vmatprep.subr.mxu0 %v195
    %2610 = vmatpush1.msra.mxu0 %v194
    %2611 = vmatprep.subr.mxu0 %v199
    %2612 = vmatpush1.msra.mxu0 %v198
    %2613 = vmatprep.subr.mxu0 %v203
    %2614 = vmatpush1.msra.mxu0 %v202
    %2615 = vmatprep.subr.mxu0 %v207
    %2616 = vmatpush1.msra.mxu0 %v206
    %2617 = vmatprep.subr.mxu0 %v211
    %2618 = vmatpush1.msra.mxu0 %v210
    %2619 = vmatprep.subr.mxu0 %v215
    %2620 = vmatpush1.msra.mxu0 %v214
    %2621 = vmatprep.subr.mxu0 %v219
    %2622 = vmatpush1.msra.mxu0 %v218
    %2623 = vmatprep.subr.mxu0 %v223
    %2624 = vmatpush1.msra.mxu0 %v222
    %2625 = vmatprep.subr.mxu0 %v227
    %2626 = vmatpush1.msra.mxu0 %v226
    %2627 = vmatprep.subr.mxu0 %v231
    %2628 = vmatpush1.msra.mxu0 %v230
    %2629 = vmatprep.subr.mxu0 %v235
    %2630 = vmatpush1.msra.mxu0 %v234
    %2631 = vmatprep.subr.mxu0 %v239
    %2632 = vmatpush1.msra.mxu0 %v238
    %2633 = vmatprep.subr.mxu0 %v243
    %2634 = vmatpush1.msra.mxu0 %v242
    %2635 = vmatprep.subr.mxu0 %v247
    %2636 = vmatpush1.msra.mxu0 %v246
    %2637 = vmatprep.subr.mxu0 %v251
    %2638 = vmatpush1.msra.mxu0 %v250
    %2639 = vmatprep.subr.mxu0 %v255
    %2640 = vmatpush1.msra.mxu0 %v254
    %2641 = vmatprep.subr.mxu0 %v259
    %2642 = vmatpush1.msra.mxu0 %v258
    %2643 = vmatprep.subr.mxu0 %v263
    %2644 = vmatpush1.msra.mxu0 %v262
    %2645 = vmatprep.subr.mxu0 %v267
    %2646 = vmatpush1.msra.mxu0 %v266
    %2647 = vmatprep.subr.mxu0 %v271
    %2648 = vmatpush1.msra.mxu0 %v270
    %2649 = vmatprep.subr.mxu0 %v275
    %2650 = vmatpush1.msra.mxu0 %v274
    %2651 = vmatprep.subr.mxu0 %v279
    %2652 = vmatpush1.msra.mxu0 %v278
    %2653 = vmatprep.subr.mxu0 %v283
    %2654 = vmatpush1.msra.mxu0 %v282
    %2655 = vmatprep.subr.mxu0 %v287
    %2656 = vmatpush1.msra.mxu0 %v286
    %2657 = vmatprep.subr.mxu0 %v291
    %2658 = vmatpush1.msra.mxu0 %v290
    %2659 = vmatprep.subr.mxu0 %v295
    %2660 = vmatpush1.msra.mxu0 %v294
    %2661 = vmatprep.subr.mxu0 %v299
    %2662 = vmatpush1.msra.mxu0 %v298
    %2663 = vmatprep.subr.mxu0 %v303
    %2664 = vmatpush1.msra.mxu0 %v302
    %2665 = vmatprep.subr.mxu0 %v307
    %2666 = vmatpush1.msra.mxu0 %v306
    %2667 = vmatprep.subr.mxu0 %v311
    %2668 = vmatpush1.msra.mxu0 %v310
    %2669 = vmatprep.mubr.f32.mxu0 %v2365
    %2670 = vmatmul.mubr.f32.gmra.mrb[0].mxu0 %v2533
    %v2671 = vpop.f32.mrb[0].mxu0
    %v2672 = vadd.f32 %v347, %v2671
    %v2673 = vpop.f32.mrb[0].mxu0
    %v2674 = vadd.f32 %v351, %v2673
    %2675 = vdwg.mxu0
    %v2676 = vxor.u32 %v2601, 2147483648
    %v2677 = vmul.f32 %v2676, 1.442695
    %v2678 = vpow.pop %v2677
    %v2679 = vadd.f32 %v2678, 1.0
    %v2680 = vrcp.pop %v2679
    %v2681 = vmul.f32 1.0, %v2680
    %v2682 = vxor.u32 %v2603, 2147483648
    %v2683 = vmul.f32 %v2682, 1.442695
    %v2684 = vpow.pop %v2683
    %v2685 = vadd.f32 %v2684, 1.0
    %v2686 = vrcp.pop %v2685
    %v2687 = vmul.f32 1.0, %v2686
    %v2688 = vtanh.pop %v2672
    %v2689 = vxor.u32 %v2674, 2147483648
    %v2690 = vmul.f32 %v2689, 1.442695
    %v2691 = vpow.pop %v2690
    %v2692 = vadd.f32 %v2691, 1.0
    %v2693 = vrcp.pop %v2692
    %v2694 = vmul.f32 1.0, %v2693
    %v2695 = vmul.f32 %v2687, %v2363
    %v2696 = vmul.f32 %v2681, %v2688
    %v2697 = vadd.f32 %v2695, %v2696
    %v2698 = vtanh.pop %v2697
    %v2699 = vmul.f32 %v2694, %v2698
    %s2700 = scalar_lea.vmem %s0, 14
    %v2701 = vld [vmem:[%s2700] sm:$0x3]
    %2702 = vmatprep.subr.mxu0 %v57
    %2703 = vmatpush1.msra.mxu0 %v56
    %2704 = vmatprep.subr.mxu0 %v61
    %2705 = vmatpush1.msra.mxu0 %v60
    %2706 = vmatprep.subr.mxu0 %v65
    %2707 = vmatpush1.msra.mxu0 %v64
    %2708 = vmatprep.subr.mxu0 %v69
    %2709 = vmatpush1.msra.mxu0 %v68
    %2710 = vmatprep.subr.mxu0 %v73
    %2711 = vmatpush1.msra.mxu0 %v72
    %2712 = vmatprep.subr.mxu0 %v77
    %2713 = vmatpush1.msra.mxu0 %v76
    %2714 = vmatprep.subr.mxu0 %v81
    %2715 = vmatpush1.msra.mxu0 %v80
    %2716 = vmatprep.subr.mxu0 %v85
    %2717 = vmatpush1.msra.mxu0 %v84
    %2718 = vmatprep.subr.mxu0 %v89
    %2719 = vmatpush1.msra.mxu0 %v88
    %2720 = vmatprep.subr.mxu0 %v93
    %2721 = vmatpush1.msra.mxu0 %v92
    %2722 = vmatprep.subr.mxu0 %v97
    %2723 = vmatpush1.msra.mxu0 %v96
    %2724 = vmatprep.subr.mxu0 %v101
    %2725 = vmatpush1.msra.mxu0 %v100
    %2726 = vmatprep.subr.mxu0 %v105
    %2727 = vmatpush1.msra.mxu0 %v104
    %2728 = vmatprep.subr.mxu0 %v109
    %2729 = vmatpush1.msra.mxu0 %v108
    %2730 = vmatprep.subr.mxu0 %v113
    %2731 = vmatpush1.msra.mxu0 %v112
    %2732 = vmatprep.subr.mxu0 %v117
    %2733 = vmatpush1.msra.mxu0 %v116
    %2734 = vmatprep.subr.mxu0 %v121
    %2735 = vmatpush1.msra.mxu0 %v120
    %2736 = vmatprep.subr.mxu0 %v125
    %2737 = vmatpush1.msra.mxu0 %v124
    %2738 = vmatprep.subr.mxu0 %v129
    %2739 = vmatpush1.msra.mxu0 %v128
    %2740 = vmatprep.subr.mxu0 %v133
    %2741 = vmatpush1.msra.mxu0 %v132
    %2742 = vmatprep.subr.mxu0 %v137
    %2743 = vmatpush1.msra.mxu0 %v136
    %2744 = vmatprep.subr.mxu0 %v141
    %2745 = vmatpush1.msra.mxu0 %v140
    %2746 = vmatprep.subr.mxu0 %v145
    %2747 = vmatpush1.msra.mxu0 %v144
    %2748 = vmatprep.subr.mxu0 %v149
    %2749 = vmatpush1.msra.mxu0 %v148
    %2750 = vmatprep.subr.mxu0 %v153
    %2751 = vmatpush1.msra.mxu0 %v152
    %2752 = vmatprep.subr.mxu0 %v157
    %2753 = vmatpush1.msra.mxu0 %v156
    %2754 = vmatprep.subr.mxu0 %v161
    %2755 = vmatpush1.msra.mxu0 %v160
    %2756 = vmatprep.subr.mxu0 %v165
    %2757 = vmatpush1.msra.mxu0 %v164
    %2758 = vmatprep.subr.mxu0 %v169
    %2759 = vmatpush1.msra.mxu0 %v168
    %2760 = vmatprep.subr.mxu0 %v173
    %2761 = vmatpush1.msra.mxu0 %v172
    %2762 = vmatprep.subr.mxu0 %v177
    %2763 = vmatpush1.msra.mxu0 %v176
    %2764 = vmatprep.subr.mxu0 %v181
    %2765 = vmatpush1.msra.mxu0 %v180
    %2766 = vmatprep.mubr.f32.mxu0 %v2533
    %2767 = vmatmul.mubr.f32.gmra.mrb[0].mxu0 %v2701
    %v2768 = vpop.f32.mrb[0].mxu0
    %v2769 = vadd.f32 %v317, %v2768
    %v2770 = vpop.f32.mrb[0].mxu0
    %v2771 = vadd.f32 %v321, %v2770
    %2772 = vdwg.mxu0
    %2773 = vmatprep.subr.mxu0 %v59
    %2774 = vmatpush1.msra.mxu0 %v58
    %2775 = vmatprep.subr.mxu0 %v63
    %2776 = vmatpush1.msra.mxu0 %v62
    %2777 = vmatprep.subr.mxu0 %v67
    %2778 = vmatpush1.msra.mxu0 %v66
    %2779 = vmatprep.subr.mxu0 %v71
    %2780 = vmatpush1.msra.mxu0 %v70
    %2781 = vmatprep.subr.mxu0 %v75
    %2782 = vmatpush1.msra.mxu0 %v74
    %2783 = vmatprep.subr.mxu0 %v79
    %2784 = vmatpush1.msra.mxu0 %v78
    %2785 = vmatprep.subr.mxu0 %v83
    %2786 = vmatpush1.msra.mxu0 %v82
    %2787 = vmatprep.subr.mxu0 %v87
    %2788 = vmatpush1.msra.mxu0 %v86
    %2789 = vmatprep.subr.mxu0 %v91
    %2790 = vmatpush1.msra.mxu0 %v90
    %2791 = vmatprep.subr.mxu0 %v95
    %2792 = vmatpush1.msra.mxu0 %v94
    %2793 = vmatprep.subr.mxu0 %v99
    %2794 = vmatpush1.msra.mxu0 %v98
    %2795 = vmatprep.subr.mxu0 %v103
    %2796 = vmatpush1.msra.mxu0 %v102
    %2797 = vmatprep.subr.mxu0 %v107
    %2798 = vmatpush1.msra.mxu0 %v106
    %2799 = vmatprep.subr.mxu0 %v111
    %2800 = vmatpush1.msra.mxu0 %v110
    %2801 = vmatprep.subr.mxu0 %v115
    %2802 = vmatpush1.msra.mxu0 %v114
    %2803 = vmatprep.subr.mxu0 %v119
    %2804 = vmatpush1.msra.mxu0 %v118
    %2805 = vmatprep.subr.mxu0 %v123
    %2806 = vmatpush1.msra.mxu0 %v122
    %2807 = vmatprep.subr.mxu0 %v127
    %2808 = vmatpush1.msra.mxu0 %v126
    %2809 = vmatprep.subr.mxu0 %v131
    %2810 = vmatpush1.msra.mxu0 %v130
    %2811 = vmatprep.subr.mxu0 %v135
    %2812 = vmatpush1.msra.mxu0 %v134
    %2813 = vmatprep.subr.mxu0 %v139
    %2814 = vmatpush1.msra.mxu0 %v138
    %2815 = vmatprep.subr.mxu0 %v143
    %2816 = vmatpush1.msra.mxu0 %v142
    %2817 = vmatprep.subr.mxu0 %v147
    %2818 = vmatpush1.msra.mxu0 %v146
    %2819 = vmatprep.subr.mxu0 %v151
    %2820 = vmatpush1.msra.mxu0 %v150
    %2821 = vmatprep.subr.mxu0 %v155
    %2822 = vmatpush1.msra.mxu0 %v154
    %2823 = vmatprep.subr.mxu0 %v159
    %2824 = vmatpush1.msra.mxu0 %v158
    %2825 = vmatprep.subr.mxu0 %v163
    %2826 = vmatpush1.msra.mxu0 %v162
    %2827 = vmatprep.subr.mxu0 %v167
    %2828 = vmatpush1.msra.mxu0 %v166
    %2829 = vmatprep.subr.mxu0 %v171
    %2830 = vmatpush1.msra.mxu0 %v170
    %2831 = vmatprep.subr.mxu0 %v175
    %2832 = vmatpush1.msra.mxu0 %v174
    %2833 = vmatprep.subr.mxu0 %v179
    %2834 = vmatpush1.msra.mxu0 %v178
    %2835 = vmatprep.subr.mxu0 %v183
    %2836 = vmatpush1.msra.mxu0 %v182
    %2837 = vmatprep.mubr.f32.mxu0 %v2533
    %2838 = vmatmul.mubr.f32.gmra.mrb[0].mxu0 %v2701
    %v2839 = vpop.f32.mrb[0].mxu0
    %v2840 = vadd.f32 %v325, %v2839
    %v2841 = vpop.f32.mrb[0].mxu0
    %v2842 = vadd.f32 %v329, %v2841
    %2843 = vdwg.mxu0
    %v2844 = vxor.u32 %v2769, 2147483648
    %v2845 = vmul.f32 %v2844, 1.442695
    %v2846 = vpow.pop %v2845
    %v2847 = vadd.f32 %v2846, 1.0
    %v2848 = vrcp.pop %v2847
    %v2849 = vmul.f32 1.0, %v2848
    %v2850 = vxor.u32 %v2771, 2147483648
    %v2851 = vmul.f32 %v2850, 1.442695
    %v2852 = vpow.pop %v2851
    %v2853 = vadd.f32 %v2852, 1.0
    %v2854 = vrcp.pop %v2853
    %v2855 = vmul.f32 1.0, %v2854
    %v2856 = vtanh.pop %v2840
    %v2857 = vxor.u32 %v2842, 2147483648
    %v2858 = vmul.f32 %v2857, 1.442695
    %v2859 = vpow.pop %v2858
    %v2860 = vadd.f32 %v2859, 1.0
    %v2861 = vrcp.pop %v2860
    %v2862 = vmul.f32 1.0, %v2861
    %v2863 = vmul.f32 %v2855, %v2531
    %v2864 = vmul.f32 %v2849, %v2856
    %v2865 = vadd.f32 %v2863, %v2864
    %v2866 = vtanh.pop %v2865
    %v2867 = vmul.f32 %v2862, %v2866
    %2868 = vmatprep.subr.mxu0 %v185
    %2869 = vmatpush1.msra.mxu0 %v184
    %2870 = vmatprep.subr.mxu0 %v189
    %2871 = vmatpush1.msra.mxu0 %v188
    %2872 = vmatprep.subr.mxu0 %v193
    %2873 = vmatpush1.msra.mxu0 %v192
    %2874 = vmatprep.subr.mxu0 %v197
    %2875 = vmatpush1.msra.mxu0 %v196
    %2876 = vmatprep.subr.mxu0 %v201
    %2877 = vmatpush1.msra.mxu0 %v200
    %2878 = vmatprep.subr.mxu0 %v205
    %2879 = vmatpush1.msra.mxu0 %v204
    %2880 = vmatprep.subr.mxu0 %v209
    %2881 = vmatpush1.msra.mxu0 %v208
    %2882 = vmatprep.subr.mxu0 %v213
    %2883 = vmatpush1.msra.mxu0 %v212
    %2884 = vmatprep.subr.mxu0 %v217
    %2885 = vmatpush1.msra.mxu0 %v216
    %2886 = vmatprep.subr.mxu0 %v221
    %2887 = vmatpush1.msra.mxu0 %v220
    %2888 = vmatprep.subr.mxu0 %v225
    %2889 = vmatpush1.msra.mxu0 %v224
    %2890 = vmatprep.subr.mxu0 %v229
    %2891 = vmatpush1.msra.mxu0 %v228
    %2892 = vmatprep.subr.mxu0 %v233
    %2893 = vmatpush1.msra.mxu0 %v232
    %2894 = vmatprep.subr.mxu0 %v237
    %2895 = vmatpush1.msra.mxu0 %v236
    %2896 = vmatprep.subr.mxu0 %v241
    %2897 = vmatpush1.msra.mxu0 %v240
    %2898 = vmatprep.subr.mxu0 %v245
    %2899 = vmatpush1.msra.mxu0 %v244
    %2900 = vmatprep.subr.mxu0 %v249
    %2901 = vmatpush1.msra.mxu0 %v248
    %2902 = vmatprep.subr.mxu0 %v253
    %2903 = vmatpush1.msra.mxu0 %v252
    %2904 = vmatprep.subr.mxu0 %v257
    %2905 = vmatpush1.msra.mxu0 %v256
    %2906 = vmatprep.subr.mxu0 %v261
    %2907 = vmatpush1.msra.mxu0 %v260
    %2908 = vmatprep.subr.mxu0 %v265
    %2909 = vmatpush1.msra.mxu0 %v264
    %2910 = vmatprep.subr.mxu0 %v269
    %2911 = vmatpush1.msra.mxu0 %v268
    %2912 = vmatprep.subr.mxu0 %v273
    %2913 = vmatpush1.msra.mxu0 %v272
    %2914 = vmatprep.subr.mxu0 %v277
    %2915 = vmatpush1.msra.mxu0 %v276
    %2916 = vmatprep.subr.mxu0 %v281
    %2917 = vmatpush1.msra.mxu0 %v280
    %2918 = vmatprep.subr.mxu0 %v285
    %2919 = vmatpush1.msra.mxu0 %v284
    %2920 = vmatprep.subr.mxu0 %v289
    %2921 = vmatpush1.msra.mxu0 %v288
    %2922 = vmatprep.subr.mxu0 %v293
    %2923 = vmatpush1.msra.mxu0 %v292
    %2924 = vmatprep.subr.mxu0 %v297
    %2925 = vmatpush1.msra.mxu0 %v296
    %2926 = vmatprep.subr.mxu0 %v301
    %2927 = vmatpush1.msra.mxu0 %v300
    %2928 = vmatprep.subr.mxu0 %v305
    %2929 = vmatpush1.msra.mxu0 %v304
    %2930 = vmatprep.subr.mxu0 %v309
    %2931 = vmatpush1.msra.mxu0 %v308
    %2932 = vmatprep.mubr.f32.mxu0 %v2699
    %2933 = vmatmul.mubr.f32.gmra.mrb[0].mxu0 %v2867
    %v2934 = vpop.f32.mrb[0].mxu0
    %v2935 = vadd.f32 %v339, %v2934
    %v2936 = vpop.f32.mrb[0].mxu0
    %v2937 = vadd.f32 %v343, %v2936
    %2938 = vdwg.mxu0
    %2939 = vmatprep.subr.mxu0 %v187
    %2940 = vmatpush1.msra.mxu0 %v186
    %2941 = vmatprep.subr.mxu0 %v191
    %2942 = vmatpush1.msra.mxu0 %v190
    %2943 = vmatprep.subr.mxu0 %v195
    %2944 = vmatpush1.msra.mxu0 %v194
    %2945 = vmatprep.subr.mxu0 %v199
    %2946 = vmatpush1.msra.mxu0 %v198
    %2947 = vmatprep.subr.mxu0 %v203
    %2948 = vmatpush1.msra.mxu0 %v202
    %2949 = vmatprep.subr.mxu0 %v207
    %2950 = vmatpush1.msra.mxu0 %v206
    %2951 = vmatprep.subr.mxu0 %v211
    %2952 = vmatpush1.msra.mxu0 %v210
    %2953 = vmatprep.subr.mxu0 %v215
    %2954 = vmatpush1.msra.mxu0 %v214
    %2955 = vmatprep.subr.mxu0 %v219
    %2956 = vmatpush1.msra.mxu0 %v218
    %2957 = vmatprep.subr.mxu0 %v223
    %2958 = vmatpush1.msra.mxu0 %v222
    %2959 = vmatprep.subr.mxu0 %v227
    %2960 = vmatpush1.msra.mxu0 %v226
    %2961 = vmatprep.subr.mxu0 %v231
    %2962 = vmatpush1.msra.mxu0 %v230
    %2963 = vmatprep.subr.mxu0 %v235
    %2964 = vmatpush1.msra.mxu0 %v234
    %2965 = vmatprep.subr.mxu0 %v239
    %2966 = vmatpush1.msra.mxu0 %v238
    %2967 = vmatprep.subr.mxu0 %v243
    %2968 = vmatpush1.msra.mxu0 %v242
    %2969 = vmatprep.subr.mxu0 %v247
    %2970 = vmatpush1.msra.mxu0 %v246
    %2971 = vmatprep.subr.mxu0 %v251
    %2972 = vmatpush1.msra.mxu0 %v250
    %2973 = vmatprep.subr.mxu0 %v255
    %2974 = vmatpush1.msra.mxu0 %v254
    %2975 = vmatprep.subr.mxu0 %v259
    %2976 = vmatpush1.msra.mxu0 %v258
    %2977 = vmatprep.subr.mxu0 %v263
    %2978 = vmatpush1.msra.mxu0 %v262
    %2979 = vmatprep.subr.mxu0 %v267
    %2980 = vmatpush1.msra.mxu0 %v266
    %2981 = vmatprep.subr.mxu0 %v271
    %2982 = vmatpush1.msra.mxu0 %v270
    %2983 = vmatprep.subr.mxu0 %v275
    %2984 = vmatpush1.msra.mxu0 %v274
    %2985 = vmatprep.subr.mxu0 %v279
    %2986 = vmatpush1.msra.mxu0 %v278
    %2987 = vmatprep.subr.mxu0 %v283
    %2988 = vmatpush1.msra.mxu0 %v282
    %2989 = vmatprep.subr.mxu0 %v287
    %2990 = vmatpush1.msra.mxu0 %v286
    %2991 = vmatprep.subr.mxu0 %v291
    %2992 = vmatpush1.msra.mxu0 %v290
    %2993 = vmatprep.subr.mxu0 %v295
    %2994 = vmatpush1.msra.mxu0 %v294
    %2995 = vmatprep.subr.mxu0 %v299
    %2996 = vmatpush1.msra.mxu0 %v298
    %2997 = vmatprep.subr.mxu0 %v303
    %2998 = vmatpush1.msra.mxu0 %v302
    %2999 = vmatprep.subr.mxu0 %v307
    %3000 = vmatpush1.msra.mxu0 %v306
    %3001 = vmatprep.subr.mxu0 %v311
    %3002 = vmatpush1.msra.mxu0 %v310
    %3003 = vmatprep.mubr.f32.mxu0 %v2699
    %3004 = vmatmul.mubr.f32.gmra.mrb[0].mxu0 %v2867
    %v3005 = vpop.f32.mrb[0].mxu0
    %v3006 = vadd.f32 %v347, %v3005
    %v3007 = vpop.f32.mrb[0].mxu0
    %v3008 = vadd.f32 %v351, %v3007
    %3009 = vdwg.mxu0
    %v3010 = vxor.u32 %v2935, 2147483648
    %v3011 = vmul.f32 %v3010, 1.442695
    %v3012 = vpow.pop %v3011
    %v3013 = vadd.f32 %v3012, 1.0
    %v3014 = vrcp.pop %v3013
    %v3015 = vmul.f32 1.0, %v3014
    %v3016 = vxor.u32 %v2937, 2147483648
    %v3017 = vmul.f32 %v3016, 1.442695
    %v3018 = vpow.pop %v3017
    %v3019 = vadd.f32 %v3018, 1.0
    %v3020 = vrcp.pop %v3019
    %v3021 = vmul.f32 1.0, %v3020
    %v3022 = vtanh.pop %v3006
    %v3023 = vxor.u32 %v3008, 2147483648
    %v3024 = vmul.f32 %v3023, 1.442695
    %v3025 = vpow.pop %v3024
    %v3026 = vadd.f32 %v3025, 1.0
    %v3027 = vrcp.pop %v3026
    %v3028 = vmul.f32 1.0, %v3027
    %v3029 = vmul.f32 %v3021, %v2697
    %v3030 = vmul.f32 %v3015, %v3022
    %v3031 = vadd.f32 %v3029, %v3030
    %v3032 = vtanh.pop %v3031
    %v3033 = vmul.f32 %v3028, %v3032
    %v3034 = vmul.f32 %v3033, %v361
    %vm3035 = vcmask 1041408
    %v3036 = vsel %vm3035, %v3034, 0.0
    %3037 = vadd.xlane.f32.xlu0 %v3036
    %v3038 = vpop.xlane.xlu0 %3037
    %v3039 = vld [vmem:[#allocation2] sm:$0x1]
    %v3041 = vlaneseq
    %v3042 = vshrl.u32 %v3041, 7
    %v3043 = vsub.s32 0, %v3042
    %v3044 = vrot.slane %v3039, %v3043
    %v3046 = vadd.f32 %v3038, %v3044
    %v3047 = vxor.u32 %v3046, 2147483648
    %v3048 = vmul.f32 %v3047, 1.442695
    %v3049 = vpow.pop %v3048
    %v3050 = vadd.f32 %v3049, 1.0
    %v3051 = vrcp.pop %v3050
    %v3052 = vmul.f32 1.0, %v3051
    %vm3053 = vcmask 1024
    %3054 = vst.msk [vmem:[%s7] sm:$0x3] %vm3053, %v3052
    // Predicated region
    $region38: #{lstm_net_forward.1} parent=1 // pred_check
      _
    $region39: #{lstm_net_forward.1} parent=1 // pred_check_branch
      %3056 = sbr.rel (0) target = $region41
    $region40: #{lstm_net_forward.1} parent=1 // pred_region
      _
    $region41: #{lstm_net_forward.1} parent=1 // pred_fallthru
      _
    // Predicated region
    $region42: #{lstm_net_forward.1} parent=1 // pred_check
      _
    $region43: #{lstm_net_forward.1} parent=1 // pred_check_branch
      %3058 = sbr.rel (0) target = $region45
    $region44: #{lstm_net_forward.1} parent=1 // pred_region
      _
    $region45: #{lstm_net_forward.1} parent=1 // pred_fallthru
      _
    %3059 = vsyncpa [#allocation4], 1
    %3060 = vsyncpa [#allocation6], 1

</llo_original>
